<compile_context>
chip_gen: v5e
topology: v5e:2x2
jax: 0.10.0
libtpu: 0.0.40
codegen_flags: <defaults>
</compile_context>

<pallas_src>
import functools

import jax
import jax.numpy as jnp
from jax import lax
from jax.experimental import pallas as pl
from jax.experimental.pallas import tpu as pltpu


LN_EPS = 1e-5                      # PyTorch nn.LayerNorm default
_INV_SQRT2 = 0.7071067811865476    # exact (erf-based) GELU, nn.GELU default


def mixer_chan_kernel(x_ref, gamma_ref, beta_ref, w1_ref, b1_ref,
                      w2_ref, b2_ref, o_ref, *, matmul_dtype):
    # x_ref: (tm, D) tile of rows; features on the lane axis. All math is
    # strictly row-wise, so garbage rows in a ragged last block stay row-local
    # and are dropped by the masked output store.
    x = x_ref[...].astype(jnp.float32)

    # ---- LayerNorm over features (biased variance, like torch) ----
    # Both reductions issue directly off x (overlap on the XLU units).
    mean = jnp.mean(x, axis=-1, keepdims=True)
    mean_sq = jnp.mean(x * x, axis=-1, keepdims=True)
    var = jnp.maximum(mean_sq - mean * mean, 0.0)
    xn = (x - mean) * lax.rsqrt(var + LN_EPS)
    xn = xn * gamma_ref[...] + beta_ref[...]

    # ---- Linear1 (bf16 MXU operands, f32 accumulation) + exact GELU ----
    # Weights arrive already in matmul_dtype (pre-cast once in the wrapper).
    h = jnp.dot(xn.astype(matmul_dtype), w1_ref[...],
                preferred_element_type=jnp.float32)
    h = h + b1_ref[...]                                   # (tm, H), f32
    h = 0.5 * h * (1.0 + lax.erf(h * _INV_SQRT2))

    # ---- (Dropout = identity) -> Linear2 -> (Dropout = identity) ----
    out = jnp.dot(h.astype(matmul_dtype), w2_ref[...],
                  preferred_element_type=jnp.float32)
    out = out + b2_ref[...]                               # (tm, O), f32

    o_ref[...] = out.astype(o_ref.dtype)


def _spec(shape, index_map, buffer_count=None):
    """BlockSpec with optional buffer-count override (graceful fallback)."""
    if buffer_count is not None and hasattr(pl, "Buffered"):
        try:
            return pl.BlockSpec(shape, index_map,
                                pipeline_mode=pl.Buffered(buffer_count))
        except TypeError:
            pass
    return pl.BlockSpec(shape, index_map)


def prepare_params(gamma, beta, w1, b1, w2, b2, *, matmul_dtype=jnp.bfloat16):
    """One-time parameter prep: bf16 weight cast + 2-D bias/scale layout.

    Do this once per model, not per forward call, to avoid re-casting weights
    in HBM on every invocation.
    """
    D, H = w1.shape
    O = w2.shape[1]
    return dict(
        gamma=gamma.reshape(1, D).astype(jnp.float32),
        beta=beta.reshape(1, D).astype(jnp.float32),
        w1=w1.astype(matmul_dtype),                 # (D, H) bf16
        b1=b1.reshape(1, H).astype(jnp.float32),
        w2=w2.astype(matmul_dtype),                 # (H, O) bf16
        b2=b2.reshape(1, O).astype(jnp.float32),
        matmul_dtype=matmul_dtype,
    )


def mixer_chan_apply(x, params, *, tm=512):
    """x: (B, S, dim) -> (B, S, out_dim). params from prepare_params()."""
    B, S, D = x.shape
    H = params["w1"].shape[1]
    O = params["w2"].shape[1]
    N = B * S
    matmul_dtype = params["matmul_dtype"]
    assert tm % 8 == 0, "row tile must be a multiple of 8"

    # Clamp the row tile to the (8-rounded) row count; ragged last block is
    # handled by Pallas (reads of OOB tail rows are garbage but row-local,
    # OOB output rows are masked on store).  No jnp.pad / output slice.
    tm_eff = min(tm, ((N + 7) // 8) * 8)
    n_tiles = pl.cdiv(N, tm_eff)

    x2d = x.reshape(N, D)                 # free reshape (contiguous)
    w_isize = jnp.dtype(matmul_dtype).itemsize

    # ---- VMEM budget: x/out tiles double-buffered, weights single-buffered ----
    vmem_need = (
        2 * tm_eff * D * 4                        # x tile (f32) x2 buffers
        + 2 * tm_eff * O * 4                      # out tile (f32) x2 buffers
        + (D * H + H * O) * w_isize               # W1, W2 (single-buffered, bf16)
        + (2 * D + H + O) * 4                     # gamma/beta/b1/b2
        + 4 * tm_eff * (D + H + O)                # f32 temporaries
        + w_isize * tm_eff * (D + H)              # bf16 matmul operand copies
    )
    try:
        vmem_cap = int(pltpu.get_tpu_info().vmem_capacity_bytes)
    except Exception:
        vmem_cap = 64 << 20                       # conservative (v7x per-core)
    vmem_ceiling = int(vmem_cap * 3 // 4)         # leave Mosaic scratch headroom
    vmem_limit = int(min(max(2 * vmem_need, 32 << 20), vmem_ceiling))

    flops = 2 * N * (D * H + H * O) + 10 * N * D
    bytes_accessed = (N * D * 4 + N * O * 4
                      + (D * H + H * O) * w_isize
                      + (2 * D + H + O) * 4)
    cost = pl.CostEstimate(flops=flops, transcendentals=N * H,
                           bytes_accessed=bytes_accessed)

    kernel = functools.partial(mixer_chan_kernel, matmul_dtype=matmul_dtype)

    out2d = pl.pallas_call(
        kernel,
        out_shape=jax.ShapeDtypeStruct((N, O), x.dtype),
        grid_spec=pltpu.PrefetchScalarGridSpec(
            num_scalar_prefetch=0,
            grid=(n_tiles,),
            in_specs=[
                _spec((tm_eff, D), lambda i: (i, 0)),        # x rows tile
                _spec((1, D), lambda i: (0, 0), 1),          # LN gamma
                _spec((1, D), lambda i: (0, 0), 1),          # LN beta
                _spec((D, H), lambda i: (0, 0), 1),          # W1 (in, hidden)
                _spec((1, H), lambda i: (0, 0), 1),          # b1
                _spec((H, O), lambda i: (0, 0), 1),          # W2 (hidden, out)
                _spec((1, O), lambda i: (0, 0), 1),          # b2
            ],
            out_specs=pl.BlockSpec((tm_eff, O), lambda i: (i, 0)),
        ),
        compiler_params=pltpu.CompilerParams(
            dimension_semantics=("parallel",),
            vmem_limit_bytes=vmem_limit),
        cost_estimate=cost,
    )(x2d, params["gamma"], params["beta"], params["w1"], params["b1"],
      params["w2"], params["b2"])

    return out2d.reshape(B, S, O)


def mixer_chan(x, gamma, beta, w1, b1, w2, b2, *,
               tm=512, matmul_dtype=jnp.bfloat16):
    """Convenience wrapper: per-call parameter prep + apply."""
    params = prepare_params(gamma, beta, w1, b1, w2, b2,
                            matmul_dtype=matmul_dtype)
    return mixer_chan_apply(x, params, tm=tm)


def reference(x, gamma, beta, w1, b1, w2, b2, *, matmul_dtype=jnp.float32):
    """Plain-JAX reference (optionally with bf16 matmul operands)."""
    xf = x.astype(jnp.float32)
    mean = jnp.mean(xf, axis=-1, keepdims=True)
    var = jnp.mean((xf - mean) ** 2, axis=-1, keepdims=True)
    xn = (xf - mean) / jnp.sqrt(var + LN_EPS) * gamma + beta
    h = jnp.dot(xn.astype(matmul_dtype), w1.astype(matmul_dtype),
                preferred_element_type=jnp.float32) + b1
    h = 0.5 * h * (1.0 + lax.erf(h * _INV_SQRT2))
    out = jnp.dot(h.astype(matmul_dtype), w2.astype(matmul_dtype),
                  preferred_element_type=jnp.float32) + b2
    return out.astype(x.dtype)


if __name__ == "__main__":
    # Small shapes consistent with Mixer_chan(dim, channel_dim, out_channel).
    B, S = 4, 60               # N = 240 -> exercises row-tile clamping / ragged tail
    DIM, HIDDEN, OUT = 128, 256, 32

    key = jax.random.PRNGKey(0)
    kx, kg, kb, kw1, kb1, kw2, kb2 = jax.random.split(key, 7)

    x = jax.random.normal(kx, (B, S, DIM), dtype=jnp.float32)

    # Parameters mirroring the module __init__ shapes:
    #   LayerNorm(dim): gamma (dim,), beta (dim,)
    #   Linear1: (dim -> hidden), Linear2: (hidden -> out)   (stored (in, out))
    gamma = 1.0 + 0.02 * jax.random.normal(kg, (DIM,), dtype=jnp.float32)
    beta = 0.02 * jax.random.normal(kb, (DIM,), dtype=jnp.float32)
    w1 = jax.random.normal(kw1, (DIM, HIDDEN), dtype=jnp.float32) / jnp.sqrt(DIM)
    b1 = 0.01 * jax.random.normal(kb1, (HIDDEN,), dtype=jnp.float32)
    w2 = jax.random.normal(kw2, (HIDDEN, OUT), dtype=jnp.float32) / jnp.sqrt(HIDDEN)
    b2 = 0.01 * jax.random.normal(kb2, (OUT,), dtype=jnp.float32)

    params = prepare_params(gamma, beta, w1, b1, w2, b2)

    # References.
    ref_bf16 = reference(x, gamma, beta, w1, b1, w2, b2,
                         matmul_dtype=jnp.bfloat16)
    ref_f32 = reference(x, gamma, beta, w1, b1, w2, b2,
                        matmul_dtype=jnp.float32)

    # (1) Single-grid-step path (tm clamped to 240 rows).
    out = jax.block_until_ready(mixer_chan_apply(x, params, tm=512))
    assert out.shape == (B, S, OUT), out.shape
    err_impl = float(jnp.max(jnp.abs(out - ref_bf16)))
    assert err_impl < 2e-3, err_impl          # vs. bf16-matmul reference
    err_f32 = float(jnp.max(jnp.abs(out - ref_f32)))
    assert err_f32 < 0.1, err_f32             # vs. full-f32 PyTorch semantics

    # (2) Multi-step path with a ragged last block (240 rows, tm=64 -> 4 steps,
    #     last step has 16 masked OOB rows) to validate the unpadded-row path.
    out_r = jax.block_until_ready(mixer_chan_apply(x, params, tm=64))
    err_r = float(jnp.max(jnp.abs(out_r - ref_bf16)))
    assert err_r < 2e-3, err_r

    print("KERNEL_OK")
</pallas_src>

<mosaic_0001>
module attributes {stable_mosaic.version = 11 : i64} {
  func.func @mixer_chan_kernel(%arg0: i32, %arg1: memref<240x128xf32, #tpu.memory_space<vmem>>, %arg2: memref<1x128xf32, #tpu.memory_space<vmem>>, %arg3: memref<1x128xf32, #tpu.memory_space<vmem>>, %arg4: memref<128x256xbf16, #tpu.memory_space<vmem>>, %arg5: memref<1x256xf32, #tpu.memory_space<vmem>>, %arg6: memref<256x32xbf16, #tpu.memory_space<vmem>>, %arg7: memref<1x32xf32, #tpu.memory_space<vmem>>, %arg8: memref<240x32xf32, #tpu.memory_space<vmem>>) attributes {dimension_semantics = [#tpu.dimension_semantics<parallel>], iteration_bounds = array<i64: 1>, scalar_prefetch = 0 : i64, scratch_operands = 0 : i64, tpu.core_type = #tpu.core_type<tc>, window_params = [{transform_indices = @transform_0, window_bounds = array<i64: 240, 128>}, {pipeline_mode = #tpu.pipeline_mode<synchronous>, transform_indices = @transform_1, window_bounds = array<i64: 1, 128>}, {pipeline_mode = #tpu.pipeline_mode<synchronous>, transform_indices = @transform_2, window_bounds = array<i64: 1, 128>}, {pipeline_mode = #tpu.pipeline_mode<synchronous>, transform_indices = @transform_3, window_bounds = array<i64: 128, 256>}, {pipeline_mode = #tpu.pipeline_mode<synchronous>, transform_indices = @transform_4, window_bounds = array<i64: 1, 256>}, {pipeline_mode = #tpu.pipeline_mode<synchronous>, transform_indices = @transform_5, window_bounds = array<i64: 256, 32>}, {pipeline_mode = #tpu.pipeline_mode<synchronous>, transform_indices = @transform_6, window_bounds = array<i64: 1, 32>}, {transform_indices = @transform_7, window_bounds = array<i64: 240, 32>}]} {
    %c0 = arith.constant 0 : index
    %c0_0 = arith.constant 0 : index
    %0 = vector.load %arg1[%c0, %c0_0] : memref<240x128xf32, #tpu.memory_space<vmem>>, vector<240x128xf32>
    %cst = arith.constant dense<0.000000e+00> : vector<240xf32>
    %1 = vector.multi_reduction <add>, %0, %cst [1] : vector<240x128xf32> to vector<240xf32>
    %2 = vector.shape_cast %1 : vector<240xf32> to vector<240x1xf32>
    %cst_1 = arith.constant 1.280000e+02 : f32
    %3 = vector.broadcast %cst_1 : f32 to vector<240x1xf32>
    %4 = arith.divf %2, %3 : vector<240x1xf32>
    %5 = arith.mulf %0, %0 : vector<240x128xf32>
    %cst_2 = arith.constant dense<0.000000e+00> : vector<240xf32>
    %6 = vector.multi_reduction <add>, %5, %cst_2 [1] : vector<240x128xf32> to vector<240xf32>
    %7 = vector.shape_cast %6 : vector<240xf32> to vector<240x1xf32>
    %cst_3 = arith.constant 1.280000e+02 : f32
    %8 = vector.broadcast %cst_3 : f32 to vector<240x1xf32>
    %9 = arith.divf %7, %8 : vector<240x1xf32>
    %10 = arith.mulf %4, %4 : vector<240x1xf32>
    %11 = arith.subf %9, %10 : vector<240x1xf32>
    %cst_4 = arith.constant 0.000000e+00 : f32
    %12 = vector.broadcast %cst_4 : f32 to vector<240x1xf32>
    %13 = arith.maximumf %11, %12 : vector<240x1xf32>
    %14 = vector.broadcast %4 : vector<240x1xf32> to vector<240x128xf32>
    %15 = arith.subf %0, %14 : vector<240x128xf32>
    %cst_5 = arith.constant 9.99999974E-6 : f32
    %16 = vector.broadcast %cst_5 : f32 to vector<240x1xf32>
    %17 = arith.addf %13, %16 : vector<240x1xf32>
    %18 = math.rsqrt %17 : vector<240x1xf32>
    %19 = vector.broadcast %18 : vector<240x1xf32> to vector<240x128xf32>
    %20 = arith.mulf %15, %19 : vector<240x128xf32>
    %c0_6 = arith.constant 0 : index
    %c0_7 = arith.constant 0 : index
    %21 = vector.load %arg2[%c0_6, %c0_7] : memref<1x128xf32, #tpu.memory_space<vmem>>, vector<1x128xf32>
    %22 = vector.broadcast %21 : vector<1x128xf32> to vector<240x128xf32>
    %23 = arith.mulf %20, %22 : vector<240x128xf32>
    %c0_8 = arith.constant 0 : index
    %c0_9 = arith.constant 0 : index
    %24 = vector.load %arg3[%c0_8, %c0_9] : memref<1x128xf32, #tpu.memory_space<vmem>>, vector<1x128xf32>
    %25 = vector.broadcast %24 : vector<1x128xf32> to vector<240x128xf32>
    %26 = arith.addf %23, %25 : vector<240x128xf32>
    %27 = arith.truncf %26 : vector<240x128xf32> to vector<240x128xbf16>
    %c0_10 = arith.constant 0 : index
    %c0_11 = arith.constant 0 : index
    %28 = vector.load %arg4[%c0_10, %c0_11] : memref<128x256xbf16, #tpu.memory_space<vmem>>, vector<128x256xbf16>
    %cst_12 = arith.constant dense<0.000000e+00> : vector<240x256xf32>
    %29 = tpu.matmul %27, %28, %cst_12 {dimension_numbers = #tpu.dot_dimension_numbers<[1], [0], [0], [1], [0, 0, 1, 1], [], []>} : vector<240x128xbf16>, vector<128x256xbf16>, vector<240x256xf32> -> vector<240x256xf32>
    %c0_13 = arith.constant 0 : index
    %c0_14 = arith.constant 0 : index
    %30 = vector.load %arg5[%c0_13, %c0_14] : memref<1x256xf32, #tpu.memory_space<vmem>>, vector<1x256xf32>
    %31 = vector.broadcast %30 : vector<1x256xf32> to vector<240x256xf32>
    %32 = arith.addf %29, %31 : vector<240x256xf32>
    %cst_15 = arith.constant 5.000000e-01 : f32
    %33 = vector.broadcast %cst_15 : f32 to vector<240x256xf32>
    %34 = arith.mulf %33, %32 : vector<240x256xf32>
    %cst_16 = arith.constant 0.707106769 : f32
    %35 = vector.broadcast %cst_16 : f32 to vector<240x256xf32>
    %36 = arith.mulf %32, %35 : vector<240x256xf32>
    %37 = math.erf %36 : vector<240x256xf32>
    %cst_17 = arith.constant 1.000000e+00 : f32
    %38 = vector.broadcast %cst_17 : f32 to vector<240x256xf32>
    %39 = arith.addf %38, %37 : vector<240x256xf32>
    %40 = arith.mulf %34, %39 : vector<240x256xf32>
    %41 = arith.truncf %40 : vector<240x256xf32> to vector<240x256xbf16>
    %c0_18 = arith.constant 0 : index
    %c0_19 = arith.constant 0 : index
    %42 = vector.load %arg6[%c0_18, %c0_19] : memref<256x32xbf16, #tpu.memory_space<vmem>>, vector<256x32xbf16>
    %cst_20 = arith.constant dense<0.000000e+00> : vector<240x32xf32>
    %43 = tpu.matmul %41, %42, %cst_20 {dimension_numbers = #tpu.dot_dimension_numbers<[1], [0], [0], [1], [0, 0, 1, 1], [], []>} : vector<240x256xbf16>, vector<256x32xbf16>, vector<240x32xf32> -> vector<240x32xf32>
    %c0_21 = arith.constant 0 : index
    %c0_22 = arith.constant 0 : index
    %44 = vector.load %arg7[%c0_21, %c0_22] : memref<1x32xf32, #tpu.memory_space<vmem>>, vector<1x32xf32>
    %45 = vector.broadcast %44 : vector<1x32xf32> to vector<240x32xf32>
    %46 = arith.addf %43, %45 : vector<240x32xf32>
    %c0_23 = arith.constant 0 : index
    %c0_24 = arith.constant 0 : index
    %47 = vector.load %arg8[%c0_23, %c0_24] : memref<240x32xf32, #tpu.memory_space<vmem>>, vector<240x32xf32>
    tpu.vector_store %arg8[%c0_23, %c0_24], %46 {strides = array<i32>} : memref<240x32xf32, #tpu.memory_space<vmem>>, vector<240x32xf32>,
    return
  }
  func.func @transform_0(%arg0: i32) -> (i32, i32) {
    %c0_i32 = arith.constant 0 : i32
    %c0_i32_0 = arith.constant 0 : i32
    return %arg0, %c0_i32 : i32, i32
  }
  func.func @transform_1(%arg0: i32) -> (i32, i32) {
    %c0_i32 = arith.constant 0 : i32
    %c0_i32_0 = arith.constant 0 : i32
    %c0_i32_1 = arith.constant 0 : i32
    return %c0_i32, %c0_i32_0 : i32, i32
  }
  func.func @transform_2(%arg0: i32) -> (i32, i32) {
    %c0_i32 = arith.constant 0 : i32
    %c0_i32_0 = arith.constant 0 : i32
    %c0_i32_1 = arith.constant 0 : i32
    return %c0_i32, %c0_i32_0 : i32, i32
  }
  func.func @transform_3(%arg0: i32) -> (i32, i32) {
    %c0_i32 = arith.constant 0 : i32
    %c0_i32_0 = arith.constant 0 : i32
    %c0_i32_1 = arith.constant 0 : i32
    return %c0_i32, %c0_i32_0 : i32, i32
  }
  func.func @transform_4(%arg0: i32) -> (i32, i32) {
    %c0_i32 = arith.constant 0 : i32
    %c0_i32_0 = arith.constant 0 : i32
    %c0_i32_1 = arith.constant 0 : i32
    return %c0_i32, %c0_i32_0 : i32, i32
  }
  func.func @transform_5(%arg0: i32) -> (i32, i32) {
    %c0_i32 = arith.constant 0 : i32
    %c0_i32_0 = arith.constant 0 : i32
    %c0_i32_1 = arith.constant 0 : i32
    return %c0_i32, %c0_i32_0 : i32, i32
  }
  func.func @transform_6(%arg0: i32) -> (i32, i32) {
    %c0_i32 = arith.constant 0 : i32
    %c0_i32_0 = arith.constant 0 : i32
    %c0_i32_1 = arith.constant 0 : i32
    return %c0_i32, %c0_i32_0 : i32, i32
  }
  func.func @transform_7(%arg0: i32) -> (i32, i32) {
    %c0_i32 = arith.constant 0 : i32
    %c0_i32_0 = arith.constant 0 : i32
    return %arg0, %c0_i32 : i32, i32
  }
}

</mosaic_0001>

<llo_original>
// kernel: tpu_custom_call.1
$region0: #{tpu_custom_call.1}
  #allocation0 [shape = 'u32[]', space=smem, size = 0x4, offset = 0x4, fixed_abs, tag = 'smem constant byte address 0x4 - core index']
  #allocation1 [shape = 'u32[72,128]{1,0:T(1,128)}', space=vmem, size = 0x9000, scoped, tag = 'internal scratch']
  %s0 = inlined_call_operand.hbm [shape: f32[240,128], index: 0, kind: input, shape index: {}]
  %s1 = inlined_call_operand.vmem [shape: f32[1,128], index: 1, kind: input, shape index: {}]
  %s2 = inlined_call_operand.vmem [shape: f32[1,128], index: 2, kind: input, shape index: {}]
  %s3 = inlined_call_operand.vmem [shape: bf16[128,256], index: 3, kind: input, shape index: {}]
  %s4 = inlined_call_operand.vmem [shape: f32[1,256], index: 4, kind: input, shape index: {}]
  %s5 = inlined_call_operand.vmem [shape: bf16[256,32], index: 5, kind: input, shape index: {}]
  %s6 = inlined_call_operand.vmem [shape: f32[1,32], index: 6, kind: input, shape index: {}]
  %s7 = inlined_call_operand.vmem [shape: f32[240,32], index: 7, kind: output, shape index: {}]
  %s8 = sld [smem:[#allocation0]]
  $region42: #{tpu_custom_call.1} parent=0
    _
  %s10 = ssub.s32 1, %s8
  %s11 = scalar_select 0, %s10, %s8
  $region1: #{tpu_custom_call.1} parent=0
    #allocation2 [shape = 'u8[122880]{0}', space=vmem, size = 0x1e000, scoped, tag = 'input window, operand 0, single buffered']
    #allocation3 [shape = 's32[1]{0}', space=sflag, size = 0x4, scoped, tag = 'scoped memory for tpu_custom_call.1']
    %12 = vsyncpa [#allocation3], 0
    // Predicated region
    $region2: #{tpu_custom_call.1} parent=1 // pred_check
      _
    $region3: #{tpu_custom_call.1} parent=1 // pred_check_branch
      %14 = sbr.rel (0) target = $region5
    $region4: #{tpu_custom_call.1} parent=1 // pred_region
      %16 = vsyncadd [#allocation3], 0
      %s17 = sshll.u32 %s0, 4
      %s18 = int_to_ptr.hbm [resolvable:$true] %s17
      %s19 = sshll.u32 [#allocation2], 4
      %s20 = int_to_ptr.vmem [resolvable:$true] %s19
      %25 = dma.hbm_to_vmem [thread:$0]  %s18, 3840, %s20, [#allocation3], 128, 128, 8
    $region5: #{tpu_custom_call.1} parent=1 // pred_fallthru
      _
    // Predicated region
    $region6: #{tpu_custom_call.1} parent=1 // pred_check
      _
    $region7: #{tpu_custom_call.1} parent=1 // pred_check_branch
      %27 = sbr.rel (0) target = $region9
    $region8: #{tpu_custom_call.1} parent=1 // pred_region
      _
    $region9: #{tpu_custom_call.1} parent=1 // pred_fallthru
      _
    // Predicated region
    $region10: #{tpu_custom_call.1} parent=1 // pred_check
      _
    $region11: #{tpu_custom_call.1} parent=1 // pred_check_branch
      %29 = sbr.rel (0) target = $region13
    $region12: #{tpu_custom_call.1} parent=1 // pred_region
      _
    $region13: #{tpu_custom_call.1} parent=1 // pred_fallthru
      _
    // Predicated region
    $region14: #{tpu_custom_call.1} parent=1 // pred_check
      _
    $region15: #{tpu_custom_call.1} parent=1 // pred_check_branch
      %31 = sbr.rel (0) target = $region17
    $region16: #{tpu_custom_call.1} parent=1 // pred_region
      _
    $region17: #{tpu_custom_call.1} parent=1 // pred_fallthru
      _
    // Predicated region
    $region18: #{tpu_custom_call.1} parent=1 // pred_check
      _
    $region19: #{tpu_custom_call.1} parent=1 // pred_check_branch
      %33 = sbr.rel (0) target = $region21
    $region20: #{tpu_custom_call.1} parent=1 // pred_region
      _
    $region21: #{tpu_custom_call.1} parent=1 // pred_fallthru
      _
    // Predicated region
    $region22: #{tpu_custom_call.1} parent=1 // pred_check
      _
    $region23: #{tpu_custom_call.1} parent=1 // pred_check_branch
      %35 = sbr.rel (0) target = $region25
    $region24: #{tpu_custom_call.1} parent=1 // pred_region
      _
    $region25: #{tpu_custom_call.1} parent=1 // pred_fallthru
      _
    // Predicated region
    $region26: #{tpu_custom_call.1} parent=1 // pred_check
      _
    $region27: #{tpu_custom_call.1} parent=1 // pred_check_branch
      %37 = sbr.rel (0) target = $region29
    $region28: #{tpu_custom_call.1} parent=1 // pred_region
      _
    $region29: #{tpu_custom_call.1} parent=1 // pred_fallthru
      _
    // Predicated region
    $region30: #{tpu_custom_call.1} parent=1 // pred_check
      _
    $region31: #{tpu_custom_call.1} parent=1 // pred_check_branch
      %39 = sbr.rel (0) target = $region33
    $region32: #{tpu_custom_call.1} parent=1 // pred_region
      %41 = dma.done [#allocation3], 3840
    $region33: #{tpu_custom_call.1} parent=1 // pred_fallthru
      _
    %v42 = vld [vmem:[#allocation2] sm:$0xff]
    %v43 = vld [vmem:[#allocation2 + $0x8] sm:$0xff]
    %v44 = vld [vmem:[#allocation2 + $0x10] sm:$0xff]
    %v45 = vld [vmem:[#allocation2 + $0x18] sm:$0xff]
    %v46 = vld [vmem:[#allocation2 + $0x20] sm:$0xff]
    %v47 = vld [vmem:[#allocation2 + $0x28] sm:$0xff]
    %v48 = vld [vmem:[#allocation2 + $0x30] sm:$0xff]
    %v49 = vld [vmem:[#allocation2 + $0x38] sm:$0xff]
    %v50 = vld [vmem:[#allocation2 + $0x40] sm:$0xff]
    %v51 = vld [vmem:[#allocation2 + $0x48] sm:$0xff]
    %v52 = vld [vmem:[#allocation2 + $0x50] sm:$0xff]
    %v53 = vld [vmem:[#allocation2 + $0x58] sm:$0xff]
    %v54 = vld [vmem:[#allocation2 + $0x60] sm:$0xff]
    %v55 = vld [vmem:[#allocation2 + $0x68] sm:$0xff]
    %v56 = vld [vmem:[#allocation2 + $0x70] sm:$0xff]
    %v57 = vld [vmem:[#allocation2 + $0x78] sm:$0xff]
    %v58 = vld [vmem:[#allocation2 + $0x80] sm:$0xff]
    %v59 = vld [vmem:[#allocation2 + $0x88] sm:$0xff]
    %v60 = vld [vmem:[#allocation2 + $0x90] sm:$0xff]
    %v61 = vld [vmem:[#allocation2 + $0x98] sm:$0xff]
    %v62 = vld [vmem:[#allocation2 + $0xa0] sm:$0xff]
    %v63 = vld [vmem:[#allocation2 + $0xa8] sm:$0xff]
    %v64 = vld [vmem:[#allocation2 + $0xb0] sm:$0xff]
    %v65 = vld [vmem:[#allocation2 + $0xb8] sm:$0xff]
    %v66 = vld [vmem:[#allocation2 + $0xc0] sm:$0xff]
    %v67 = vld [vmem:[#allocation2 + $0xc8] sm:$0xff]
    %v68 = vld [vmem:[#allocation2 + $0xd0] sm:$0xff]
    %v69 = vld [vmem:[#allocation2 + $0xd8] sm:$0xff]
    %v70 = vld [vmem:[#allocation2 + $0xe0] sm:$0xff]
    %v71 = vld [vmem:[#allocation2 + $0xe8] sm:$0xff]
    %72 = vadd.xlane.f32.xlu0 %v42
    %v73 = vpop.xlane.xlu0 %72
    %74 = vadd.xlane.f32.xlu0 %v43
    %v75 = vpop.xlane.xlu0 %74
    %76 = vadd.xlane.f32.xlu0 %v44
    %v77 = vpop.xlane.xlu0 %76
    %78 = vadd.xlane.f32.xlu0 %v45
    %v79 = vpop.xlane.xlu0 %78
    %80 = vadd.xlane.f32.xlu0 %v46
    %v81 = vpop.xlane.xlu0 %80
    %82 = vadd.xlane.f32.xlu0 %v47
    %v83 = vpop.xlane.xlu0 %82
    %84 = vadd.xlane.f32.xlu0 %v48
    %v85 = vpop.xlane.xlu0 %84
    %86 = vadd.xlane.f32.xlu0 %v49
    %v87 = vpop.xlane.xlu0 %86
    %88 = vadd.xlane.f32.xlu0 %v50
    %v89 = vpop.xlane.xlu0 %88
    %90 = vadd.xlane.f32.xlu0 %v51
    %v91 = vpop.xlane.xlu0 %90
    %92 = vadd.xlane.f32.xlu0 %v52
    %v93 = vpop.xlane.xlu0 %92
    %94 = vadd.xlane.f32.xlu0 %v53
    %v95 = vpop.xlane.xlu0 %94
    %96 = vadd.xlane.f32.xlu0 %v54
    %v97 = vpop.xlane.xlu0 %96
    %98 = vadd.xlane.f32.xlu0 %v55
    %v99 = vpop.xlane.xlu0 %98
    %100 = vadd.xlane.f32.xlu0 %v56
    %v101 = vpop.xlane.xlu0 %100
    %102 = vadd.xlane.f32.xlu0 %v57
    %v103 = vpop.xlane.xlu0 %102
    %104 = vadd.xlane.f32.xlu0 %v58
    %v105 = vpop.xlane.xlu0 %104
    %106 = vadd.xlane.f32.xlu0 %v59
    %v107 = vpop.xlane.xlu0 %106
    %108 = vadd.xlane.f32.xlu0 %v60
    %v109 = vpop.xlane.xlu0 %108
    %110 = vadd.xlane.f32.xlu0 %v61
    %v111 = vpop.xlane.xlu0 %110
    %112 = vadd.xlane.f32.xlu0 %v62
    %v113 = vpop.xlane.xlu0 %112
    %114 = vadd.xlane.f32.xlu0 %v63
    %v115 = vpop.xlane.xlu0 %114
    %116 = vadd.xlane.f32.xlu0 %v64
    %v117 = vpop.xlane.xlu0 %116
    %118 = vadd.xlane.f32.xlu0 %v65
    %v119 = vpop.xlane.xlu0 %118
    %120 = vadd.xlane.f32.xlu0 %v66
    %v121 = vpop.xlane.xlu0 %120
    %122 = vadd.xlane.f32.xlu0 %v67
    %v123 = vpop.xlane.xlu0 %122
    %124 = vadd.xlane.f32.xlu0 %v68
    %v125 = vpop.xlane.xlu0 %124
    %126 = vadd.xlane.f32.xlu0 %v69
    %v127 = vpop.xlane.xlu0 %126
    %128 = vadd.xlane.f32.xlu0 %v70
    %v129 = vpop.xlane.xlu0 %128
    %130 = vadd.xlane.f32.xlu0 %v71
    %v131 = vpop.xlane.xlu0 %130
    %v132 = vrcp.pop 128.0
    %v133 = vmul.f32 128.0, %v132
    %v134 = vsub.f32 1.0, %v133
    %v135 = vmul.f32 %v132, %v134
    %v136 = vadd.f32 %v132, %v135
    %vm137 = vweird.f32 %v132
    %v138 = vsel %vm137, %v132, %v136
    %v139 = vmul.f32 %v73, %v138
    %v140 = vmul.f32 %v75, %v138
    %v141 = vmul.f32 %v77, %v138
    %v142 = vmul.f32 %v79, %v138
    %v143 = vmul.f32 %v81, %v138
    %v144 = vmul.f32 %v83, %v138
    %v145 = vmul.f32 %v85, %v138
    %v146 = vmul.f32 %v87, %v138
    %v147 = vmul.f32 %v89, %v138
    %v148 = vmul.f32 %v91, %v138
    %v149 = vmul.f32 %v93, %v138
    %v150 = vmul.f32 %v95, %v138
    %v151 = vmul.f32 %v97, %v138
    %v152 = vmul.f32 %v99, %v138
    %v153 = vmul.f32 %v101, %v138
    %v154 = vmul.f32 %v103, %v138
    %v155 = vmul.f32 %v105, %v138
    %v156 = vmul.f32 %v107, %v138
    %v157 = vmul.f32 %v109, %v138
    %v158 = vmul.f32 %v111, %v138
    %v159 = vmul.f32 %v113, %v138
    %v160 = vmul.f32 %v115, %v138
    %v161 = vmul.f32 %v117, %v138
    %v162 = vmul.f32 %v119, %v138
    %v163 = vmul.f32 %v121, %v138
    %v164 = vmul.f32 %v123, %v138
    %v165 = vmul.f32 %v125, %v138
    %v166 = vmul.f32 %v127, %v138
    %v167 = vmul.f32 %v129, %v138
    %v168 = vmul.f32 %v131, %v138
    %v169 = vmul.f32 %v42, %v42
    %v170 = vmul.f32 %v43, %v43
    %v171 = vmul.f32 %v44, %v44
    %v172 = vmul.f32 %v45, %v45
    %v173 = vmul.f32 %v46, %v46
    %v174 = vmul.f32 %v47, %v47
    %v175 = vmul.f32 %v48, %v48
    %v176 = vmul.f32 %v49, %v49
    %v177 = vmul.f32 %v50, %v50
    %v178 = vmul.f32 %v51, %v51
    %v179 = vmul.f32 %v52, %v52
    %v180 = vmul.f32 %v53, %v53
    %v181 = vmul.f32 %v54, %v54
    %v182 = vmul.f32 %v55, %v55
    %v183 = vmul.f32 %v56, %v56
    %v184 = vmul.f32 %v57, %v57
    %v185 = vmul.f32 %v58, %v58
    %v186 = vmul.f32 %v59, %v59
    %v187 = vmul.f32 %v60, %v60
    %v188 = vmul.f32 %v61, %v61
    %v189 = vmul.f32 %v62, %v62
    %v190 = vmul.f32 %v63, %v63
    %v191 = vmul.f32 %v64, %v64
    %v192 = vmul.f32 %v65, %v65
    %v193 = vmul.f32 %v66, %v66
    %v194 = vmul.f32 %v67, %v67
    %v195 = vmul.f32 %v68, %v68
    %v196 = vmul.f32 %v69, %v69
    %v197 = vmul.f32 %v70, %v70
    %v198 = vmul.f32 %v71, %v71
    %199 = vadd.xlane.f32.xlu0 %v169
    %v200 = vpop.xlane.xlu0 %199
    %201 = vadd.xlane.f32.xlu0 %v170
    %v202 = vpop.xlane.xlu0 %201
    %203 = vadd.xlane.f32.xlu0 %v171
    %v204 = vpop.xlane.xlu0 %203
    %205 = vadd.xlane.f32.xlu0 %v172
    %v206 = vpop.xlane.xlu0 %205
    %207 = vadd.xlane.f32.xlu0 %v173
    %v208 = vpop.xlane.xlu0 %207
    %209 = vadd.xlane.f32.xlu0 %v174
    %v210 = vpop.xlane.xlu0 %209
    %211 = vadd.xlane.f32.xlu0 %v175
    %v212 = vpop.xlane.xlu0 %211
    %213 = vadd.xlane.f32.xlu0 %v176
    %v214 = vpop.xlane.xlu0 %213
    %215 = vadd.xlane.f32.xlu0 %v177
    %v216 = vpop.xlane.xlu0 %215
    %217 = vadd.xlane.f32.xlu0 %v178
    %v218 = vpop.xlane.xlu0 %217
    %219 = vadd.xlane.f32.xlu0 %v179
    %v220 = vpop.xlane.xlu0 %219
    %221 = vadd.xlane.f32.xlu0 %v180
    %v222 = vpop.xlane.xlu0 %221
    %223 = vadd.xlane.f32.xlu0 %v181
    %v224 = vpop.xlane.xlu0 %223
    %225 = vadd.xlane.f32.xlu0 %v182
    %v226 = vpop.xlane.xlu0 %225
    %227 = vadd.xlane.f32.xlu0 %v183
    %v228 = vpop.xlane.xlu0 %227
    %229 = vadd.xlane.f32.xlu0 %v184
    %v230 = vpop.xlane.xlu0 %229
    %231 = vadd.xlane.f32.xlu0 %v185
    %v232 = vpop.xlane.xlu0 %231
    %233 = vadd.xlane.f32.xlu0 %v186
    %v234 = vpop.xlane.xlu0 %233
    %235 = vadd.xlane.f32.xlu0 %v187
    %v236 = vpop.xlane.xlu0 %235
    %237 = vadd.xlane.f32.xlu0 %v188
    %v238 = vpop.xlane.xlu0 %237
    %239 = vadd.xlane.f32.xlu0 %v189
    %v240 = vpop.xlane.xlu0 %239
    %241 = vadd.xlane.f32.xlu0 %v190
    %v242 = vpop.xlane.xlu0 %241
    %243 = vadd.xlane.f32.xlu0 %v191
    %v244 = vpop.xlane.xlu0 %243
    %245 = vadd.xlane.f32.xlu0 %v192
    %v246 = vpop.xlane.xlu0 %245
    %247 = vadd.xlane.f32.xlu0 %v193
    %v248 = vpop.xlane.xlu0 %247
    %249 = vadd.xlane.f32.xlu0 %v194
    %v250 = vpop.xlane.xlu0 %249
    %251 = vadd.xlane.f32.xlu0 %v195
    %v252 = vpop.xlane.xlu0 %251
    %253 = vadd.xlane.f32.xlu0 %v196
    %v254 = vpop.xlane.xlu0 %253
    %255 = vadd.xlane.f32.xlu0 %v197
    %v256 = vpop.xlane.xlu0 %255
    %257 = vadd.xlane.f32.xlu0 %v198
    %v258 = vpop.xlane.xlu0 %257
    %v259 = vmul.f32 %v200, %v138
    %v260 = vmul.f32 %v202, %v138
    %v261 = vmul.f32 %v204, %v138
    %v262 = vmul.f32 %v206, %v138
    %v263 = vmul.f32 %v208, %v138
    %v264 = vmul.f32 %v210, %v138
    %v265 = vmul.f32 %v212, %v138
    %v266 = vmul.f32 %v214, %v138
    %v267 = vmul.f32 %v216, %v138
    %v268 = vmul.f32 %v218, %v138
    %v269 = vmul.f32 %v220, %v138
    %v270 = vmul.f32 %v222, %v138
    %v271 = vmul.f32 %v224, %v138
    %v272 = vmul.f32 %v226, %v138
    %v273 = vmul.f32 %v228, %v138
    %v274 = vmul.f32 %v230, %v138
    %v275 = vmul.f32 %v232, %v138
    %v276 = vmul.f32 %v234, %v138
    %v277 = vmul.f32 %v236, %v138
    %v278 = vmul.f32 %v238, %v138
    %v279 = vmul.f32 %v240, %v138
    %v280 = vmul.f32 %v242, %v138
    %v281 = vmul.f32 %v244, %v138
    %v282 = vmul.f32 %v246, %v138
    %v283 = vmul.f32 %v248, %v138
    %v284 = vmul.f32 %v250, %v138
    %v285 = vmul.f32 %v252, %v138
    %v286 = vmul.f32 %v254, %v138
    %v287 = vmul.f32 %v256, %v138
    %v288 = vmul.f32 %v258, %v138
    %v289 = vmul.f32 %v139, %v139
    %v290 = vmul.f32 %v140, %v140
    %v291 = vmul.f32 %v141, %v141
    %v292 = vmul.f32 %v142, %v142
    %v293 = vmul.f32 %v143, %v143
    %v294 = vmul.f32 %v144, %v144
    %v295 = vmul.f32 %v145, %v145
    %v296 = vmul.f32 %v146, %v146
    %v297 = vmul.f32 %v147, %v147
    %v298 = vmul.f32 %v148, %v148
    %v299 = vmul.f32 %v149, %v149
    %v300 = vmul.f32 %v150, %v150
    %v301 = vmul.f32 %v151, %v151
    %v302 = vmul.f32 %v152, %v152
    %v303 = vmul.f32 %v153, %v153
    %v304 = vmul.f32 %v154, %v154
    %v305 = vmul.f32 %v155, %v155
    %v306 = vmul.f32 %v156, %v156
    %v307 = vmul.f32 %v157, %v157
    %v308 = vmul.f32 %v158, %v158
    %v309 = vmul.f32 %v159, %v159
    %v310 = vmul.f32 %v160, %v160
    %v311 = vmul.f32 %v161, %v161
    %v312 = vmul.f32 %v162, %v162
    %v313 = vmul.f32 %v163, %v163
    %v314 = vmul.f32 %v164, %v164
    %v315 = vmul.f32 %v165, %v165
    %v316 = vmul.f32 %v166, %v166
    %v317 = vmul.f32 %v167, %v167
    %v318 = vmul.f32 %v168, %v168
    %v319 = vsub.f32 %v259, %v289
    %v320 = vsub.f32 %v260, %v290
    %v321 = vsub.f32 %v261, %v291
    %v322 = vsub.f32 %v262, %v292
    %v323 = vsub.f32 %v263, %v293
    %v324 = vsub.f32 %v264, %v294
    %v325 = vsub.f32 %v265, %v295
    %v326 = vsub.f32 %v266, %v296
    %v327 = vsub.f32 %v267, %v297
    %v328 = vsub.f32 %v268, %v298
    %v329 = vsub.f32 %v269, %v299
    %v330 = vsub.f32 %v270, %v300
    %v331 = vsub.f32 %v271, %v301
    %v332 = vsub.f32 %v272, %v302
    %v333 = vsub.f32 %v273, %v303
    %v334 = vsub.f32 %v274, %v304
    %v335 = vsub.f32 %v275, %v305
    %v336 = vsub.f32 %v276, %v306
    %v337 = vsub.f32 %v277, %v307
    %v338 = vsub.f32 %v278, %v308
    %v339 = vsub.f32 %v279, %v309
    %v340 = vsub.f32 %v280, %v310
    %v341 = vsub.f32 %v281, %v311
    %v342 = vsub.f32 %v282, %v312
    %v343 = vsub.f32 %v283, %v313
    %v344 = vsub.f32 %v284, %v314
    %v345 = vsub.f32 %v285, %v315
    %v346 = vsub.f32 %v286, %v316
    %v347 = vsub.f32 %v287, %v317
    %v348 = vsub.f32 %v288, %v318
    %v349 = vmax.f32 %v319, 0.0
    %v350 = vmax.f32 %v320, 0.0
    %v351 = vmax.f32 %v321, 0.0
    %v352 = vmax.f32 %v322, 0.0
    %v353 = vmax.f32 %v323, 0.0
    %v354 = vmax.f32 %v324, 0.0
    %v355 = vmax.f32 %v325, 0.0
    %v356 = vmax.f32 %v326, 0.0
    %v357 = vmax.f32 %v327, 0.0
    %v358 = vmax.f32 %v328, 0.0
    %v359 = vmax.f32 %v329, 0.0
    %v360 = vmax.f32 %v330, 0.0
    %v361 = vmax.f32 %v331, 0.0
    %v362 = vmax.f32 %v332, 0.0
    %v363 = vmax.f32 %v333, 0.0
    %v364 = vmax.f32 %v334, 0.0
    %v365 = vmax.f32 %v335, 0.0
    %v366 = vmax.f32 %v336, 0.0
    %v367 = vmax.f32 %v337, 0.0
    %v368 = vmax.f32 %v338, 0.0
    %v369 = vmax.f32 %v339, 0.0
    %v370 = vmax.f32 %v340, 0.0
    %v371 = vmax.f32 %v341, 0.0
    %v372 = vmax.f32 %v342, 0.0
    %v373 = vmax.f32 %v343, 0.0
    %v374 = vmax.f32 %v344, 0.0
    %v375 = vmax.f32 %v345, 0.0
    %v376 = vmax.f32 %v346, 0.0
    %v377 = vmax.f32 %v347, 0.0
    %v378 = vmax.f32 %v348, 0.0
    %v379 = vsub.f32 %v42, %v139
    %v380 = vsub.f32 %v43, %v140
    %v381 = vsub.f32 %v44, %v141
    %v382 = vsub.f32 %v45, %v142
    %v383 = vsub.f32 %v46, %v143
    %v384 = vsub.f32 %v47, %v144
    %v385 = vsub.f32 %v48, %v145
    %v386 = vsub.f32 %v49, %v146
    %v387 = vsub.f32 %v50, %v147
    %v388 = vsub.f32 %v51, %v148
    %v389 = vsub.f32 %v52, %v149
    %v390 = vsub.f32 %v53, %v150
    %v391 = vsub.f32 %v54, %v151
    %v392 = vsub.f32 %v55, %v152
    %v393 = vsub.f32 %v56, %v153
    %v394 = vsub.f32 %v57, %v154
    %v395 = vsub.f32 %v58, %v155
    %v396 = vsub.f32 %v59, %v156
    %v397 = vsub.f32 %v60, %v157
    %v398 = vsub.f32 %v61, %v158
    %v399 = vsub.f32 %v62, %v159
    %v400 = vsub.f32 %v63, %v160
    %v401 = vsub.f32 %v64, %v161
    %v402 = vsub.f32 %v65, %v162
    %v403 = vsub.f32 %v66, %v163
    %v404 = vsub.f32 %v67, %v164
    %v405 = vsub.f32 %v68, %v165
    %v406 = vsub.f32 %v69, %v166
    %v407 = vsub.f32 %v70, %v167
    %v408 = vsub.f32 %v71, %v168
    %v409 = vadd.f32 %v349, 1e-05
    %v410 = vadd.f32 %v350, 1e-05
    %v411 = vadd.f32 %v351, 1e-05
    %v412 = vadd.f32 %v352, 1e-05
    %v413 = vadd.f32 %v353, 1e-05
    %v414 = vadd.f32 %v354, 1e-05
    %v415 = vadd.f32 %v355, 1e-05
    %v416 = vadd.f32 %v356, 1e-05
    %v417 = vadd.f32 %v357, 1e-05
    %v418 = vadd.f32 %v358, 1e-05
    %v419 = vadd.f32 %v359, 1e-05
    %v420 = vadd.f32 %v360, 1e-05
    %v421 = vadd.f32 %v361, 1e-05
    %v422 = vadd.f32 %v362, 1e-05
    %v423 = vadd.f32 %v363, 1e-05
    %v424 = vadd.f32 %v364, 1e-05
    %v425 = vadd.f32 %v365, 1e-05
    %v426 = vadd.f32 %v366, 1e-05
    %v427 = vadd.f32 %v367, 1e-05
    %v428 = vadd.f32 %v368, 1e-05
    %v429 = vadd.f32 %v369, 1e-05
    %v430 = vadd.f32 %v370, 1e-05
    %v431 = vadd.f32 %v371, 1e-05
    %v432 = vadd.f32 %v372, 1e-05
    %v433 = vadd.f32 %v373, 1e-05
    %v434 = vadd.f32 %v374, 1e-05
    %v435 = vadd.f32 %v375, 1e-05
    %v436 = vadd.f32 %v376, 1e-05
    %v437 = vadd.f32 %v377, 1e-05
    %v438 = vadd.f32 %v378, 1e-05
    %v439 = vrsqrt.pop %v409
    %v440 = vmul.f32 %v439, %v409
    %v441 = vmul.f32 %v440, %v439
    %v442 = vmul.f32 0.5, %v441
    %v443 = vsub.f32 1.5, %v442
    %v444 = vmul.f32 %v439, %v443
    %vm445 = vweird.f32 %v409
    %vm446 = vweird.f32 %v439
    %vm447 = vmor %vm445, %vm446
    %v448 = vsel %vm447, %v439, %v444
    %v449 = vrsqrt.pop %v410
    %v450 = vmul.f32 %v449, %v410
    %v451 = vmul.f32 %v450, %v449
    %v452 = vmul.f32 0.5, %v451
    %v453 = vsub.f32 1.5, %v452
    %v454 = vmul.f32 %v449, %v453
    %vm455 = vweird.f32 %v410
    %vm456 = vweird.f32 %v449
    %vm457 = vmor %vm455, %vm456
    %v458 = vsel %vm457, %v449, %v454
    %v459 = vrsqrt.pop %v411
    %v460 = vmul.f32 %v459, %v411
    %v461 = vmul.f32 %v460, %v459
    %v462 = vmul.f32 0.5, %v461
    %v463 = vsub.f32 1.5, %v462
    %v464 = vmul.f32 %v459, %v463
    %vm465 = vweird.f32 %v411
    %vm466 = vweird.f32 %v459
    %vm467 = vmor %vm465, %vm466
    %v468 = vsel %vm467, %v459, %v464
    %v469 = vrsqrt.pop %v412
    %v470 = vmul.f32 %v469, %v412
    %v471 = vmul.f32 %v470, %v469
    %v472 = vmul.f32 0.5, %v471
    %v473 = vsub.f32 1.5, %v472
    %v474 = vmul.f32 %v469, %v473
    %vm475 = vweird.f32 %v412
    %vm476 = vweird.f32 %v469
    %vm477 = vmor %vm475, %vm476
    %v478 = vsel %vm477, %v469, %v474
    %v479 = vrsqrt.pop %v413
    %v480 = vmul.f32 %v479, %v413
    %v481 = vmul.f32 %v480, %v479
    %v482 = vmul.f32 0.5, %v481
    %v483 = vsub.f32 1.5, %v482
    %v484 = vmul.f32 %v479, %v483
    %vm485 = vweird.f32 %v413
    %vm486 = vweird.f32 %v479
    %vm487 = vmor %vm485, %vm486
    %v488 = vsel %vm487, %v479, %v484
    %v489 = vrsqrt.pop %v414
    %v490 = vmul.f32 %v489, %v414
    %v491 = vmul.f32 %v490, %v489
    %v492 = vmul.f32 0.5, %v491
    %v493 = vsub.f32 1.5, %v492
    %v494 = vmul.f32 %v489, %v493
    %vm495 = vweird.f32 %v414
    %vm496 = vweird.f32 %v489
    %vm497 = vmor %vm495, %vm496
    %v498 = vsel %vm497, %v489, %v494
    %v499 = vrsqrt.pop %v415
    %v500 = vmul.f32 %v499, %v415
    %v501 = vmul.f32 %v500, %v499
    %v502 = vmul.f32 0.5, %v501
    %v503 = vsub.f32 1.5, %v502
    %v504 = vmul.f32 %v499, %v503
    %vm505 = vweird.f32 %v415
    %vm506 = vweird.f32 %v499
    %vm507 = vmor %vm505, %vm506
    %v508 = vsel %vm507, %v499, %v504
    %v509 = vrsqrt.pop %v416
    %v510 = vmul.f32 %v509, %v416
    %v511 = vmul.f32 %v510, %v509
    %v512 = vmul.f32 0.5, %v511
    %v513 = vsub.f32 1.5, %v512
    %v514 = vmul.f32 %v509, %v513
    %vm515 = vweird.f32 %v416
    %vm516 = vweird.f32 %v509
    %vm517 = vmor %vm515, %vm516
    %v518 = vsel %vm517, %v509, %v514
    %v519 = vrsqrt.pop %v417
    %v520 = vmul.f32 %v519, %v417
    %v521 = vmul.f32 %v520, %v519
    %v522 = vmul.f32 0.5, %v521
    %v523 = vsub.f32 1.5, %v522
    %v524 = vmul.f32 %v519, %v523
    %vm525 = vweird.f32 %v417
    %vm526 = vweird.f32 %v519
    %vm527 = vmor %vm525, %vm526
    %v528 = vsel %vm527, %v519, %v524
    %v529 = vrsqrt.pop %v418
    %v530 = vmul.f32 %v529, %v418
    %v531 = vmul.f32 %v530, %v529
    %v532 = vmul.f32 0.5, %v531
    %v533 = vsub.f32 1.5, %v532
    %v534 = vmul.f32 %v529, %v533
    %vm535 = vweird.f32 %v418
    %vm536 = vweird.f32 %v529
    %vm537 = vmor %vm535, %vm536
    %v538 = vsel %vm537, %v529, %v534
    %v539 = vrsqrt.pop %v419
    %v540 = vmul.f32 %v539, %v419
    %v541 = vmul.f32 %v540, %v539
    %v542 = vmul.f32 0.5, %v541
    %v543 = vsub.f32 1.5, %v542
    %v544 = vmul.f32 %v539, %v543
    %vm545 = vweird.f32 %v419
    %vm546 = vweird.f32 %v539
    %vm547 = vmor %vm545, %vm546
    %v548 = vsel %vm547, %v539, %v544
    %v549 = vrsqrt.pop %v420
    %v550 = vmul.f32 %v549, %v420
    %v551 = vmul.f32 %v550, %v549
    %v552 = vmul.f32 0.5, %v551
    %v553 = vsub.f32 1.5, %v552
    %v554 = vmul.f32 %v549, %v553
    %vm555 = vweird.f32 %v420
    %vm556 = vweird.f32 %v549
    %vm557 = vmor %vm555, %vm556
    %v558 = vsel %vm557, %v549, %v554
    %v559 = vrsqrt.pop %v421
    %v560 = vmul.f32 %v559, %v421
    %v561 = vmul.f32 %v560, %v559
    %v562 = vmul.f32 0.5, %v561
    %v563 = vsub.f32 1.5, %v562
    %v564 = vmul.f32 %v559, %v563
    %vm565 = vweird.f32 %v421
    %vm566 = vweird.f32 %v559
    %vm567 = vmor %vm565, %vm566
    %v568 = vsel %vm567, %v559, %v564
    %v569 = vrsqrt.pop %v422
    %v570 = vmul.f32 %v569, %v422
    %v571 = vmul.f32 %v570, %v569
    %v572 = vmul.f32 0.5, %v571
    %v573 = vsub.f32 1.5, %v572
    %v574 = vmul.f32 %v569, %v573
    %vm575 = vweird.f32 %v422
    %vm576 = vweird.f32 %v569
    %vm577 = vmor %vm575, %vm576
    %v578 = vsel %vm577, %v569, %v574
    %v579 = vrsqrt.pop %v423
    %v580 = vmul.f32 %v579, %v423
    %v581 = vmul.f32 %v580, %v579
    %v582 = vmul.f32 0.5, %v581
    %v583 = vsub.f32 1.5, %v582
    %v584 = vmul.f32 %v579, %v583
    %vm585 = vweird.f32 %v423
    %vm586 = vweird.f32 %v579
    %vm587 = vmor %vm585, %vm586
    %v588 = vsel %vm587, %v579, %v584
    %v589 = vrsqrt.pop %v424
    %v590 = vmul.f32 %v589, %v424
    %v591 = vmul.f32 %v590, %v589
    %v592 = vmul.f32 0.5, %v591
    %v593 = vsub.f32 1.5, %v592
    %v594 = vmul.f32 %v589, %v593
    %vm595 = vweird.f32 %v424
    %vm596 = vweird.f32 %v589
    %vm597 = vmor %vm595, %vm596
    %v598 = vsel %vm597, %v589, %v594
    %v599 = vrsqrt.pop %v425
    %v600 = vmul.f32 %v599, %v425
    %v601 = vmul.f32 %v600, %v599
    %v602 = vmul.f32 0.5, %v601
    %v603 = vsub.f32 1.5, %v602
    %v604 = vmul.f32 %v599, %v603
    %vm605 = vweird.f32 %v425
    %vm606 = vweird.f32 %v599
    %vm607 = vmor %vm605, %vm606
    %v608 = vsel %vm607, %v599, %v604
    %v609 = vrsqrt.pop %v426
    %v610 = vmul.f32 %v609, %v426
    %v611 = vmul.f32 %v610, %v609
    %v612 = vmul.f32 0.5, %v611
    %v613 = vsub.f32 1.5, %v612
    %v614 = vmul.f32 %v609, %v613
    %vm615 = vweird.f32 %v426
    %vm616 = vweird.f32 %v609
    %vm617 = vmor %vm615, %vm616
    %v618 = vsel %vm617, %v609, %v614
    %v619 = vrsqrt.pop %v427
    %v620 = vmul.f32 %v619, %v427
    %v621 = vmul.f32 %v620, %v619
    %v622 = vmul.f32 0.5, %v621
    %v623 = vsub.f32 1.5, %v622
    %v624 = vmul.f32 %v619, %v623
    %vm625 = vweird.f32 %v427
    %vm626 = vweird.f32 %v619
    %vm627 = vmor %vm625, %vm626
    %v628 = vsel %vm627, %v619, %v624
    %v629 = vrsqrt.pop %v428
    %v630 = vmul.f32 %v629, %v428
    %v631 = vmul.f32 %v630, %v629
    %v632 = vmul.f32 0.5, %v631
    %v633 = vsub.f32 1.5, %v632
    %v634 = vmul.f32 %v629, %v633
    %vm635 = vweird.f32 %v428
    %vm636 = vweird.f32 %v629
    %vm637 = vmor %vm635, %vm636
    %v638 = vsel %vm637, %v629, %v634
    %v639 = vrsqrt.pop %v429
    %v640 = vmul.f32 %v639, %v429
    %v641 = vmul.f32 %v640, %v639
    %v642 = vmul.f32 0.5, %v641
    %v643 = vsub.f32 1.5, %v642
    %v644 = vmul.f32 %v639, %v643
    %vm645 = vweird.f32 %v429
    %vm646 = vweird.f32 %v639
    %vm647 = vmor %vm645, %vm646
    %v648 = vsel %vm647, %v639, %v644
    %v649 = vrsqrt.pop %v430
    %v650 = vmul.f32 %v649, %v430
    %v651 = vmul.f32 %v650, %v649
    %v652 = vmul.f32 0.5, %v651
    %v653 = vsub.f32 1.5, %v652
    %v654 = vmul.f32 %v649, %v653
    %vm655 = vweird.f32 %v430
    %vm656 = vweird.f32 %v649
    %vm657 = vmor %vm655, %vm656
    %v658 = vsel %vm657, %v649, %v654
    %v659 = vrsqrt.pop %v431
    %v660 = vmul.f32 %v659, %v431
    %v661 = vmul.f32 %v660, %v659
    %v662 = vmul.f32 0.5, %v661
    %v663 = vsub.f32 1.5, %v662
    %v664 = vmul.f32 %v659, %v663
    %vm665 = vweird.f32 %v431
    %vm666 = vweird.f32 %v659
    %vm667 = vmor %vm665, %vm666
    %v668 = vsel %vm667, %v659, %v664
    %v669 = vrsqrt.pop %v432
    %v670 = vmul.f32 %v669, %v432
    %v671 = vmul.f32 %v670, %v669
    %v672 = vmul.f32 0.5, %v671
    %v673 = vsub.f32 1.5, %v672
    %v674 = vmul.f32 %v669, %v673
    %vm675 = vweird.f32 %v432
    %vm676 = vweird.f32 %v669
    %vm677 = vmor %vm675, %vm676
    %v678 = vsel %vm677, %v669, %v674
    %v679 = vrsqrt.pop %v433
    %v680 = vmul.f32 %v679, %v433
    %v681 = vmul.f32 %v680, %v679
    %v682 = vmul.f32 0.5, %v681
    %v683 = vsub.f32 1.5, %v682
    %v684 = vmul.f32 %v679, %v683
    %vm685 = vweird.f32 %v433
    %vm686 = vweird.f32 %v679
    %vm687 = vmor %vm685, %vm686
    %v688 = vsel %vm687, %v679, %v684
    %v689 = vrsqrt.pop %v434
    %v690 = vmul.f32 %v689, %v434
    %v691 = vmul.f32 %v690, %v689
    %v692 = vmul.f32 0.5, %v691
    %v693 = vsub.f32 1.5, %v692
    %v694 = vmul.f32 %v689, %v693
    %vm695 = vweird.f32 %v434
    %vm696 = vweird.f32 %v689
    %vm697 = vmor %vm695, %vm696
    %v698 = vsel %vm697, %v689, %v694
    %v699 = vrsqrt.pop %v435
    %v700 = vmul.f32 %v699, %v435
    %v701 = vmul.f32 %v700, %v699
    %v702 = vmul.f32 0.5, %v701
    %v703 = vsub.f32 1.5, %v702
    %v704 = vmul.f32 %v699, %v703
    %vm705 = vweird.f32 %v435
    %vm706 = vweird.f32 %v699
    %vm707 = vmor %vm705, %vm706
    %v708 = vsel %vm707, %v699, %v704
    %v709 = vrsqrt.pop %v436
    %v710 = vmul.f32 %v709, %v436
    %v711 = vmul.f32 %v710, %v709
    %v712 = vmul.f32 0.5, %v711
    %v713 = vsub.f32 1.5, %v712
    %v714 = vmul.f32 %v709, %v713
    %vm715 = vweird.f32 %v436
    %vm716 = vweird.f32 %v709
    %vm717 = vmor %vm715, %vm716
    %v718 = vsel %vm717, %v709, %v714
    %v719 = vrsqrt.pop %v437
    %v720 = vmul.f32 %v719, %v437
    %v721 = vmul.f32 %v720, %v719
    %v722 = vmul.f32 0.5, %v721
    %v723 = vsub.f32 1.5, %v722
    %v724 = vmul.f32 %v719, %v723
    %vm725 = vweird.f32 %v437
    %vm726 = vweird.f32 %v719
    %vm727 = vmor %vm725, %vm726
    %v728 = vsel %vm727, %v719, %v724
    %v729 = vrsqrt.pop %v438
    %v730 = vmul.f32 %v729, %v438
    %v731 = vmul.f32 %v730, %v729
    %v732 = vmul.f32 0.5, %v731
    %v733 = vsub.f32 1.5, %v732
    %v734 = vmul.f32 %v729, %v733
    %vm735 = vweird.f32 %v438
    %vm736 = vweird.f32 %v729
    %vm737 = vmor %vm735, %vm736
    %v738 = vsel %vm737, %v729, %v734
    %v739 = vmul.f32 %v379, %v448
    %v740 = vmul.f32 %v380, %v458
    %v741 = vmul.f32 %v381, %v468
    %v742 = vmul.f32 %v382, %v478
    %v743 = vmul.f32 %v383, %v488
    %v744 = vmul.f32 %v384, %v498
    %v745 = vmul.f32 %v385, %v508
    %v746 = vmul.f32 %v386, %v518
    %v747 = vmul.f32 %v387, %v528
    %v748 = vmul.f32 %v388, %v538
    %v749 = vmul.f32 %v389, %v548
    %v750 = vmul.f32 %v390, %v558
    %v751 = vmul.f32 %v391, %v568
    %v752 = vmul.f32 %v392, %v578
    %v753 = vmul.f32 %v393, %v588
    %v754 = vmul.f32 %v394, %v598
    %v755 = vmul.f32 %v395, %v608
    %v756 = vmul.f32 %v396, %v618
    %v757 = vmul.f32 %v397, %v628
    %v758 = vmul.f32 %v398, %v638
    %v759 = vmul.f32 %v399, %v648
    %v760 = vmul.f32 %v400, %v658
    %v761 = vmul.f32 %v401, %v668
    %v762 = vmul.f32 %v402, %v678
    %v763 = vmul.f32 %v403, %v688
    %v764 = vmul.f32 %v404, %v698
    %v765 = vmul.f32 %v405, %v708
    %v766 = vmul.f32 %v406, %v718
    %v767 = vmul.f32 %v407, %v728
    %v768 = vmul.f32 %v408, %v738
    %v769 = vld [vmem:[%s1] sm:$0x1]
    %v771 = vperm.slane %v769, 0
    %v773 = vmul.f32 %v739, %v771
    %v774 = vmul.f32 %v740, %v771
    %v775 = vmul.f32 %v741, %v771
    %v776 = vmul.f32 %v742, %v771
    %v777 = vmul.f32 %v743, %v771
    %v778 = vmul.f32 %v744, %v771
    %v779 = vmul.f32 %v745, %v771
    %v780 = vmul.f32 %v746, %v771
    %v781 = vmul.f32 %v747, %v771
    %v782 = vmul.f32 %v748, %v771
    %v783 = vmul.f32 %v749, %v771
    %v784 = vmul.f32 %v750, %v771
    %v785 = vmul.f32 %v751, %v771
    %v786 = vmul.f32 %v752, %v771
    %v787 = vmul.f32 %v753, %v771
    %v788 = vmul.f32 %v754, %v771
    %v789 = vmul.f32 %v755, %v771
    %v790 = vmul.f32 %v756, %v771
    %v791 = vmul.f32 %v757, %v771
    %v792 = vmul.f32 %v758, %v771
    %v793 = vmul.f32 %v759, %v771
    %v794 = vmul.f32 %v760, %v771
    %v795 = vmul.f32 %v761, %v771
    %v796 = vmul.f32 %v762, %v771
    %v797 = vmul.f32 %v763, %v771
    %v798 = vmul.f32 %v764, %v771
    %v799 = vmul.f32 %v765, %v771
    %v800 = vmul.f32 %v766, %v771
    %v801 = vmul.f32 %v767, %v771
    %v802 = vmul.f32 %v768, %v771
    %v803 = vld [vmem:[%s2] sm:$0x1]
    %v805 = vperm.slane %v803, 0
    %v807 = vadd.f32 %v773, %v805
    %v808 = vadd.f32 %v774, %v805
    %v809 = vadd.f32 %v775, %v805
    %v810 = vadd.f32 %v776, %v805
    %v811 = vadd.f32 %v777, %v805
    %v812 = vadd.f32 %v778, %v805
    %v813 = vadd.f32 %v779, %v805
    %v814 = vadd.f32 %v780, %v805
    %v815 = vadd.f32 %v781, %v805
    %v816 = vadd.f32 %v782, %v805
    %v817 = vadd.f32 %v783, %v805
    %v818 = vadd.f32 %v784, %v805
    %v819 = vadd.f32 %v785, %v805
    %v820 = vadd.f32 %v786, %v805
    %v821 = vadd.f32 %v787, %v805
    %v822 = vadd.f32 %v788, %v805
    %v823 = vadd.f32 %v789, %v805
    %v824 = vadd.f32 %v790, %v805
    %v825 = vadd.f32 %v791, %v805
    %v826 = vadd.f32 %v792, %v805
    %v827 = vadd.f32 %v793, %v805
    %v828 = vadd.f32 %v794, %v805
    %v829 = vadd.f32 %v795, %v805
    %v830 = vadd.f32 %v796, %v805
    %v831 = vadd.f32 %v797, %v805
    %v832 = vadd.f32 %v798, %v805
    %v833 = vadd.f32 %v799, %v805
    %v834 = vadd.f32 %v800, %v805
    %v835 = vadd.f32 %v801, %v805
    %v836 = vadd.f32 %v802, %v805
    %v837 = vpack.c.bf16 %v808, %v807
    %v838 = vpack.c.bf16 %v810, %v809
    %v839 = vpack.c.bf16 %v812, %v811
    %v840 = vpack.c.bf16 %v814, %v813
    %v841 = vpack.c.bf16 %v816, %v815
    %v842 = vpack.c.bf16 %v818, %v817
    %v843 = vpack.c.bf16 %v820, %v819
    %v844 = vpack.c.bf16 %v822, %v821
    %v845 = vpack.c.bf16 %v824, %v823
    %v846 = vpack.c.bf16 %v826, %v825
    %v847 = vpack.c.bf16 %v828, %v827
    %v848 = vpack.c.bf16 %v830, %v829
    %v849 = vpack.c.bf16 %v832, %v831
    %v850 = vpack.c.bf16 %v834, %v833
    %v851 = vpack.c.bf16 %v836, %v835
    %v852 = vld [vmem:[%s3] sm:$0xff]
    %v853 = vld [vmem:[%s3 + $0x8] sm:$0xff]
    %v854 = vld [vmem:[%s3 + $0x10] sm:$0xff]
    %v855 = vld [vmem:[%s3 + $0x18] sm:$0xff]
    %v856 = vld [vmem:[%s3 + $0x20] sm:$0xff]
    %v857 = vld [vmem:[%s3 + $0x28] sm:$0xff]
    %v858 = vld [vmem:[%s3 + $0x30] sm:$0xff]
    %v859 = vld [vmem:[%s3 + $0x38] sm:$0xff]
    %v860 = vld [vmem:[%s3 + $0x40] sm:$0xff]
    %v861 = vld [vmem:[%s3 + $0x48] sm:$0xff]
    %v862 = vld [vmem:[%s3 + $0x50] sm:$0xff]
    %v863 = vld [vmem:[%s3 + $0x58] sm:$0xff]
    %v864 = vld [vmem:[%s3 + $0x60] sm:$0xff]
    %v865 = vld [vmem:[%s3 + $0x68] sm:$0xff]
    %v866 = vld [vmem:[%s3 + $0x70] sm:$0xff]
    %v867 = vld [vmem:[%s3 + $0x78] sm:$0xff]
    %v868 = vld [vmem:[%s4] sm:$0x3]
    %v870 = vperm.slane %v868, 0
    %v871 = vperm.slane %v868, 1
    %v890 = vunpack.c.l.b16 %v852
    %v891 = vunpack.c.h.b16 %v852
    %v892 = vunpack.c.l.b16 %v853
    %v893 = vunpack.c.h.b16 %v853
    %v894 = vunpack.c.l.b16 %v854
    %v895 = vunpack.c.h.b16 %v854
    %v896 = vunpack.c.l.b16 %v855
    %v897 = vunpack.c.h.b16 %v855
    %v898 = vunpack.c.l.b16 %v856
    %v899 = vunpack.c.h.b16 %v856
    %v900 = vunpack.c.l.b16 %v857
    %v901 = vunpack.c.h.b16 %v857
    %v902 = vunpack.c.l.b16 %v858
    %v903 = vunpack.c.h.b16 %v858
    %v904 = vunpack.c.l.b16 %v859
    %v905 = vunpack.c.h.b16 %v859
    %v906 = vunpack.c.l.b16 %v860
    %v907 = vunpack.c.h.b16 %v860
    %v908 = vunpack.c.l.b16 %v861
    %v909 = vunpack.c.h.b16 %v861
    %v910 = vunpack.c.l.b16 %v862
    %v911 = vunpack.c.h.b16 %v862
    %v912 = vunpack.c.l.b16 %v863
    %v913 = vunpack.c.h.b16 %v863
    %v914 = vunpack.c.l.b16 %v864
    %v915 = vunpack.c.h.b16 %v864
    %v916 = vunpack.c.l.b16 %v865
    %v917 = vunpack.c.h.b16 %v865
    %v918 = vunpack.c.l.b16 %v866
    %v919 = vunpack.c.h.b16 %v866
    %v920 = vunpack.c.l.b16 %v867
    %v921 = vunpack.c.h.b16 %v867
    %v922 = vpack.c.b16 %v892, %v890
    %v923 = vpack.c.b16 %v893, %v891
    %v924 = vpack.c.b16 %v896, %v894
    %v925 = vpack.c.b16 %v897, %v895
    %v926 = vpack.c.b16 %v900, %v898
    %v927 = vpack.c.b16 %v901, %v899
    %v928 = vpack.c.b16 %v904, %v902
    %v929 = vpack.c.b16 %v905, %v903
    %v930 = vpack.c.b16 %v908, %v906
    %v931 = vpack.c.b16 %v909, %v907
    %v932 = vpack.c.b16 %v912, %v910
    %v933 = vpack.c.b16 %v913, %v911
    %v934 = vpack.c.b16 %v916, %v914
    %v935 = vpack.c.b16 %v917, %v915
    %v936 = vpack.c.b16 %v920, %v918
    %v937 = vpack.c.b16 %v921, %v919
    %954 = vmatpush.bf16.msra.mxu0 %v936
    %955 = vmatpush.bf16.msra.mxu0 %v934
    %956 = vmatpush.bf16.msra.mxu0 %v932
    %957 = vmatpush.bf16.msra.mxu0 %v930
    %958 = vmatpush.bf16.msra.mxu0 %v928
    %959 = vmatpush.bf16.msra.mxu0 %v926
    %960 = vmatpush.bf16.msra.mxu0 %v924
    %961 = vmatpush.bf16.msra.mxu0 %v922
    %962 = vmatmul.bf16.gmra.mxu0 %v837
    %v963 = vpop.f32.mrf.mxu0
    %v964 = vadd.f32 %v870, %v963
    %v965 = vpop.f32.mrf.mxu0
    %v966 = vadd.f32 %v870, %v965
    %967 = vmatmul.bf16.gmra.mxu0 %v838
    %v968 = vpop.f32.mrf.mxu0
    %v969 = vadd.f32 %v870, %v968
    %v970 = vpop.f32.mrf.mxu0
    %v971 = vadd.f32 %v870, %v970
    %972 = vmatmul.bf16.gmra.mxu0 %v839
    %v973 = vpop.f32.mrf.mxu0
    %v974 = vadd.f32 %v870, %v973
    %v975 = vpop.f32.mrf.mxu0
    %v976 = vadd.f32 %v870, %v975
    %977 = vmatmul.bf16.gmra.mxu0 %v840
    %v978 = vpop.f32.mrf.mxu0
    %v979 = vadd.f32 %v870, %v978
    %v980 = vpop.f32.mrf.mxu0
    %v981 = vadd.f32 %v870, %v980
    %982 = vmatmul.bf16.gmra.mxu0 %v841
    %v983 = vpop.f32.mrf.mxu0
    %v984 = vadd.f32 %v870, %v983
    %v985 = vpop.f32.mrf.mxu0
    %v986 = vadd.f32 %v870, %v985
    %987 = vmatmul.bf16.gmra.mxu0 %v842
    %v988 = vpop.f32.mrf.mxu0
    %v989 = vadd.f32 %v870, %v988
    %v990 = vpop.f32.mrf.mxu0
    %v991 = vadd.f32 %v870, %v990
    %992 = vmatmul.bf16.gmra.mxu0 %v843
    %v993 = vpop.f32.mrf.mxu0
    %v994 = vadd.f32 %v870, %v993
    %v995 = vpop.f32.mrf.mxu0
    %v996 = vadd.f32 %v870, %v995
    %997 = vmatmul.bf16.gmra.mxu0 %v844
    %v998 = vpop.f32.mrf.mxu0
    %v999 = vadd.f32 %v870, %v998
    %v1000 = vpop.f32.mrf.mxu0
    %v1001 = vadd.f32 %v870, %v1000
    %1002 = vmatmul.bf16.gmra.mxu0 %v845
    %v1003 = vpop.f32.mrf.mxu0
    %v1004 = vadd.f32 %v870, %v1003
    %v1005 = vpop.f32.mrf.mxu0
    %v1006 = vadd.f32 %v870, %v1005
    %1007 = vmatmul.bf16.gmra.mxu0 %v846
    %v1008 = vpop.f32.mrf.mxu0
    %v1009 = vadd.f32 %v870, %v1008
    %v1010 = vpop.f32.mrf.mxu0
    %v1011 = vadd.f32 %v870, %v1010
    %1012 = vmatmul.bf16.gmra.mxu0 %v847
    %v1013 = vpop.f32.mrf.mxu0
    %v1014 = vadd.f32 %v870, %v1013
    %v1015 = vpop.f32.mrf.mxu0
    %v1016 = vadd.f32 %v870, %v1015
    %1017 = vmatmul.bf16.gmra.mxu0 %v848
    %v1018 = vpop.f32.mrf.mxu0
    %v1019 = vadd.f32 %v870, %v1018
    %v1020 = vpop.f32.mrf.mxu0
    %v1021 = vadd.f32 %v870, %v1020
    %1022 = vmatmul.bf16.gmra.mxu0 %v849
    %v1023 = vpop.f32.mrf.mxu0
    %v1024 = vadd.f32 %v870, %v1023
    %v1025 = vpop.f32.mrf.mxu0
    %v1026 = vadd.f32 %v870, %v1025
    %1027 = vmatmul.bf16.gmra.mxu0 %v850
    %v1028 = vpop.f32.mrf.mxu0
    %v1029 = vadd.f32 %v870, %v1028
    %v1030 = vpop.f32.mrf.mxu0
    %v1031 = vadd.f32 %v870, %v1030
    %1032 = vmatmul.bf16.gmra.mxu0 %v851
    %v1033 = vpop.f32.mrf.mxu0
    %v1034 = vadd.f32 %v870, %v1033
    %v1035 = vpop.f32.mrf.mxu0
    %v1036 = vadd.f32 %v870, %v1035
    %1037 = vdwg.mxu0
    %1038 = vmatpush.bf16.msra.mxu0 %v937
    %1039 = vmatpush.bf16.msra.mxu0 %v935
    %1040 = vmatpush.bf16.msra.mxu0 %v933
    %1041 = vmatpush.bf16.msra.mxu0 %v931
    %1042 = vmatpush.bf16.msra.mxu0 %v929
    %1043 = vmatpush.bf16.msra.mxu0 %v927
    %1044 = vmatpush.bf16.msra.mxu0 %v925
    %1045 = vmatpush.bf16.msra.mxu0 %v923
    %1046 = vmatmul.bf16.gmra.mxu0 %v837
    %v1047 = vpop.f32.mrf.mxu0
    %v1048 = vadd.f32 %v871, %v1047
    %v1049 = vpop.f32.mrf.mxu0
    %v1050 = vadd.f32 %v871, %v1049
    %1051 = vmatmul.bf16.gmra.mxu0 %v838
    %v1052 = vpop.f32.mrf.mxu0
    %v1053 = vadd.f32 %v871, %v1052
    %v1054 = vpop.f32.mrf.mxu0
    %v1055 = vadd.f32 %v871, %v1054
    %1056 = vmatmul.bf16.gmra.mxu0 %v839
    %v1057 = vpop.f32.mrf.mxu0
    %v1058 = vadd.f32 %v871, %v1057
    %v1059 = vpop.f32.mrf.mxu0
    %v1060 = vadd.f32 %v871, %v1059
    %1061 = vmatmul.bf16.gmra.mxu0 %v840
    %v1062 = vpop.f32.mrf.mxu0
    %v1063 = vadd.f32 %v871, %v1062
    %v1064 = vpop.f32.mrf.mxu0
    %v1065 = vadd.f32 %v871, %v1064
    %1066 = vmatmul.bf16.gmra.mxu0 %v841
    %v1067 = vpop.f32.mrf.mxu0
    %v1068 = vadd.f32 %v871, %v1067
    %v1069 = vpop.f32.mrf.mxu0
    %v1070 = vadd.f32 %v871, %v1069
    %1071 = vmatmul.bf16.gmra.mxu0 %v842
    %v1072 = vpop.f32.mrf.mxu0
    %v1073 = vadd.f32 %v871, %v1072
    %v1074 = vpop.f32.mrf.mxu0
    %v1075 = vadd.f32 %v871, %v1074
    %1076 = vmatmul.bf16.gmra.mxu0 %v843
    %v1077 = vpop.f32.mrf.mxu0
    %v1078 = vadd.f32 %v871, %v1077
    %v1079 = vpop.f32.mrf.mxu0
    %v1080 = vadd.f32 %v871, %v1079
    %1081 = vmatmul.bf16.gmra.mxu0 %v844
    %v1082 = vpop.f32.mrf.mxu0
    %v1083 = vadd.f32 %v871, %v1082
    %v1084 = vpop.f32.mrf.mxu0
    %v1085 = vadd.f32 %v871, %v1084
    %1086 = vmatmul.bf16.gmra.mxu0 %v845
    %v1087 = vpop.f32.mrf.mxu0
    %v1088 = vadd.f32 %v871, %v1087
    %v1089 = vpop.f32.mrf.mxu0
    %v1090 = vadd.f32 %v871, %v1089
    %1091 = vmatmul.bf16.gmra.mxu0 %v846
    %v1092 = vpop.f32.mrf.mxu0
    %v1093 = vadd.f32 %v871, %v1092
    %v1094 = vpop.f32.mrf.mxu0
    %v1095 = vadd.f32 %v871, %v1094
    %1096 = vmatmul.bf16.gmra.mxu0 %v847
    %v1097 = vpop.f32.mrf.mxu0
    %v1098 = vadd.f32 %v871, %v1097
    %v1099 = vpop.f32.mrf.mxu0
    %v1100 = vadd.f32 %v871, %v1099
    %1101 = vmatmul.bf16.gmra.mxu0 %v848
    %v1102 = vpop.f32.mrf.mxu0
    %v1103 = vadd.f32 %v871, %v1102
    %v1104 = vpop.f32.mrf.mxu0
    %v1105 = vadd.f32 %v871, %v1104
    %1106 = vmatmul.bf16.gmra.mxu0 %v849
    %v1107 = vpop.f32.mrf.mxu0
    %v1108 = vadd.f32 %v871, %v1107
    %v1109 = vpop.f32.mrf.mxu0
    %v1110 = vadd.f32 %v871, %v1109
    %1111 = vmatmul.bf16.gmra.mxu0 %v850
    %v1112 = vpop.f32.mrf.mxu0
    %v1113 = vadd.f32 %v871, %v1112
    %v1114 = vpop.f32.mrf.mxu0
    %v1115 = vadd.f32 %v871, %v1114
    %1116 = vmatmul.bf16.gmra.mxu0 %v851
    %v1117 = vpop.f32.mrf.mxu0
    %v1118 = vadd.f32 %v871, %v1117
    %v1119 = vpop.f32.mrf.mxu0
    %v1120 = vadd.f32 %v871, %v1119
    %1121 = vdwg.mxu0
    %v1122 = vmul.f32 %v964, 0.5
    %v1123 = vmul.f32 %v1048, 0.5
    %v1124 = vmul.f32 %v966, 0.5
    %v1125 = vmul.f32 %v1050, 0.5
    %v1126 = vmul.f32 %v969, 0.5
    %v1127 = vmul.f32 %v1053, 0.5
    %v1128 = vmul.f32 %v971, 0.5
    %v1129 = vmul.f32 %v1055, 0.5
    %v1130 = vmul.f32 %v974, 0.5
    %v1131 = vmul.f32 %v1058, 0.5
    %v1132 = vmul.f32 %v976, 0.5
    %v1133 = vmul.f32 %v1060, 0.5
    %v1134 = vmul.f32 %v979, 0.5
    %v1135 = vmul.f32 %v1063, 0.5
    %v1136 = vmul.f32 %v981, 0.5
    %v1137 = vmul.f32 %v1065, 0.5
    %v1138 = vmul.f32 %v984, 0.5
    %v1139 = vmul.f32 %v1068, 0.5
    %v1140 = vmul.f32 %v986, 0.5
    %v1141 = vmul.f32 %v1070, 0.5
    %v1142 = vmul.f32 %v989, 0.5
    %v1143 = vmul.f32 %v1073, 0.5
    %v1144 = vmul.f32 %v991, 0.5
    %v1145 = vmul.f32 %v1075, 0.5
    %v1146 = vmul.f32 %v994, 0.5
    %v1147 = vmul.f32 %v1078, 0.5
    %v1148 = vmul.f32 %v996, 0.5
    %v1149 = vmul.f32 %v1080, 0.5
    %v1150 = vmul.f32 %v999, 0.5
    %v1151 = vmul.f32 %v1083, 0.5
    %v1152 = vmul.f32 %v1001, 0.5
    %v1153 = vmul.f32 %v1085, 0.5
    %v1154 = vmul.f32 %v1004, 0.5
    %v1155 = vmul.f32 %v1088, 0.5
    %v1156 = vmul.f32 %v1006, 0.5
    %v1157 = vmul.f32 %v1090, 0.5
    %v1158 = vmul.f32 %v1009, 0.5
    %v1159 = vmul.f32 %v1093, 0.5
    %v1160 = vmul.f32 %v1011, 0.5
    %v1161 = vmul.f32 %v1095, 0.5
    %v1162 = vmul.f32 %v1014, 0.5
    %v1163 = vmul.f32 %v1098, 0.5
    %v1164 = vmul.f32 %v1016, 0.5
    %v1165 = vmul.f32 %v1100, 0.5
    %v1166 = vmul.f32 %v1019, 0.5
    %v1167 = vmul.f32 %v1103, 0.5
    %v1168 = vmul.f32 %v1021, 0.5
    %v1169 = vmul.f32 %v1105, 0.5
    %v1170 = vmul.f32 %v1024, 0.5
    %v1171 = vmul.f32 %v1108, 0.5
    %v1172 = vmul.f32 %v1026, 0.5
    %v1173 = vmul.f32 %v1110, 0.5
    %v1174 = vmul.f32 %v1029, 0.5
    %v1175 = vmul.f32 %v1113, 0.5
    %v1176 = vmul.f32 %v1031, 0.5
    %v1177 = vmul.f32 %v1115, 0.5
    %v1178 = vmul.f32 %v1034, 0.5
    %v1179 = vmul.f32 %v1118, 0.5
    %v1180 = vmul.f32 %v1036, 0.5
    %v1181 = vmul.f32 %v1120, 0.5
    %v1182 = vmul.f32 %v964, 0.70710677
    %v1183 = vmul.f32 %v1048, 0.70710677
    %v1184 = vmul.f32 %v966, 0.70710677
    %v1185 = vmul.f32 %v1050, 0.70710677
    %v1186 = vmul.f32 %v969, 0.70710677
    %v1187 = vmul.f32 %v1053, 0.70710677
    %v1188 = vmul.f32 %v971, 0.70710677
    %v1189 = vmul.f32 %v1055, 0.70710677
    %v1190 = vmul.f32 %v974, 0.70710677
    %v1191 = vmul.f32 %v1058, 0.70710677
    %v1192 = vmul.f32 %v976, 0.70710677
    %v1193 = vmul.f32 %v1060, 0.70710677
    %v1194 = vmul.f32 %v979, 0.70710677
    %v1195 = vmul.f32 %v1063, 0.70710677
    %v1196 = vmul.f32 %v981, 0.70710677
    %v1197 = vmul.f32 %v1065, 0.70710677
    %v1198 = vmul.f32 %v984, 0.70710677
    %v1199 = vmul.f32 %v1068, 0.70710677
    %v1200 = vmul.f32 %v986, 0.70710677
    %v1201 = vmul.f32 %v1070, 0.70710677
    %v1202 = vmul.f32 %v989, 0.70710677
    %v1203 = vmul.f32 %v1073, 0.70710677
    %v1204 = vmul.f32 %v991, 0.70710677
    %v1205 = vmul.f32 %v1075, 0.70710677
    %v1206 = vmul.f32 %v994, 0.70710677
    %v1207 = vmul.f32 %v1078, 0.70710677
    %v1208 = vmul.f32 %v996, 0.70710677
    %v1209 = vmul.f32 %v1080, 0.70710677
    %v1210 = vmul.f32 %v999, 0.70710677
    %v1211 = vmul.f32 %v1083, 0.70710677
    %v1212 = vmul.f32 %v1001, 0.70710677
    %v1213 = vmul.f32 %v1085, 0.70710677
    %v1214 = vmul.f32 %v1004, 0.70710677
    %v1215 = vmul.f32 %v1088, 0.70710677
    %v1216 = vmul.f32 %v1006, 0.70710677
    %v1217 = vmul.f32 %v1090, 0.70710677
    %v1218 = vmul.f32 %v1009, 0.70710677
    %v1219 = vmul.f32 %v1093, 0.70710677
    %v1220 = vmul.f32 %v1011, 0.70710677
    %v1221 = vmul.f32 %v1095, 0.70710677
    %v1222 = vmul.f32 %v1014, 0.70710677
    %v1223 = vmul.f32 %v1098, 0.70710677
    %v1224 = vmul.f32 %v1016, 0.70710677
    %v1225 = vmul.f32 %v1100, 0.70710677
    %v1226 = vmul.f32 %v1019, 0.70710677
    %v1227 = vmul.f32 %v1103, 0.70710677
    %v1228 = vmul.f32 %v1021, 0.70710677
    %v1229 = vmul.f32 %v1105, 0.70710677
    %v1230 = vmul.f32 %v1024, 0.70710677
    %v1231 = vmul.f32 %v1108, 0.70710677
    %v1232 = vmul.f32 %v1026, 0.70710677
    %v1233 = vmul.f32 %v1110, 0.70710677
    %v1234 = vmul.f32 %v1029, 0.70710677
    %v1235 = vmul.f32 %v1113, 0.70710677
    %v1236 = vmul.f32 %v1031, 0.70710677
    %v1237 = vmul.f32 %v1115, 0.70710677
    %v1238 = vmul.f32 %v1034, 0.70710677
    %v1239 = vmul.f32 %v1118, 0.70710677
    %v1240 = vmul.f32 %v1036, 0.70710677
    %v1241 = vmul.f32 %v1120, 0.70710677
    %v1242 = vmul.f32 %v1182, %v1182
    %v1243 = vmin.f32 16.0, %v1242
    %v1244 = vmul.f32 %v1243, 2.1237322e-06
    %v1245 = vadd.f32 %v1244, 0.00028619796
    %v1246 = vmul.f32 %v1243, %v1245
    %v1247 = vadd.f32 %v1246, 0.0036580483
    %v1248 = vmul.f32 %v1243, %v1247
    %v1249 = vadd.f32 %v1248, 0.05243302
    %v1250 = vmul.f32 %v1243, %v1249
    %v1251 = vadd.f32 %v1250, 0.18741608
    %v1252 = vmul.f32 %v1243, %v1251
    %v1253 = vadd.f32 %v1252, 1.1283791
    %v1254 = vmul.f32 %v1182, %v1253
    %v1255 = vmul.f32 %v1243, 3.8918573e-05
    %v1256 = vadd.f32 %v1255, 0.001143296
    %v1257 = vmul.f32 %v1243, %v1256
    %v1258 = vadd.f32 %v1257, 0.014752088
    %v1259 = vmul.f32 %v1243, %v1258
    %v1260 = vadd.f32 %v1259, 0.112945676
    %v1261 = vmul.f32 %v1243, %v1260
    %v1262 = vadd.f32 %v1261, 0.4994258
    %v1263 = vmul.f32 %v1243, %v1262
    %v1264 = vadd.f32 %v1263, 1.0
    %v1265 = vrcp.pop %v1264
    %v1266 = vmul.f32 %v1264, %v1265
    %v1267 = vsub.f32 1.0, %v1266
    %v1268 = vmul.f32 %v1265, %v1267
    %v1269 = vadd.f32 %v1265, %v1268
    %vm1270 = vweird.f32 %v1264
    %vm1271 = vweird.f32 %v1265
    %vm1272 = vmor %vm1270, %vm1271
    %v1273 = vsel %vm1272, %v1265, %v1269
    %v1274 = vand.u32 2147483647, %v1264
    %vm1275 = vcmp.eq.f32.partialorder %v1274, 8.507059e+37
    %v1276 = vand.u32 %v1264, 2147483648
    %v1277 = vor.u32 1.1754944e-38, %v1276
    %v1278 = vsel %vm1275, %v1277, %v1273
    %v1279 = vmul.f32 %v1254, %v1278
    %v1280 = vmin.f32 %v1279, 1.0
    %v1281 = vmax.f32 %v1280, -1.0
    %v1282 = vmul.f32 %v1183, %v1183
    %v1283 = vmin.f32 16.0, %v1282
    %v1284 = vmul.f32 %v1283, 2.1237322e-06
    %v1285 = vadd.f32 %v1284, 0.00028619796
    %v1286 = vmul.f32 %v1283, %v1285
    %v1287 = vadd.f32 %v1286, 0.0036580483
    %v1288 = vmul.f32 %v1283, %v1287
    %v1289 = vadd.f32 %v1288, 0.05243302
    %v1290 = vmul.f32 %v1283, %v1289
    %v1291 = vadd.f32 %v1290, 0.18741608
    %v1292 = vmul.f32 %v1283, %v1291
    %v1293 = vadd.f32 %v1292, 1.1283791
    %v1294 = vmul.f32 %v1183, %v1293
    %v1295 = vmul.f32 %v1283, 3.8918573e-05
    %v1296 = vadd.f32 %v1295, 0.001143296
    %v1297 = vmul.f32 %v1283, %v1296
    %v1298 = vadd.f32 %v1297, 0.014752088
    %v1299 = vmul.f32 %v1283, %v1298
    %v1300 = vadd.f32 %v1299, 0.112945676
    %v1301 = vmul.f32 %v1283, %v1300
    %v1302 = vadd.f32 %v1301, 0.4994258
    %v1303 = vmul.f32 %v1283, %v1302
    %v1304 = vadd.f32 %v1303, 1.0
    %v1305 = vrcp.pop %v1304
    %v1306 = vmul.f32 %v1304, %v1305
    %v1307 = vsub.f32 1.0, %v1306
    %v1308 = vmul.f32 %v1305, %v1307
    %v1309 = vadd.f32 %v1305, %v1308
    %vm1310 = vweird.f32 %v1304
    %vm1311 = vweird.f32 %v1305
    %vm1312 = vmor %vm1310, %vm1311
    %v1313 = vsel %vm1312, %v1305, %v1309
    %v1314 = vand.u32 2147483647, %v1304
    %vm1315 = vcmp.eq.f32.partialorder %v1314, 8.507059e+37
    %v1316 = vand.u32 %v1304, 2147483648
    %v1317 = vor.u32 1.1754944e-38, %v1316
    %v1318 = vsel %vm1315, %v1317, %v1313
    %v1319 = vmul.f32 %v1294, %v1318
    %v1320 = vmin.f32 %v1319, 1.0
    %v1321 = vmax.f32 %v1320, -1.0
    %v1322 = vmul.f32 %v1184, %v1184
    %v1323 = vmin.f32 16.0, %v1322
    %v1324 = vmul.f32 %v1323, 2.1237322e-06
    %v1325 = vadd.f32 %v1324, 0.00028619796
    %v1326 = vmul.f32 %v1323, %v1325
    %v1327 = vadd.f32 %v1326, 0.0036580483
    %v1328 = vmul.f32 %v1323, %v1327
    %v1329 = vadd.f32 %v1328, 0.05243302
    %v1330 = vmul.f32 %v1323, %v1329
    %v1331 = vadd.f32 %v1330, 0.18741608
    %v1332 = vmul.f32 %v1323, %v1331
    %v1333 = vadd.f32 %v1332, 1.1283791
    %v1334 = vmul.f32 %v1184, %v1333
    %v1335 = vmul.f32 %v1323, 3.8918573e-05
    %v1336 = vadd.f32 %v1335, 0.001143296
    %v1337 = vmul.f32 %v1323, %v1336
    %v1338 = vadd.f32 %v1337, 0.014752088
    %v1339 = vmul.f32 %v1323, %v1338
    %v1340 = vadd.f32 %v1339, 0.112945676
    %v1341 = vmul.f32 %v1323, %v1340
    %v1342 = vadd.f32 %v1341, 0.4994258
    %v1343 = vmul.f32 %v1323, %v1342
    %v1344 = vadd.f32 %v1343, 1.0
    %v1345 = vrcp.pop %v1344
    %v1346 = vmul.f32 %v1344, %v1345
    %v1347 = vsub.f32 1.0, %v1346
    %v1348 = vmul.f32 %v1345, %v1347
    %v1349 = vadd.f32 %v1345, %v1348
    %vm1350 = vweird.f32 %v1344
    %vm1351 = vweird.f32 %v1345
    %vm1352 = vmor %vm1350, %vm1351
    %v1353 = vsel %vm1352, %v1345, %v1349
    %v1354 = vand.u32 2147483647, %v1344
    %vm1355 = vcmp.eq.f32.partialorder %v1354, 8.507059e+37
    %v1356 = vand.u32 %v1344, 2147483648
    %v1357 = vor.u32 1.1754944e-38, %v1356
    %v1358 = vsel %vm1355, %v1357, %v1353
    %v1359 = vmul.f32 %v1334, %v1358
    %v1360 = vmin.f32 %v1359, 1.0
    %v1361 = vmax.f32 %v1360, -1.0
    %v1362 = vmul.f32 %v1185, %v1185
    %v1363 = vmin.f32 16.0, %v1362
    %v1364 = vmul.f32 %v1363, 2.1237322e-06
    %v1365 = vadd.f32 %v1364, 0.00028619796
    %v1366 = vmul.f32 %v1363, %v1365
    %v1367 = vadd.f32 %v1366, 0.0036580483
    %v1368 = vmul.f32 %v1363, %v1367
    %v1369 = vadd.f32 %v1368, 0.05243302
    %v1370 = vmul.f32 %v1363, %v1369
    %v1371 = vadd.f32 %v1370, 0.18741608
    %v1372 = vmul.f32 %v1363, %v1371
    %v1373 = vadd.f32 %v1372, 1.1283791
    %v1374 = vmul.f32 %v1185, %v1373
    %v1375 = vmul.f32 %v1363, 3.8918573e-05
    %v1376 = vadd.f32 %v1375, 0.001143296
    %v1377 = vmul.f32 %v1363, %v1376
    %v1378 = vadd.f32 %v1377, 0.014752088
    %v1379 = vmul.f32 %v1363, %v1378
    %v1380 = vadd.f32 %v1379, 0.112945676
    %v1381 = vmul.f32 %v1363, %v1380
    %v1382 = vadd.f32 %v1381, 0.4994258
    %v1383 = vmul.f32 %v1363, %v1382
    %v1384 = vadd.f32 %v1383, 1.0
    %v1385 = vrcp.pop %v1384
    %v1386 = vmul.f32 %v1384, %v1385
    %v1387 = vsub.f32 1.0, %v1386
    %v1388 = vmul.f32 %v1385, %v1387
    %v1389 = vadd.f32 %v1385, %v1388
    %vm1390 = vweird.f32 %v1384
    %vm1391 = vweird.f32 %v1385
    %vm1392 = vmor %vm1390, %vm1391
    %v1393 = vsel %vm1392, %v1385, %v1389
    %v1394 = vand.u32 2147483647, %v1384
    %vm1395 = vcmp.eq.f32.partialorder %v1394, 8.507059e+37
    %v1396 = vand.u32 %v1384, 2147483648
    %v1397 = vor.u32 1.1754944e-38, %v1396
    %v1398 = vsel %vm1395, %v1397, %v1393
    %v1399 = vmul.f32 %v1374, %v1398
    %v1400 = vmin.f32 %v1399, 1.0
    %v1401 = vmax.f32 %v1400, -1.0
    %v1402 = vmul.f32 %v1186, %v1186
    %v1403 = vmin.f32 16.0, %v1402
    %v1404 = vmul.f32 %v1403, 2.1237322e-06
    %v1405 = vadd.f32 %v1404, 0.00028619796
    %v1406 = vmul.f32 %v1403, %v1405
    %v1407 = vadd.f32 %v1406, 0.0036580483
    %v1408 = vmul.f32 %v1403, %v1407
    %v1409 = vadd.f32 %v1408, 0.05243302
    %v1410 = vmul.f32 %v1403, %v1409
    %v1411 = vadd.f32 %v1410, 0.18741608
    %v1412 = vmul.f32 %v1403, %v1411
    %v1413 = vadd.f32 %v1412, 1.1283791
    %v1414 = vmul.f32 %v1186, %v1413
    %v1415 = vmul.f32 %v1403, 3.8918573e-05
    %v1416 = vadd.f32 %v1415, 0.001143296
    %v1417 = vmul.f32 %v1403, %v1416
    %v1418 = vadd.f32 %v1417, 0.014752088
    %v1419 = vmul.f32 %v1403, %v1418
    %v1420 = vadd.f32 %v1419, 0.112945676
    %v1421 = vmul.f32 %v1403, %v1420
    %v1422 = vadd.f32 %v1421, 0.4994258
    %v1423 = vmul.f32 %v1403, %v1422
    %v1424 = vadd.f32 %v1423, 1.0
    %v1425 = vrcp.pop %v1424
    %v1426 = vmul.f32 %v1424, %v1425
    %v1427 = vsub.f32 1.0, %v1426
    %v1428 = vmul.f32 %v1425, %v1427
    %v1429 = vadd.f32 %v1425, %v1428
    %vm1430 = vweird.f32 %v1424
    %vm1431 = vweird.f32 %v1425
    %vm1432 = vmor %vm1430, %vm1431
    %v1433 = vsel %vm1432, %v1425, %v1429
    %v1434 = vand.u32 2147483647, %v1424
    %vm1435 = vcmp.eq.f32.partialorder %v1434, 8.507059e+37
    %v1436 = vand.u32 %v1424, 2147483648
    %v1437 = vor.u32 1.1754944e-38, %v1436
    %v1438 = vsel %vm1435, %v1437, %v1433
    %v1439 = vmul.f32 %v1414, %v1438
    %v1440 = vmin.f32 %v1439, 1.0
    %v1441 = vmax.f32 %v1440, -1.0
    %v1442 = vmul.f32 %v1187, %v1187
    %v1443 = vmin.f32 16.0, %v1442
    %v1444 = vmul.f32 %v1443, 2.1237322e-06
    %v1445 = vadd.f32 %v1444, 0.00028619796
    %v1446 = vmul.f32 %v1443, %v1445
    %v1447 = vadd.f32 %v1446, 0.0036580483
    %v1448 = vmul.f32 %v1443, %v1447
    %v1449 = vadd.f32 %v1448, 0.05243302
    %v1450 = vmul.f32 %v1443, %v1449
    %v1451 = vadd.f32 %v1450, 0.18741608
    %v1452 = vmul.f32 %v1443, %v1451
    %v1453 = vadd.f32 %v1452, 1.1283791
    %v1454 = vmul.f32 %v1187, %v1453
    %v1455 = vmul.f32 %v1443, 3.8918573e-05
    %v1456 = vadd.f32 %v1455, 0.001143296
    %v1457 = vmul.f32 %v1443, %v1456
    %v1458 = vadd.f32 %v1457, 0.014752088
    %v1459 = vmul.f32 %v1443, %v1458
    %v1460 = vadd.f32 %v1459, 0.112945676
    %v1461 = vmul.f32 %v1443, %v1460
    %v1462 = vadd.f32 %v1461, 0.4994258
    %v1463 = vmul.f32 %v1443, %v1462
    %v1464 = vadd.f32 %v1463, 1.0
    %v1465 = vrcp.pop %v1464
    %v1466 = vmul.f32 %v1464, %v1465
    %v1467 = vsub.f32 1.0, %v1466
    %v1468 = vmul.f32 %v1465, %v1467
    %v1469 = vadd.f32 %v1465, %v1468
    %vm1470 = vweird.f32 %v1464
    %vm1471 = vweird.f32 %v1465
    %vm1472 = vmor %vm1470, %vm1471
    %v1473 = vsel %vm1472, %v1465, %v1469
    %v1474 = vand.u32 2147483647, %v1464
    %vm1475 = vcmp.eq.f32.partialorder %v1474, 8.507059e+37
    %v1476 = vand.u32 %v1464, 2147483648
    %v1477 = vor.u32 1.1754944e-38, %v1476
    %v1478 = vsel %vm1475, %v1477, %v1473
    %v1479 = vmul.f32 %v1454, %v1478
    %v1480 = vmin.f32 %v1479, 1.0
    %v1481 = vmax.f32 %v1480, -1.0
    %v1482 = vmul.f32 %v1188, %v1188
    %v1483 = vmin.f32 16.0, %v1482
    %v1484 = vmul.f32 %v1483, 2.1237322e-06
    %v1485 = vadd.f32 %v1484, 0.00028619796
    %v1486 = vmul.f32 %v1483, %v1485
    %v1487 = vadd.f32 %v1486, 0.0036580483
    %v1488 = vmul.f32 %v1483, %v1487
    %v1489 = vadd.f32 %v1488, 0.05243302
    %v1490 = vmul.f32 %v1483, %v1489
    %v1491 = vadd.f32 %v1490, 0.18741608
    %v1492 = vmul.f32 %v1483, %v1491
    %v1493 = vadd.f32 %v1492, 1.1283791
    %v1494 = vmul.f32 %v1188, %v1493
    %v1495 = vmul.f32 %v1483, 3.8918573e-05
    %v1496 = vadd.f32 %v1495, 0.001143296
    %v1497 = vmul.f32 %v1483, %v1496
    %v1498 = vadd.f32 %v1497, 0.014752088
    %v1499 = vmul.f32 %v1483, %v1498
    %v1500 = vadd.f32 %v1499, 0.112945676
    %v1501 = vmul.f32 %v1483, %v1500
    %v1502 = vadd.f32 %v1501, 0.4994258
    %v1503 = vmul.f32 %v1483, %v1502
    %v1504 = vadd.f32 %v1503, 1.0
    %v1505 = vrcp.pop %v1504
    %v1506 = vmul.f32 %v1504, %v1505
    %v1507 = vsub.f32 1.0, %v1506
    %v1508 = vmul.f32 %v1505, %v1507
    %v1509 = vadd.f32 %v1505, %v1508
    %vm1510 = vweird.f32 %v1504
    %vm1511 = vweird.f32 %v1505
    %vm1512 = vmor %vm1510, %vm1511
    %v1513 = vsel %vm1512, %v1505, %v1509
    %v1514 = vand.u32 2147483647, %v1504
    %vm1515 = vcmp.eq.f32.partialorder %v1514, 8.507059e+37
    %v1516 = vand.u32 %v1504, 2147483648
    %v1517 = vor.u32 1.1754944e-38, %v1516
    %v1518 = vsel %vm1515, %v1517, %v1513
    %v1519 = vmul.f32 %v1494, %v1518
    %v1520 = vmin.f32 %v1519, 1.0
    %v1521 = vmax.f32 %v1520, -1.0
    %v1522 = vmul.f32 %v1189, %v1189
    %v1523 = vmin.f32 16.0, %v1522
    %v1524 = vmul.f32 %v1523, 2.1237322e-06
    %v1525 = vadd.f32 %v1524, 0.00028619796
    %v1526 = vmul.f32 %v1523, %v1525
    %v1527 = vadd.f32 %v1526, 0.0036580483
    %v1528 = vmul.f32 %v1523, %v1527
    %v1529 = vadd.f32 %v1528, 0.05243302
    %v1530 = vmul.f32 %v1523, %v1529
    %v1531 = vadd.f32 %v1530, 0.18741608
    %v1532 = vmul.f32 %v1523, %v1531
    %v1533 = vadd.f32 %v1532, 1.1283791
    %v1534 = vmul.f32 %v1189, %v1533
    %v1535 = vmul.f32 %v1523, 3.8918573e-05
    %v1536 = vadd.f32 %v1535, 0.001143296
    %v1537 = vmul.f32 %v1523, %v1536
    %v1538 = vadd.f32 %v1537, 0.014752088
    %v1539 = vmul.f32 %v1523, %v1538
    %v1540 = vadd.f32 %v1539, 0.112945676
    %v1541 = vmul.f32 %v1523, %v1540
    %v1542 = vadd.f32 %v1541, 0.4994258
    %v1543 = vmul.f32 %v1523, %v1542
    %v1544 = vadd.f32 %v1543, 1.0
    %v1545 = vrcp.pop %v1544
    %v1546 = vmul.f32 %v1544, %v1545
    %v1547 = vsub.f32 1.0, %v1546
    %v1548 = vmul.f32 %v1545, %v1547
    %v1549 = vadd.f32 %v1545, %v1548
    %vm1550 = vweird.f32 %v1544
    %vm1551 = vweird.f32 %v1545
    %vm1552 = vmor %vm1550, %vm1551
    %v1553 = vsel %vm1552, %v1545, %v1549
    %v1554 = vand.u32 2147483647, %v1544
    %vm1555 = vcmp.eq.f32.partialorder %v1554, 8.507059e+37
    %v1556 = vand.u32 %v1544, 2147483648
    %v1557 = vor.u32 1.1754944e-38, %v1556
    %v1558 = vsel %vm1555, %v1557, %v1553
    %v1559 = vmul.f32 %v1534, %v1558
    %v1560 = vmin.f32 %v1559, 1.0
    %v1561 = vmax.f32 %v1560, -1.0
    %v1562 = vmul.f32 %v1190, %v1190
    %v1563 = vmin.f32 16.0, %v1562
    %v1564 = vmul.f32 %v1563, 2.1237322e-06
    %v1565 = vadd.f32 %v1564, 0.00028619796
    %v1566 = vmul.f32 %v1563, %v1565
    %v1567 = vadd.f32 %v1566, 0.0036580483
    %v1568 = vmul.f32 %v1563, %v1567
    %v1569 = vadd.f32 %v1568, 0.05243302
    %v1570 = vmul.f32 %v1563, %v1569
    %v1571 = vadd.f32 %v1570, 0.18741608
    %v1572 = vmul.f32 %v1563, %v1571
    %v1573 = vadd.f32 %v1572, 1.1283791
    %v1574 = vmul.f32 %v1190, %v1573
    %v1575 = vmul.f32 %v1563, 3.8918573e-05
    %v1576 = vadd.f32 %v1575, 0.001143296
    %v1577 = vmul.f32 %v1563, %v1576
    %v1578 = vadd.f32 %v1577, 0.014752088
    %v1579 = vmul.f32 %v1563, %v1578
    %v1580 = vadd.f32 %v1579, 0.112945676
    %v1581 = vmul.f32 %v1563, %v1580
    %v1582 = vadd.f32 %v1581, 0.4994258
    %v1583 = vmul.f32 %v1563, %v1582
    %v1584 = vadd.f32 %v1583, 1.0
    %v1585 = vrcp.pop %v1584
    %v1586 = vmul.f32 %v1584, %v1585
    %v1587 = vsub.f32 1.0, %v1586
    %v1588 = vmul.f32 %v1585, %v1587
    %v1589 = vadd.f32 %v1585, %v1588
    %vm1590 = vweird.f32 %v1584
    %vm1591 = vweird.f32 %v1585
    %vm1592 = vmor %vm1590, %vm1591
    %v1593 = vsel %vm1592, %v1585, %v1589
    %v1594 = vand.u32 2147483647, %v1584
    %vm1595 = vcmp.eq.f32.partialorder %v1594, 8.507059e+37
    %v1596 = vand.u32 %v1584, 2147483648
    %v1597 = vor.u32 1.1754944e-38, %v1596
    %v1598 = vsel %vm1595, %v1597, %v1593
    %v1599 = vmul.f32 %v1574, %v1598
    %v1600 = vmin.f32 %v1599, 1.0
    %v1601 = vmax.f32 %v1600, -1.0
    %v1602 = vmul.f32 %v1191, %v1191
    %v1603 = vmin.f32 16.0, %v1602
    %v1604 = vmul.f32 %v1603, 2.1237322e-06
    %v1605 = vadd.f32 %v1604, 0.00028619796
    %v1606 = vmul.f32 %v1603, %v1605
    %v1607 = vadd.f32 %v1606, 0.0036580483
    %v1608 = vmul.f32 %v1603, %v1607
    %v1609 = vadd.f32 %v1608, 0.05243302
    %v1610 = vmul.f32 %v1603, %v1609
    %v1611 = vadd.f32 %v1610, 0.18741608
    %v1612 = vmul.f32 %v1603, %v1611
    %v1613 = vadd.f32 %v1612, 1.1283791
    %v1614 = vmul.f32 %v1191, %v1613
    %v1615 = vmul.f32 %v1603, 3.8918573e-05
    %v1616 = vadd.f32 %v1615, 0.001143296
    %v1617 = vmul.f32 %v1603, %v1616
    %v1618 = vadd.f32 %v1617, 0.014752088
    %v1619 = vmul.f32 %v1603, %v1618
    %v1620 = vadd.f32 %v1619, 0.112945676
    %v1621 = vmul.f32 %v1603, %v1620
    %v1622 = vadd.f32 %v1621, 0.4994258
    %v1623 = vmul.f32 %v1603, %v1622
    %v1624 = vadd.f32 %v1623, 1.0
    %v1625 = vrcp.pop %v1624
    %v1626 = vmul.f32 %v1624, %v1625
    %v1627 = vsub.f32 1.0, %v1626
    %v1628 = vmul.f32 %v1625, %v1627
    %v1629 = vadd.f32 %v1625, %v1628
    %vm1630 = vweird.f32 %v1624
    %vm1631 = vweird.f32 %v1625
    %vm1632 = vmor %vm1630, %vm1631
    %v1633 = vsel %vm1632, %v1625, %v1629
    %v1634 = vand.u32 2147483647, %v1624
    %vm1635 = vcmp.eq.f32.partialorder %v1634, 8.507059e+37
    %v1636 = vand.u32 %v1624, 2147483648
    %v1637 = vor.u32 1.1754944e-38, %v1636
    %v1638 = vsel %vm1635, %v1637, %v1633
    %v1639 = vmul.f32 %v1614, %v1638
    %v1640 = vmin.f32 %v1639, 1.0
    %v1641 = vmax.f32 %v1640, -1.0
    %v1642 = vmul.f32 %v1192, %v1192
    %v1643 = vmin.f32 16.0, %v1642
    %v1644 = vmul.f32 %v1643, 2.1237322e-06
    %v1645 = vadd.f32 %v1644, 0.00028619796
    %v1646 = vmul.f32 %v1643, %v1645
    %v1647 = vadd.f32 %v1646, 0.0036580483
    %v1648 = vmul.f32 %v1643, %v1647
    %v1649 = vadd.f32 %v1648, 0.05243302
    %v1650 = vmul.f32 %v1643, %v1649
    %v1651 = vadd.f32 %v1650, 0.18741608
    %v1652 = vmul.f32 %v1643, %v1651
    %v1653 = vadd.f32 %v1652, 1.1283791
    %v1654 = vmul.f32 %v1192, %v1653
    %v1655 = vmul.f32 %v1643, 3.8918573e-05
    %v1656 = vadd.f32 %v1655, 0.001143296
    %v1657 = vmul.f32 %v1643, %v1656
    %v1658 = vadd.f32 %v1657, 0.014752088
    %v1659 = vmul.f32 %v1643, %v1658
    %v1660 = vadd.f32 %v1659, 0.112945676
    %v1661 = vmul.f32 %v1643, %v1660
    %v1662 = vadd.f32 %v1661, 0.4994258
    %v1663 = vmul.f32 %v1643, %v1662
    %v1664 = vadd.f32 %v1663, 1.0
    %v1665 = vrcp.pop %v1664
    %v1666 = vmul.f32 %v1664, %v1665
    %v1667 = vsub.f32 1.0, %v1666
    %v1668 = vmul.f32 %v1665, %v1667
    %v1669 = vadd.f32 %v1665, %v1668
    %vm1670 = vweird.f32 %v1664
    %vm1671 = vweird.f32 %v1665
    %vm1672 = vmor %vm1670, %vm1671
    %v1673 = vsel %vm1672, %v1665, %v1669
    %v1674 = vand.u32 2147483647, %v1664
    %vm1675 = vcmp.eq.f32.partialorder %v1674, 8.507059e+37
    %v1676 = vand.u32 %v1664, 2147483648
    %v1677 = vor.u32 1.1754944e-38, %v1676
    %v1678 = vsel %vm1675, %v1677, %v1673
    %v1679 = vmul.f32 %v1654, %v1678
    %v1680 = vmin.f32 %v1679, 1.0
    %v1681 = vmax.f32 %v1680, -1.0
    %v1682 = vmul.f32 %v1193, %v1193
    %v1683 = vmin.f32 16.0, %v1682
    %v1684 = vmul.f32 %v1683, 2.1237322e-06
    %v1685 = vadd.f32 %v1684, 0.00028619796
    %v1686 = vmul.f32 %v1683, %v1685
    %v1687 = vadd.f32 %v1686, 0.0036580483
    %v1688 = vmul.f32 %v1683, %v1687
    %v1689 = vadd.f32 %v1688, 0.05243302
    %v1690 = vmul.f32 %v1683, %v1689
    %v1691 = vadd.f32 %v1690, 0.18741608
    %v1692 = vmul.f32 %v1683, %v1691
    %v1693 = vadd.f32 %v1692, 1.1283791
    %v1694 = vmul.f32 %v1193, %v1693
    %v1695 = vmul.f32 %v1683, 3.8918573e-05
    %v1696 = vadd.f32 %v1695, 0.001143296
    %v1697 = vmul.f32 %v1683, %v1696
    %v1698 = vadd.f32 %v1697, 0.014752088
    %v1699 = vmul.f32 %v1683, %v1698
    %v1700 = vadd.f32 %v1699, 0.112945676
    %v1701 = vmul.f32 %v1683, %v1700
    %v1702 = vadd.f32 %v1701, 0.4994258
    %v1703 = vmul.f32 %v1683, %v1702
    %v1704 = vadd.f32 %v1703, 1.0
    %v1705 = vrcp.pop %v1704
    %v1706 = vmul.f32 %v1704, %v1705
    %v1707 = vsub.f32 1.0, %v1706
    %v1708 = vmul.f32 %v1705, %v1707
    %v1709 = vadd.f32 %v1705, %v1708
    %vm1710 = vweird.f32 %v1704
    %vm1711 = vweird.f32 %v1705
    %vm1712 = vmor %vm1710, %vm1711
    %v1713 = vsel %vm1712, %v1705, %v1709
    %v1714 = vand.u32 2147483647, %v1704
    %vm1715 = vcmp.eq.f32.partialorder %v1714, 8.507059e+37
    %v1716 = vand.u32 %v1704, 2147483648
    %v1717 = vor.u32 1.1754944e-38, %v1716
    %v1718 = vsel %vm1715, %v1717, %v1713
    %v1719 = vmul.f32 %v1694, %v1718
    %v1720 = vmin.f32 %v1719, 1.0
    %v1721 = vmax.f32 %v1720, -1.0
    %v1722 = vmul.f32 %v1194, %v1194
    %v1723 = vmin.f32 16.0, %v1722
    %v1724 = vmul.f32 %v1723, 2.1237322e-06
    %v1725 = vadd.f32 %v1724, 0.00028619796
    %v1726 = vmul.f32 %v1723, %v1725
    %v1727 = vadd.f32 %v1726, 0.0036580483
    %v1728 = vmul.f32 %v1723, %v1727
    %v1729 = vadd.f32 %v1728, 0.05243302
    %v1730 = vmul.f32 %v1723, %v1729
    %v1731 = vadd.f32 %v1730, 0.18741608
    %v1732 = vmul.f32 %v1723, %v1731
    %v1733 = vadd.f32 %v1732, 1.1283791
    %v1734 = vmul.f32 %v1194, %v1733
    %v1735 = vmul.f32 %v1723, 3.8918573e-05
    %v1736 = vadd.f32 %v1735, 0.001143296
    %v1737 = vmul.f32 %v1723, %v1736
    %v1738 = vadd.f32 %v1737, 0.014752088
    %v1739 = vmul.f32 %v1723, %v1738
    %v1740 = vadd.f32 %v1739, 0.112945676
    %v1741 = vmul.f32 %v1723, %v1740
    %v1742 = vadd.f32 %v1741, 0.4994258
    %v1743 = vmul.f32 %v1723, %v1742
    %v1744 = vadd.f32 %v1743, 1.0
    %v1745 = vrcp.pop %v1744
    %v1746 = vmul.f32 %v1744, %v1745
    %v1747 = vsub.f32 1.0, %v1746
    %v1748 = vmul.f32 %v1745, %v1747
    %v1749 = vadd.f32 %v1745, %v1748
    %vm1750 = vweird.f32 %v1744
    %vm1751 = vweird.f32 %v1745
    %vm1752 = vmor %vm1750, %vm1751
    %v1753 = vsel %vm1752, %v1745, %v1749
    %v1754 = vand.u32 2147483647, %v1744
    %vm1755 = vcmp.eq.f32.partialorder %v1754, 8.507059e+37
    %v1756 = vand.u32 %v1744, 2147483648
    %v1757 = vor.u32 1.1754944e-38, %v1756
    %v1758 = vsel %vm1755, %v1757, %v1753
    %v1759 = vmul.f32 %v1734, %v1758
    %v1760 = vmin.f32 %v1759, 1.0
    %v1761 = vmax.f32 %v1760, -1.0
    %v1762 = vmul.f32 %v1195, %v1195
    %v1763 = vmin.f32 16.0, %v1762
    %v1764 = vmul.f32 %v1763, 2.1237322e-06
    %v1765 = vadd.f32 %v1764, 0.00028619796
    %v1766 = vmul.f32 %v1763, %v1765
    %v1767 = vadd.f32 %v1766, 0.0036580483
    %v1768 = vmul.f32 %v1763, %v1767
    %v1769 = vadd.f32 %v1768, 0.05243302
    %v1770 = vmul.f32 %v1763, %v1769
    %v1771 = vadd.f32 %v1770, 0.18741608
    %v1772 = vmul.f32 %v1763, %v1771
    %v1773 = vadd.f32 %v1772, 1.1283791
    %v1774 = vmul.f32 %v1195, %v1773
    %v1775 = vmul.f32 %v1763, 3.8918573e-05
    %v1776 = vadd.f32 %v1775, 0.001143296
    %v1777 = vmul.f32 %v1763, %v1776
    %v1778 = vadd.f32 %v1777, 0.014752088
    %v1779 = vmul.f32 %v1763, %v1778
    %v1780 = vadd.f32 %v1779, 0.112945676
    %v1781 = vmul.f32 %v1763, %v1780
    %v1782 = vadd.f32 %v1781, 0.4994258
    %v1783 = vmul.f32 %v1763, %v1782
    %v1784 = vadd.f32 %v1783, 1.0
    %v1785 = vrcp.pop %v1784
    %v1786 = vmul.f32 %v1784, %v1785
    %v1787 = vsub.f32 1.0, %v1786
    %v1788 = vmul.f32 %v1785, %v1787
    %v1789 = vadd.f32 %v1785, %v1788
    %vm1790 = vweird.f32 %v1784
    %vm1791 = vweird.f32 %v1785
    %vm1792 = vmor %vm1790, %vm1791
    %v1793 = vsel %vm1792, %v1785, %v1789
    %v1794 = vand.u32 2147483647, %v1784
    %vm1795 = vcmp.eq.f32.partialorder %v1794, 8.507059e+37
    %v1796 = vand.u32 %v1784, 2147483648
    %v1797 = vor.u32 1.1754944e-38, %v1796
    %v1798 = vsel %vm1795, %v1797, %v1793
    %v1799 = vmul.f32 %v1774, %v1798
    %v1800 = vmin.f32 %v1799, 1.0
    %v1801 = vmax.f32 %v1800, -1.0
    %v1802 = vmul.f32 %v1196, %v1196
    %v1803 = vmin.f32 16.0, %v1802
    %v1804 = vmul.f32 %v1803, 2.1237322e-06
    %v1805 = vadd.f32 %v1804, 0.00028619796
    %v1806 = vmul.f32 %v1803, %v1805
    %v1807 = vadd.f32 %v1806, 0.0036580483
    %v1808 = vmul.f32 %v1803, %v1807
    %v1809 = vadd.f32 %v1808, 0.05243302
    %v1810 = vmul.f32 %v1803, %v1809
    %v1811 = vadd.f32 %v1810, 0.18741608
    %v1812 = vmul.f32 %v1803, %v1811
    %v1813 = vadd.f32 %v1812, 1.1283791
    %v1814 = vmul.f32 %v1196, %v1813
    %v1815 = vmul.f32 %v1803, 3.8918573e-05
    %v1816 = vadd.f32 %v1815, 0.001143296
    %v1817 = vmul.f32 %v1803, %v1816
    %v1818 = vadd.f32 %v1817, 0.014752088
    %v1819 = vmul.f32 %v1803, %v1818
    %v1820 = vadd.f32 %v1819, 0.112945676
    %v1821 = vmul.f32 %v1803, %v1820
    %v1822 = vadd.f32 %v1821, 0.4994258
    %v1823 = vmul.f32 %v1803, %v1822
    %v1824 = vadd.f32 %v1823, 1.0
    %v1825 = vrcp.pop %v1824
    %v1826 = vmul.f32 %v1824, %v1825
    %v1827 = vsub.f32 1.0, %v1826
    %v1828 = vmul.f32 %v1825, %v1827
    %v1829 = vadd.f32 %v1825, %v1828
    %vm1830 = vweird.f32 %v1824
    %vm1831 = vweird.f32 %v1825
    %vm1832 = vmor %vm1830, %vm1831
    %v1833 = vsel %vm1832, %v1825, %v1829
    %v1834 = vand.u32 2147483647, %v1824
    %vm1835 = vcmp.eq.f32.partialorder %v1834, 8.507059e+37
    %v1836 = vand.u32 %v1824, 2147483648
    %v1837 = vor.u32 1.1754944e-38, %v1836
    %v1838 = vsel %vm1835, %v1837, %v1833
    %v1839 = vmul.f32 %v1814, %v1838
    %v1840 = vmin.f32 %v1839, 1.0
    %v1841 = vmax.f32 %v1840, -1.0
    %v1842 = vmul.f32 %v1197, %v1197
    %v1843 = vmin.f32 16.0, %v1842
    %v1844 = vmul.f32 %v1843, 2.1237322e-06
    %v1845 = vadd.f32 %v1844, 0.00028619796
    %v1846 = vmul.f32 %v1843, %v1845
    %v1847 = vadd.f32 %v1846, 0.0036580483
    %v1848 = vmul.f32 %v1843, %v1847
    %v1849 = vadd.f32 %v1848, 0.05243302
    %v1850 = vmul.f32 %v1843, %v1849
    %v1851 = vadd.f32 %v1850, 0.18741608
    %v1852 = vmul.f32 %v1843, %v1851
    %v1853 = vadd.f32 %v1852, 1.1283791
    %v1854 = vmul.f32 %v1197, %v1853
    %v1855 = vmul.f32 %v1843, 3.8918573e-05
    %v1856 = vadd.f32 %v1855, 0.001143296
    %v1857 = vmul.f32 %v1843, %v1856
    %v1858 = vadd.f32 %v1857, 0.014752088
    %v1859 = vmul.f32 %v1843, %v1858
    %v1860 = vadd.f32 %v1859, 0.112945676
    %v1861 = vmul.f32 %v1843, %v1860
    %v1862 = vadd.f32 %v1861, 0.4994258
    %v1863 = vmul.f32 %v1843, %v1862
    %v1864 = vadd.f32 %v1863, 1.0
    %v1865 = vrcp.pop %v1864
    %v1866 = vmul.f32 %v1864, %v1865
    %v1867 = vsub.f32 1.0, %v1866
    %v1868 = vmul.f32 %v1865, %v1867
    %v1869 = vadd.f32 %v1865, %v1868
    %vm1870 = vweird.f32 %v1864
    %vm1871 = vweird.f32 %v1865
    %vm1872 = vmor %vm1870, %vm1871
    %v1873 = vsel %vm1872, %v1865, %v1869
    %v1874 = vand.u32 2147483647, %v1864
    %vm1875 = vcmp.eq.f32.partialorder %v1874, 8.507059e+37
    %v1876 = vand.u32 %v1864, 2147483648
    %v1877 = vor.u32 1.1754944e-38, %v1876
    %v1878 = vsel %vm1875, %v1877, %v1873
    %v1879 = vmul.f32 %v1854, %v1878
    %v1880 = vmin.f32 %v1879, 1.0
    %v1881 = vmax.f32 %v1880, -1.0
    %v1882 = vmul.f32 %v1198, %v1198
    %v1883 = vmin.f32 16.0, %v1882
    %v1884 = vmul.f32 %v1883, 2.1237322e-06
    %v1885 = vadd.f32 %v1884, 0.00028619796
    %v1886 = vmul.f32 %v1883, %v1885
    %v1887 = vadd.f32 %v1886, 0.0036580483
    %v1888 = vmul.f32 %v1883, %v1887
    %v1889 = vadd.f32 %v1888, 0.05243302
    %v1890 = vmul.f32 %v1883, %v1889
    %v1891 = vadd.f32 %v1890, 0.18741608
    %v1892 = vmul.f32 %v1883, %v1891
    %v1893 = vadd.f32 %v1892, 1.1283791
    %v1894 = vmul.f32 %v1198, %v1893
    %v1895 = vmul.f32 %v1883, 3.8918573e-05
    %v1896 = vadd.f32 %v1895, 0.001143296
    %v1897 = vmul.f32 %v1883, %v1896
    %v1898 = vadd.f32 %v1897, 0.014752088
    %v1899 = vmul.f32 %v1883, %v1898
    %v1900 = vadd.f32 %v1899, 0.112945676
    %v1901 = vmul.f32 %v1883, %v1900
    %v1902 = vadd.f32 %v1901, 0.4994258
    %v1903 = vmul.f32 %v1883, %v1902
    %v1904 = vadd.f32 %v1903, 1.0
    %v1905 = vrcp.pop %v1904
    %v1906 = vmul.f32 %v1904, %v1905
    %v1907 = vsub.f32 1.0, %v1906
    %v1908 = vmul.f32 %v1905, %v1907
    %v1909 = vadd.f32 %v1905, %v1908
    %vm1910 = vweird.f32 %v1904
    %vm1911 = vweird.f32 %v1905
    %vm1912 = vmor %vm1910, %vm1911
    %v1913 = vsel %vm1912, %v1905, %v1909
    %v1914 = vand.u32 2147483647, %v1904
    %vm1915 = vcmp.eq.f32.partialorder %v1914, 8.507059e+37
    %v1916 = vand.u32 %v1904, 2147483648
    %v1917 = vor.u32 1.1754944e-38, %v1916
    %v1918 = vsel %vm1915, %v1917, %v1913
    %v1919 = vmul.f32 %v1894, %v1918
    %v1920 = vmin.f32 %v1919, 1.0
    %v1921 = vmax.f32 %v1920, -1.0
    %v1922 = vmul.f32 %v1199, %v1199
    %v1923 = vmin.f32 16.0, %v1922
    %v1924 = vmul.f32 %v1923, 2.1237322e-06
    %v1925 = vadd.f32 %v1924, 0.00028619796
    %v1926 = vmul.f32 %v1923, %v1925
    %v1927 = vadd.f32 %v1926, 0.0036580483
    %v1928 = vmul.f32 %v1923, %v1927
    %v1929 = vadd.f32 %v1928, 0.05243302
    %v1930 = vmul.f32 %v1923, %v1929
    %v1931 = vadd.f32 %v1930, 0.18741608
    %v1932 = vmul.f32 %v1923, %v1931
    %v1933 = vadd.f32 %v1932, 1.1283791
    %v1934 = vmul.f32 %v1199, %v1933
    %v1935 = vmul.f32 %v1923, 3.8918573e-05
    %v1936 = vadd.f32 %v1935, 0.001143296
    %v1937 = vmul.f32 %v1923, %v1936
    %v1938 = vadd.f32 %v1937, 0.014752088
    %v1939 = vmul.f32 %v1923, %v1938
    %v1940 = vadd.f32 %v1939, 0.112945676
    %v1941 = vmul.f32 %v1923, %v1940
    %v1942 = vadd.f32 %v1941, 0.4994258
    %v1943 = vmul.f32 %v1923, %v1942
    %v1944 = vadd.f32 %v1943, 1.0
    %v1945 = vrcp.pop %v1944
    %v1946 = vmul.f32 %v1944, %v1945
    %v1947 = vsub.f32 1.0, %v1946
    %v1948 = vmul.f32 %v1945, %v1947
    %v1949 = vadd.f32 %v1945, %v1948
    %vm1950 = vweird.f32 %v1944
    %vm1951 = vweird.f32 %v1945
    %vm1952 = vmor %vm1950, %vm1951
    %v1953 = vsel %vm1952, %v1945, %v1949
    %v1954 = vand.u32 2147483647, %v1944
    %vm1955 = vcmp.eq.f32.partialorder %v1954, 8.507059e+37
    %v1956 = vand.u32 %v1944, 2147483648
    %v1957 = vor.u32 1.1754944e-38, %v1956
    %v1958 = vsel %vm1955, %v1957, %v1953
    %v1959 = vmul.f32 %v1934, %v1958
    %v1960 = vmin.f32 %v1959, 1.0
    %v1961 = vmax.f32 %v1960, -1.0
    %v1962 = vmul.f32 %v1200, %v1200
    %v1963 = vmin.f32 16.0, %v1962
    %v1964 = vmul.f32 %v1963, 2.1237322e-06
    %v1965 = vadd.f32 %v1964, 0.00028619796
    %v1966 = vmul.f32 %v1963, %v1965
    %v1967 = vadd.f32 %v1966, 0.0036580483
    %v1968 = vmul.f32 %v1963, %v1967
    %v1969 = vadd.f32 %v1968, 0.05243302
    %v1970 = vmul.f32 %v1963, %v1969
    %v1971 = vadd.f32 %v1970, 0.18741608
    %v1972 = vmul.f32 %v1963, %v1971
    %v1973 = vadd.f32 %v1972, 1.1283791
    %v1974 = vmul.f32 %v1200, %v1973
    %v1975 = vmul.f32 %v1963, 3.8918573e-05
    %v1976 = vadd.f32 %v1975, 0.001143296
    %v1977 = vmul.f32 %v1963, %v1976
    %v1978 = vadd.f32 %v1977, 0.014752088
    %v1979 = vmul.f32 %v1963, %v1978
    %v1980 = vadd.f32 %v1979, 0.112945676
    %v1981 = vmul.f32 %v1963, %v1980
    %v1982 = vadd.f32 %v1981, 0.4994258
    %v1983 = vmul.f32 %v1963, %v1982
    %v1984 = vadd.f32 %v1983, 1.0
    %v1985 = vrcp.pop %v1984
    %v1986 = vmul.f32 %v1984, %v1985
    %v1987 = vsub.f32 1.0, %v1986
    %v1988 = vmul.f32 %v1985, %v1987
    %v1989 = vadd.f32 %v1985, %v1988
    %vm1990 = vweird.f32 %v1984
    %vm1991 = vweird.f32 %v1985
    %vm1992 = vmor %vm1990, %vm1991
    %v1993 = vsel %vm1992, %v1985, %v1989
    %v1994 = vand.u32 2147483647, %v1984
    %vm1995 = vcmp.eq.f32.partialorder %v1994, 8.507059e+37
    %v1996 = vand.u32 %v1984, 2147483648
    %v1997 = vor.u32 1.1754944e-38, %v1996
    %v1998 = vsel %vm1995, %v1997, %v1993
    %v1999 = vmul.f32 %v1974, %v1998
    %v2000 = vmin.f32 %v1999, 1.0
    %v2001 = vmax.f32 %v2000, -1.0
    %v2002 = vmul.f32 %v1201, %v1201
    %v2003 = vmin.f32 16.0, %v2002
    %v2004 = vmul.f32 %v2003, 2.1237322e-06
    %v2005 = vadd.f32 %v2004, 0.00028619796
    %v2006 = vmul.f32 %v2003, %v2005
    %v2007 = vadd.f32 %v2006, 0.0036580483
    %v2008 = vmul.f32 %v2003, %v2007
    %v2009 = vadd.f32 %v2008, 0.05243302
    %v2010 = vmul.f32 %v2003, %v2009
    %v2011 = vadd.f32 %v2010, 0.18741608
    %v2012 = vmul.f32 %v2003, %v2011
    %v2013 = vadd.f32 %v2012, 1.1283791
    %v2014 = vmul.f32 %v1201, %v2013
    %v2015 = vmul.f32 %v2003, 3.8918573e-05
    %v2016 = vadd.f32 %v2015, 0.001143296
    %v2017 = vmul.f32 %v2003, %v2016
    %v2018 = vadd.f32 %v2017, 0.014752088
    %v2019 = vmul.f32 %v2003, %v2018
    %v2020 = vadd.f32 %v2019, 0.112945676
    %v2021 = vmul.f32 %v2003, %v2020
    %v2022 = vadd.f32 %v2021, 0.4994258
    %v2023 = vmul.f32 %v2003, %v2022
    %v2024 = vadd.f32 %v2023, 1.0
    %v2025 = vrcp.pop %v2024
    %v2026 = vmul.f32 %v2024, %v2025
    %v2027 = vsub.f32 1.0, %v2026
    %v2028 = vmul.f32 %v2025, %v2027
    %v2029 = vadd.f32 %v2025, %v2028
    %vm2030 = vweird.f32 %v2024
    %vm2031 = vweird.f32 %v2025
    %vm2032 = vmor %vm2030, %vm2031
    %v2033 = vsel %vm2032, %v2025, %v2029
    %v2034 = vand.u32 2147483647, %v2024
    %vm2035 = vcmp.eq.f32.partialorder %v2034, 8.507059e+37
    %v2036 = vand.u32 %v2024, 2147483648
    %v2037 = vor.u32 1.1754944e-38, %v2036
    %v2038 = vsel %vm2035, %v2037, %v2033
    %v2039 = vmul.f32 %v2014, %v2038
    %v2040 = vmin.f32 %v2039, 1.0
    %v2041 = vmax.f32 %v2040, -1.0
    %v2042 = vmul.f32 %v1202, %v1202
    %v2043 = vmin.f32 16.0, %v2042
    %v2044 = vmul.f32 %v2043, 2.1237322e-06
    %v2045 = vadd.f32 %v2044, 0.00028619796
    %v2046 = vmul.f32 %v2043, %v2045
    %v2047 = vadd.f32 %v2046, 0.0036580483
    %v2048 = vmul.f32 %v2043, %v2047
    %v2049 = vadd.f32 %v2048, 0.05243302
    %v2050 = vmul.f32 %v2043, %v2049
    %v2051 = vadd.f32 %v2050, 0.18741608
    %v2052 = vmul.f32 %v2043, %v2051
    %v2053 = vadd.f32 %v2052, 1.1283791
    %v2054 = vmul.f32 %v1202, %v2053
    %v2055 = vmul.f32 %v2043, 3.8918573e-05
    %v2056 = vadd.f32 %v2055, 0.001143296
    %v2057 = vmul.f32 %v2043, %v2056
    %v2058 = vadd.f32 %v2057, 0.014752088
    %v2059 = vmul.f32 %v2043, %v2058
    %v2060 = vadd.f32 %v2059, 0.112945676
    %v2061 = vmul.f32 %v2043, %v2060
    %v2062 = vadd.f32 %v2061, 0.4994258
    %v2063 = vmul.f32 %v2043, %v2062
    %v2064 = vadd.f32 %v2063, 1.0
    %v2065 = vrcp.pop %v2064
    %v2066 = vmul.f32 %v2064, %v2065
    %v2067 = vsub.f32 1.0, %v2066
    %v2068 = vmul.f32 %v2065, %v2067
    %v2069 = vadd.f32 %v2065, %v2068
    %vm2070 = vweird.f32 %v2064
    %vm2071 = vweird.f32 %v2065
    %vm2072 = vmor %vm2070, %vm2071
    %v2073 = vsel %vm2072, %v2065, %v2069
    %v2074 = vand.u32 2147483647, %v2064
    %vm2075 = vcmp.eq.f32.partialorder %v2074, 8.507059e+37
    %v2076 = vand.u32 %v2064, 2147483648
    %v2077 = vor.u32 1.1754944e-38, %v2076
    %v2078 = vsel %vm2075, %v2077, %v2073
    %v2079 = vmul.f32 %v2054, %v2078
    %v2080 = vmin.f32 %v2079, 1.0
    %v2081 = vmax.f32 %v2080, -1.0
    %v2082 = vmul.f32 %v1203, %v1203
    %v2083 = vmin.f32 16.0, %v2082
    %v2084 = vmul.f32 %v2083, 2.1237322e-06
    %v2085 = vadd.f32 %v2084, 0.00028619796
    %v2086 = vmul.f32 %v2083, %v2085
    %v2087 = vadd.f32 %v2086, 0.0036580483
    %v2088 = vmul.f32 %v2083, %v2087
    %v2089 = vadd.f32 %v2088, 0.05243302
    %v2090 = vmul.f32 %v2083, %v2089
    %v2091 = vadd.f32 %v2090, 0.18741608
    %v2092 = vmul.f32 %v2083, %v2091
    %v2093 = vadd.f32 %v2092, 1.1283791
    %v2094 = vmul.f32 %v1203, %v2093
    %v2095 = vmul.f32 %v2083, 3.8918573e-05
    %v2096 = vadd.f32 %v2095, 0.001143296
    %v2097 = vmul.f32 %v2083, %v2096
    %v2098 = vadd.f32 %v2097, 0.014752088
    %v2099 = vmul.f32 %v2083, %v2098
    %v2100 = vadd.f32 %v2099, 0.112945676
    %v2101 = vmul.f32 %v2083, %v2100
    %v2102 = vadd.f32 %v2101, 0.4994258
    %v2103 = vmul.f32 %v2083, %v2102
    %v2104 = vadd.f32 %v2103, 1.0
    %v2105 = vrcp.pop %v2104
    %v2106 = vmul.f32 %v2104, %v2105
    %v2107 = vsub.f32 1.0, %v2106
    %v2108 = vmul.f32 %v2105, %v2107
    %v2109 = vadd.f32 %v2105, %v2108
    %vm2110 = vweird.f32 %v2104
    %vm2111 = vweird.f32 %v2105
    %vm2112 = vmor %vm2110, %vm2111
    %v2113 = vsel %vm2112, %v2105, %v2109
    %v2114 = vand.u32 2147483647, %v2104
    %vm2115 = vcmp.eq.f32.partialorder %v2114, 8.507059e+37
    %v2116 = vand.u32 %v2104, 2147483648
    %v2117 = vor.u32 1.1754944e-38, %v2116
    %v2118 = vsel %vm2115, %v2117, %v2113
    %v2119 = vmul.f32 %v2094, %v2118
    %v2120 = vmin.f32 %v2119, 1.0
    %v2121 = vmax.f32 %v2120, -1.0
    %v2122 = vmul.f32 %v1204, %v1204
    %v2123 = vmin.f32 16.0, %v2122
    %v2124 = vmul.f32 %v2123, 2.1237322e-06
    %v2125 = vadd.f32 %v2124, 0.00028619796
    %v2126 = vmul.f32 %v2123, %v2125
    %v2127 = vadd.f32 %v2126, 0.0036580483
    %v2128 = vmul.f32 %v2123, %v2127
    %v2129 = vadd.f32 %v2128, 0.05243302
    %v2130 = vmul.f32 %v2123, %v2129
    %v2131 = vadd.f32 %v2130, 0.18741608
    %v2132 = vmul.f32 %v2123, %v2131
    %v2133 = vadd.f32 %v2132, 1.1283791
    %v2134 = vmul.f32 %v1204, %v2133
    %v2135 = vmul.f32 %v2123, 3.8918573e-05
    %v2136 = vadd.f32 %v2135, 0.001143296
    %v2137 = vmul.f32 %v2123, %v2136
    %v2138 = vadd.f32 %v2137, 0.014752088
    %v2139 = vmul.f32 %v2123, %v2138
    %v2140 = vadd.f32 %v2139, 0.112945676
    %v2141 = vmul.f32 %v2123, %v2140
    %v2142 = vadd.f32 %v2141, 0.4994258
    %v2143 = vmul.f32 %v2123, %v2142
    %v2144 = vadd.f32 %v2143, 1.0
    %v2145 = vrcp.pop %v2144
    %v2146 = vmul.f32 %v2144, %v2145
    %v2147 = vsub.f32 1.0, %v2146
    %v2148 = vmul.f32 %v2145, %v2147
    %v2149 = vadd.f32 %v2145, %v2148
    %vm2150 = vweird.f32 %v2144
    %vm2151 = vweird.f32 %v2145
    %vm2152 = vmor %vm2150, %vm2151
    %v2153 = vsel %vm2152, %v2145, %v2149
    %v2154 = vand.u32 2147483647, %v2144
    %vm2155 = vcmp.eq.f32.partialorder %v2154, 8.507059e+37
    %v2156 = vand.u32 %v2144, 2147483648
    %v2157 = vor.u32 1.1754944e-38, %v2156
    %v2158 = vsel %vm2155, %v2157, %v2153
    %v2159 = vmul.f32 %v2134, %v2158
    %v2160 = vmin.f32 %v2159, 1.0
    %v2161 = vmax.f32 %v2160, -1.0
    %v2162 = vmul.f32 %v1205, %v1205
    %v2163 = vmin.f32 16.0, %v2162
    %v2164 = vmul.f32 %v2163, 2.1237322e-06
    %v2165 = vadd.f32 %v2164, 0.00028619796
    %v2166 = vmul.f32 %v2163, %v2165
    %v2167 = vadd.f32 %v2166, 0.0036580483
    %v2168 = vmul.f32 %v2163, %v2167
    %v2169 = vadd.f32 %v2168, 0.05243302
    %v2170 = vmul.f32 %v2163, %v2169
    %v2171 = vadd.f32 %v2170, 0.18741608
    %v2172 = vmul.f32 %v2163, %v2171
    %v2173 = vadd.f32 %v2172, 1.1283791
    %v2174 = vmul.f32 %v1205, %v2173
    %v2175 = vmul.f32 %v2163, 3.8918573e-05
    %v2176 = vadd.f32 %v2175, 0.001143296
    %v2177 = vmul.f32 %v2163, %v2176
    %v2178 = vadd.f32 %v2177, 0.014752088
    %v2179 = vmul.f32 %v2163, %v2178
    %v2180 = vadd.f32 %v2179, 0.112945676
    %v2181 = vmul.f32 %v2163, %v2180
    %v2182 = vadd.f32 %v2181, 0.4994258
    %v2183 = vmul.f32 %v2163, %v2182
    %v2184 = vadd.f32 %v2183, 1.0
    %v2185 = vrcp.pop %v2184
    %v2186 = vmul.f32 %v2184, %v2185
    %v2187 = vsub.f32 1.0, %v2186
    %v2188 = vmul.f32 %v2185, %v2187
    %v2189 = vadd.f32 %v2185, %v2188
    %vm2190 = vweird.f32 %v2184
    %vm2191 = vweird.f32 %v2185
    %vm2192 = vmor %vm2190, %vm2191
    %v2193 = vsel %vm2192, %v2185, %v2189
    %v2194 = vand.u32 2147483647, %v2184
    %vm2195 = vcmp.eq.f32.partialorder %v2194, 8.507059e+37
    %v2196 = vand.u32 %v2184, 2147483648
    %v2197 = vor.u32 1.1754944e-38, %v2196
    %v2198 = vsel %vm2195, %v2197, %v2193
    %v2199 = vmul.f32 %v2174, %v2198
    %v2200 = vmin.f32 %v2199, 1.0
    %v2201 = vmax.f32 %v2200, -1.0
    %v2202 = vmul.f32 %v1206, %v1206
    %v2203 = vmin.f32 16.0, %v2202
    %v2204 = vmul.f32 %v2203, 2.1237322e-06
    %v2205 = vadd.f32 %v2204, 0.00028619796
    %v2206 = vmul.f32 %v2203, %v2205
    %v2207 = vadd.f32 %v2206, 0.0036580483
    %v2208 = vmul.f32 %v2203, %v2207
    %v2209 = vadd.f32 %v2208, 0.05243302
    %v2210 = vmul.f32 %v2203, %v2209
    %v2211 = vadd.f32 %v2210, 0.18741608
    %v2212 = vmul.f32 %v2203, %v2211
    %v2213 = vadd.f32 %v2212, 1.1283791
    %v2214 = vmul.f32 %v1206, %v2213
    %v2215 = vmul.f32 %v2203, 3.8918573e-05
    %v2216 = vadd.f32 %v2215, 0.001143296
    %v2217 = vmul.f32 %v2203, %v2216
    %v2218 = vadd.f32 %v2217, 0.014752088
    %v2219 = vmul.f32 %v2203, %v2218
    %v2220 = vadd.f32 %v2219, 0.112945676
    %v2221 = vmul.f32 %v2203, %v2220
    %v2222 = vadd.f32 %v2221, 0.4994258
    %v2223 = vmul.f32 %v2203, %v2222
    %v2224 = vadd.f32 %v2223, 1.0
    %v2225 = vrcp.pop %v2224
    %v2226 = vmul.f32 %v2224, %v2225
    %v2227 = vsub.f32 1.0, %v2226
    %v2228 = vmul.f32 %v2225, %v2227
    %v2229 = vadd.f32 %v2225, %v2228
    %vm2230 = vweird.f32 %v2224
    %vm2231 = vweird.f32 %v2225
    %vm2232 = vmor %vm2230, %vm2231
    %v2233 = vsel %vm2232, %v2225, %v2229
    %v2234 = vand.u32 2147483647, %v2224
    %vm2235 = vcmp.eq.f32.partialorder %v2234, 8.507059e+37
    %v2236 = vand.u32 %v2224, 2147483648
    %v2237 = vor.u32 1.1754944e-38, %v2236
    %v2238 = vsel %vm2235, %v2237, %v2233
    %v2239 = vmul.f32 %v2214, %v2238
    %v2240 = vmin.f32 %v2239, 1.0
    %v2241 = vmax.f32 %v2240, -1.0
    %v2242 = vmul.f32 %v1207, %v1207
    %v2243 = vmin.f32 16.0, %v2242
    %v2244 = vmul.f32 %v2243, 2.1237322e-06
    %v2245 = vadd.f32 %v2244, 0.00028619796
    %v2246 = vmul.f32 %v2243, %v2245
    %v2247 = vadd.f32 %v2246, 0.0036580483
    %v2248 = vmul.f32 %v2243, %v2247
    %v2249 = vadd.f32 %v2248, 0.05243302
    %v2250 = vmul.f32 %v2243, %v2249
    %v2251 = vadd.f32 %v2250, 0.18741608
    %v2252 = vmul.f32 %v2243, %v2251
    %v2253 = vadd.f32 %v2252, 1.1283791
    %v2254 = vmul.f32 %v1207, %v2253
    %v2255 = vmul.f32 %v2243, 3.8918573e-05
    %v2256 = vadd.f32 %v2255, 0.001143296
    %v2257 = vmul.f32 %v2243, %v2256
    %v2258 = vadd.f32 %v2257, 0.014752088
    %v2259 = vmul.f32 %v2243, %v2258
    %v2260 = vadd.f32 %v2259, 0.112945676
    %v2261 = vmul.f32 %v2243, %v2260
    %v2262 = vadd.f32 %v2261, 0.4994258
    %v2263 = vmul.f32 %v2243, %v2262
    %v2264 = vadd.f32 %v2263, 1.0
    %v2265 = vrcp.pop %v2264
    %v2266 = vmul.f32 %v2264, %v2265
    %v2267 = vsub.f32 1.0, %v2266
    %v2268 = vmul.f32 %v2265, %v2267
    %v2269 = vadd.f32 %v2265, %v2268
    %vm2270 = vweird.f32 %v2264
    %vm2271 = vweird.f32 %v2265
    %vm2272 = vmor %vm2270, %vm2271
    %v2273 = vsel %vm2272, %v2265, %v2269
    %v2274 = vand.u32 2147483647, %v2264
    %vm2275 = vcmp.eq.f32.partialorder %v2274, 8.507059e+37
    %v2276 = vand.u32 %v2264, 2147483648
    %v2277 = vor.u32 1.1754944e-38, %v2276
    %v2278 = vsel %vm2275, %v2277, %v2273
    %v2279 = vmul.f32 %v2254, %v2278
    %v2280 = vmin.f32 %v2279, 1.0
    %v2281 = vmax.f32 %v2280, -1.0
    %v2282 = vmul.f32 %v1208, %v1208
    %v2283 = vmin.f32 16.0, %v2282
    %v2284 = vmul.f32 %v2283, 2.1237322e-06
    %v2285 = vadd.f32 %v2284, 0.00028619796
    %v2286 = vmul.f32 %v2283, %v2285
    %v2287 = vadd.f32 %v2286, 0.0036580483
    %v2288 = vmul.f32 %v2283, %v2287
    %v2289 = vadd.f32 %v2288, 0.05243302
    %v2290 = vmul.f32 %v2283, %v2289
    %v2291 = vadd.f32 %v2290, 0.18741608
    %v2292 = vmul.f32 %v2283, %v2291
    %v2293 = vadd.f32 %v2292, 1.1283791
    %v2294 = vmul.f32 %v1208, %v2293
    %v2295 = vmul.f32 %v2283, 3.8918573e-05
    %v2296 = vadd.f32 %v2295, 0.001143296
    %v2297 = vmul.f32 %v2283, %v2296
    %v2298 = vadd.f32 %v2297, 0.014752088
    %v2299 = vmul.f32 %v2283, %v2298
    %v2300 = vadd.f32 %v2299, 0.112945676
    %v2301 = vmul.f32 %v2283, %v2300
    %v2302 = vadd.f32 %v2301, 0.4994258
    %v2303 = vmul.f32 %v2283, %v2302
    %v2304 = vadd.f32 %v2303, 1.0
    %v2305 = vrcp.pop %v2304
    %v2306 = vmul.f32 %v2304, %v2305
    %v2307 = vsub.f32 1.0, %v2306
    %v2308 = vmul.f32 %v2305, %v2307
    %v2309 = vadd.f32 %v2305, %v2308
    %vm2310 = vweird.f32 %v2304
    %vm2311 = vweird.f32 %v2305
    %vm2312 = vmor %vm2310, %vm2311
    %v2313 = vsel %vm2312, %v2305, %v2309
    %v2314 = vand.u32 2147483647, %v2304
    %vm2315 = vcmp.eq.f32.partialorder %v2314, 8.507059e+37
    %v2316 = vand.u32 %v2304, 2147483648
    %v2317 = vor.u32 1.1754944e-38, %v2316
    %v2318 = vsel %vm2315, %v2317, %v2313
    %v2319 = vmul.f32 %v2294, %v2318
    %v2320 = vmin.f32 %v2319, 1.0
    %v2321 = vmax.f32 %v2320, -1.0
    %v2322 = vmul.f32 %v1209, %v1209
    %v2323 = vmin.f32 16.0, %v2322
    %v2324 = vmul.f32 %v2323, 2.1237322e-06
    %v2325 = vadd.f32 %v2324, 0.00028619796
    %v2326 = vmul.f32 %v2323, %v2325
    %v2327 = vadd.f32 %v2326, 0.0036580483
    %v2328 = vmul.f32 %v2323, %v2327
    %v2329 = vadd.f32 %v2328, 0.05243302
    %v2330 = vmul.f32 %v2323, %v2329
    %v2331 = vadd.f32 %v2330, 0.18741608
    %v2332 = vmul.f32 %v2323, %v2331
    %v2333 = vadd.f32 %v2332, 1.1283791
    %v2334 = vmul.f32 %v1209, %v2333
    %v2335 = vmul.f32 %v2323, 3.8918573e-05
    %v2336 = vadd.f32 %v2335, 0.001143296
    %v2337 = vmul.f32 %v2323, %v2336
    %v2338 = vadd.f32 %v2337, 0.014752088
    %v2339 = vmul.f32 %v2323, %v2338
    %v2340 = vadd.f32 %v2339, 0.112945676
    %v2341 = vmul.f32 %v2323, %v2340
    %v2342 = vadd.f32 %v2341, 0.4994258
    %v2343 = vmul.f32 %v2323, %v2342
    %v2344 = vadd.f32 %v2343, 1.0
    %v2345 = vrcp.pop %v2344
    %v2346 = vmul.f32 %v2344, %v2345
    %v2347 = vsub.f32 1.0, %v2346
    %v2348 = vmul.f32 %v2345, %v2347
    %v2349 = vadd.f32 %v2345, %v2348
    %vm2350 = vweird.f32 %v2344
    %vm2351 = vweird.f32 %v2345
    %vm2352 = vmor %vm2350, %vm2351
    %v2353 = vsel %vm2352, %v2345, %v2349
    %v2354 = vand.u32 2147483647, %v2344
    %vm2355 = vcmp.eq.f32.partialorder %v2354, 8.507059e+37
    %v2356 = vand.u32 %v2344, 2147483648
    %v2357 = vor.u32 1.1754944e-38, %v2356
    %v2358 = vsel %vm2355, %v2357, %v2353
    %v2359 = vmul.f32 %v2334, %v2358
    %v2360 = vmin.f32 %v2359, 1.0
    %v2361 = vmax.f32 %v2360, -1.0
    %v2362 = vmul.f32 %v1210, %v1210
    %v2363 = vmin.f32 16.0, %v2362
    %v2364 = vmul.f32 %v2363, 2.1237322e-06
    %v2365 = vadd.f32 %v2364, 0.00028619796
    %v2366 = vmul.f32 %v2363, %v2365
    %v2367 = vadd.f32 %v2366, 0.0036580483
    %v2368 = vmul.f32 %v2363, %v2367
    %v2369 = vadd.f32 %v2368, 0.05243302
    %v2370 = vmul.f32 %v2363, %v2369
    %v2371 = vadd.f32 %v2370, 0.18741608
    %v2372 = vmul.f32 %v2363, %v2371
    %v2373 = vadd.f32 %v2372, 1.1283791
    %v2374 = vmul.f32 %v1210, %v2373
    %v2375 = vmul.f32 %v2363, 3.8918573e-05
    %v2376 = vadd.f32 %v2375, 0.001143296
    %v2377 = vmul.f32 %v2363, %v2376
    %v2378 = vadd.f32 %v2377, 0.014752088
    %v2379 = vmul.f32 %v2363, %v2378
    %v2380 = vadd.f32 %v2379, 0.112945676
    %v2381 = vmul.f32 %v2363, %v2380
    %v2382 = vadd.f32 %v2381, 0.4994258
    %v2383 = vmul.f32 %v2363, %v2382
    %v2384 = vadd.f32 %v2383, 1.0
    %v2385 = vrcp.pop %v2384
    %v2386 = vmul.f32 %v2384, %v2385
    %v2387 = vsub.f32 1.0, %v2386
    %v2388 = vmul.f32 %v2385, %v2387
    %v2389 = vadd.f32 %v2385, %v2388
    %vm2390 = vweird.f32 %v2384
    %vm2391 = vweird.f32 %v2385
    %vm2392 = vmor %vm2390, %vm2391
    %v2393 = vsel %vm2392, %v2385, %v2389
    %v2394 = vand.u32 2147483647, %v2384
    %vm2395 = vcmp.eq.f32.partialorder %v2394, 8.507059e+37
    %v2396 = vand.u32 %v2384, 2147483648
    %v2397 = vor.u32 1.1754944e-38, %v2396
    %v2398 = vsel %vm2395, %v2397, %v2393
    %v2399 = vmul.f32 %v2374, %v2398
    %v2400 = vmin.f32 %v2399, 1.0
    %v2401 = vmax.f32 %v2400, -1.0
    %v2402 = vmul.f32 %v1211, %v1211
    %v2403 = vmin.f32 16.0, %v2402
    %v2404 = vmul.f32 %v2403, 2.1237322e-06
    %v2405 = vadd.f32 %v2404, 0.00028619796
    %v2406 = vmul.f32 %v2403, %v2405
    %v2407 = vadd.f32 %v2406, 0.0036580483
    %v2408 = vmul.f32 %v2403, %v2407
    %v2409 = vadd.f32 %v2408, 0.05243302
    %v2410 = vmul.f32 %v2403, %v2409
    %v2411 = vadd.f32 %v2410, 0.18741608
    %v2412 = vmul.f32 %v2403, %v2411
    %v2413 = vadd.f32 %v2412, 1.1283791
    %v2414 = vmul.f32 %v1211, %v2413
    %v2415 = vmul.f32 %v2403, 3.8918573e-05
    %v2416 = vadd.f32 %v2415, 0.001143296
    %v2417 = vmul.f32 %v2403, %v2416
    %v2418 = vadd.f32 %v2417, 0.014752088
    %v2419 = vmul.f32 %v2403, %v2418
    %v2420 = vadd.f32 %v2419, 0.112945676
    %v2421 = vmul.f32 %v2403, %v2420
    %v2422 = vadd.f32 %v2421, 0.4994258
    %v2423 = vmul.f32 %v2403, %v2422
    %v2424 = vadd.f32 %v2423, 1.0
    %v2425 = vrcp.pop %v2424
    %v2426 = vmul.f32 %v2424, %v2425
    %v2427 = vsub.f32 1.0, %v2426
    %v2428 = vmul.f32 %v2425, %v2427
    %v2429 = vadd.f32 %v2425, %v2428
    %vm2430 = vweird.f32 %v2424
    %vm2431 = vweird.f32 %v2425
    %vm2432 = vmor %vm2430, %vm2431
    %v2433 = vsel %vm2432, %v2425, %v2429
    %v2434 = vand.u32 2147483647, %v2424
    %vm2435 = vcmp.eq.f32.partialorder %v2434, 8.507059e+37
    %v2436 = vand.u32 %v2424, 2147483648
    %v2437 = vor.u32 1.1754944e-38, %v2436
    %v2438 = vsel %vm2435, %v2437, %v2433
    %v2439 = vmul.f32 %v2414, %v2438
    %v2440 = vmin.f32 %v2439, 1.0
    %v2441 = vmax.f32 %v2440, -1.0
    %v2442 = vmul.f32 %v1212, %v1212
    %v2443 = vmin.f32 16.0, %v2442
    %v2444 = vmul.f32 %v2443, 2.1237322e-06
    %v2445 = vadd.f32 %v2444, 0.00028619796
    %v2446 = vmul.f32 %v2443, %v2445
    %v2447 = vadd.f32 %v2446, 0.0036580483
    %v2448 = vmul.f32 %v2443, %v2447
    %v2449 = vadd.f32 %v2448, 0.05243302
    %v2450 = vmul.f32 %v2443, %v2449
    %v2451 = vadd.f32 %v2450, 0.18741608
    %v2452 = vmul.f32 %v2443, %v2451
    %v2453 = vadd.f32 %v2452, 1.1283791
    %v2454 = vmul.f32 %v1212, %v2453
    %v2455 = vmul.f32 %v2443, 3.8918573e-05
    %v2456 = vadd.f32 %v2455, 0.001143296
    %v2457 = vmul.f32 %v2443, %v2456
    %v2458 = vadd.f32 %v2457, 0.014752088
    %v2459 = vmul.f32 %v2443, %v2458
    %v2460 = vadd.f32 %v2459, 0.112945676
    %v2461 = vmul.f32 %v2443, %v2460
    %v2462 = vadd.f32 %v2461, 0.4994258
    %v2463 = vmul.f32 %v2443, %v2462
    %v2464 = vadd.f32 %v2463, 1.0
    %v2465 = vrcp.pop %v2464
    %v2466 = vmul.f32 %v2464, %v2465
    %v2467 = vsub.f32 1.0, %v2466
    %v2468 = vmul.f32 %v2465, %v2467
    %v2469 = vadd.f32 %v2465, %v2468
    %vm2470 = vweird.f32 %v2464
    %vm2471 = vweird.f32 %v2465
    %vm2472 = vmor %vm2470, %vm2471
    %v2473 = vsel %vm2472, %v2465, %v2469
    %v2474 = vand.u32 2147483647, %v2464
    %vm2475 = vcmp.eq.f32.partialorder %v2474, 8.507059e+37
    %v2476 = vand.u32 %v2464, 2147483648
    %v2477 = vor.u32 1.1754944e-38, %v2476
    %v2478 = vsel %vm2475, %v2477, %v2473
    %v2479 = vmul.f32 %v2454, %v2478
    %v2480 = vmin.f32 %v2479, 1.0
    %v2481 = vmax.f32 %v2480, -1.0
    %v2482 = vmul.f32 %v1213, %v1213
    %v2483 = vmin.f32 16.0, %v2482
    %v2484 = vmul.f32 %v2483, 2.1237322e-06
    %v2485 = vadd.f32 %v2484, 0.00028619796
    %v2486 = vmul.f32 %v2483, %v2485
    %v2487 = vadd.f32 %v2486, 0.0036580483
    %v2488 = vmul.f32 %v2483, %v2487
    %v2489 = vadd.f32 %v2488, 0.05243302
    %v2490 = vmul.f32 %v2483, %v2489
    %v2491 = vadd.f32 %v2490, 0.18741608
    %v2492 = vmul.f32 %v2483, %v2491
    %v2493 = vadd.f32 %v2492, 1.1283791
    %v2494 = vmul.f32 %v1213, %v2493
    %v2495 = vmul.f32 %v2483, 3.8918573e-05
    %v2496 = vadd.f32 %v2495, 0.001143296
    %v2497 = vmul.f32 %v2483, %v2496
    %v2498 = vadd.f32 %v2497, 0.014752088
    %v2499 = vmul.f32 %v2483, %v2498
    %v2500 = vadd.f32 %v2499, 0.112945676
    %v2501 = vmul.f32 %v2483, %v2500
    %v2502 = vadd.f32 %v2501, 0.4994258
    %v2503 = vmul.f32 %v2483, %v2502
    %v2504 = vadd.f32 %v2503, 1.0
    %v2505 = vrcp.pop %v2504
    %v2506 = vmul.f32 %v2504, %v2505
    %v2507 = vsub.f32 1.0, %v2506
    %v2508 = vmul.f32 %v2505, %v2507
    %v2509 = vadd.f32 %v2505, %v2508
    %vm2510 = vweird.f32 %v2504
    %vm2511 = vweird.f32 %v2505
    %vm2512 = vmor %vm2510, %vm2511
    %v2513 = vsel %vm2512, %v2505, %v2509
    %v2514 = vand.u32 2147483647, %v2504
    %vm2515 = vcmp.eq.f32.partialorder %v2514, 8.507059e+37
    %v2516 = vand.u32 %v2504, 2147483648
    %v2517 = vor.u32 1.1754944e-38, %v2516
    %v2518 = vsel %vm2515, %v2517, %v2513
    %v2519 = vmul.f32 %v2494, %v2518
    %v2520 = vmin.f32 %v2519, 1.0
    %v2521 = vmax.f32 %v2520, -1.0
    %v2522 = vmul.f32 %v1214, %v1214
    %v2523 = vmin.f32 16.0, %v2522
    %v2524 = vmul.f32 %v2523, 2.1237322e-06
    %v2525 = vadd.f32 %v2524, 0.00028619796
    %v2526 = vmul.f32 %v2523, %v2525
    %v2527 = vadd.f32 %v2526, 0.0036580483
    %v2528 = vmul.f32 %v2523, %v2527
    %v2529 = vadd.f32 %v2528, 0.05243302
    %v2530 = vmul.f32 %v2523, %v2529
    %v2531 = vadd.f32 %v2530, 0.18741608
    %v2532 = vmul.f32 %v2523, %v2531
    %v2533 = vadd.f32 %v2532, 1.1283791
    %v2534 = vmul.f32 %v1214, %v2533
    %v2535 = vmul.f32 %v2523, 3.8918573e-05
    %v2536 = vadd.f32 %v2535, 0.001143296
    %v2537 = vmul.f32 %v2523, %v2536
    %v2538 = vadd.f32 %v2537, 0.014752088
    %v2539 = vmul.f32 %v2523, %v2538
    %v2540 = vadd.f32 %v2539, 0.112945676
    %v2541 = vmul.f32 %v2523, %v2540
    %v2542 = vadd.f32 %v2541, 0.4994258
    %v2543 = vmul.f32 %v2523, %v2542
    %v2544 = vadd.f32 %v2543, 1.0
    %v2545 = vrcp.pop %v2544
    %v2546 = vmul.f32 %v2544, %v2545
    %v2547 = vsub.f32 1.0, %v2546
    %v2548 = vmul.f32 %v2545, %v2547
    %v2549 = vadd.f32 %v2545, %v2548
    %vm2550 = vweird.f32 %v2544
    %vm2551 = vweird.f32 %v2545
    %vm2552 = vmor %vm2550, %vm2551
    %v2553 = vsel %vm2552, %v2545, %v2549
    %v2554 = vand.u32 2147483647, %v2544
    %vm2555 = vcmp.eq.f32.partialorder %v2554, 8.507059e+37
    %v2556 = vand.u32 %v2544, 2147483648
    %v2557 = vor.u32 1.1754944e-38, %v2556
    %v2558 = vsel %vm2555, %v2557, %v2553
    %v2559 = vmul.f32 %v2534, %v2558
    %v2560 = vmin.f32 %v2559, 1.0
    %v2561 = vmax.f32 %v2560, -1.0
    %v2562 = vmul.f32 %v1215, %v1215
    %v2563 = vmin.f32 16.0, %v2562
    %v2564 = vmul.f32 %v2563, 2.1237322e-06
    %v2565 = vadd.f32 %v2564, 0.00028619796
    %v2566 = vmul.f32 %v2563, %v2565
    %v2567 = vadd.f32 %v2566, 0.0036580483
    %v2568 = vmul.f32 %v2563, %v2567
    %v2569 = vadd.f32 %v2568, 0.05243302
    %v2570 = vmul.f32 %v2563, %v2569
    %v2571 = vadd.f32 %v2570, 0.18741608
    %v2572 = vmul.f32 %v2563, %v2571
    %v2573 = vadd.f32 %v2572, 1.1283791
    %v2574 = vmul.f32 %v1215, %v2573
    %v2575 = vmul.f32 %v2563, 3.8918573e-05
    %v2576 = vadd.f32 %v2575, 0.001143296
    %v2577 = vmul.f32 %v2563, %v2576
    %v2578 = vadd.f32 %v2577, 0.014752088
    %v2579 = vmul.f32 %v2563, %v2578
    %v2580 = vadd.f32 %v2579, 0.112945676
    %v2581 = vmul.f32 %v2563, %v2580
    %v2582 = vadd.f32 %v2581, 0.4994258
    %v2583 = vmul.f32 %v2563, %v2582
    %v2584 = vadd.f32 %v2583, 1.0
    %v2585 = vrcp.pop %v2584
    %v2586 = vmul.f32 %v2584, %v2585
    %v2587 = vsub.f32 1.0, %v2586
    %v2588 = vmul.f32 %v2585, %v2587
    %v2589 = vadd.f32 %v2585, %v2588
    %vm2590 = vweird.f32 %v2584
    %vm2591 = vweird.f32 %v2585
    %vm2592 = vmor %vm2590, %vm2591
    %v2593 = vsel %vm2592, %v2585, %v2589
    %v2594 = vand.u32 2147483647, %v2584
    %vm2595 = vcmp.eq.f32.partialorder %v2594, 8.507059e+37
    %v2596 = vand.u32 %v2584, 2147483648
    %v2597 = vor.u32 1.1754944e-38, %v2596
    %v2598 = vsel %vm2595, %v2597, %v2593
    %v2599 = vmul.f32 %v2574, %v2598
    %v2600 = vmin.f32 %v2599, 1.0
    %v2601 = vmax.f32 %v2600, -1.0
    %v2602 = vmul.f32 %v1216, %v1216
    %v2603 = vmin.f32 16.0, %v2602
    %v2604 = vmul.f32 %v2603, 2.1237322e-06
    %v2605 = vadd.f32 %v2604, 0.00028619796
    %v2606 = vmul.f32 %v2603, %v2605
    %v2607 = vadd.f32 %v2606, 0.0036580483
    %v2608 = vmul.f32 %v2603, %v2607
    %v2609 = vadd.f32 %v2608, 0.05243302
    %v2610 = vmul.f32 %v2603, %v2609
    %v2611 = vadd.f32 %v2610, 0.18741608
    %v2612 = vmul.f32 %v2603, %v2611
    %v2613 = vadd.f32 %v2612, 1.1283791
    %v2614 = vmul.f32 %v1216, %v2613
    %v2615 = vmul.f32 %v2603, 3.8918573e-05
    %v2616 = vadd.f32 %v2615, 0.001143296
    %v2617 = vmul.f32 %v2603, %v2616
    %v2618 = vadd.f32 %v2617, 0.014752088
    %v2619 = vmul.f32 %v2603, %v2618
    %v2620 = vadd.f32 %v2619, 0.112945676
    %v2621 = vmul.f32 %v2603, %v2620
    %v2622 = vadd.f32 %v2621, 0.4994258
    %v2623 = vmul.f32 %v2603, %v2622
    %v2624 = vadd.f32 %v2623, 1.0
    %v2625 = vrcp.pop %v2624
    %v2626 = vmul.f32 %v2624, %v2625
    %v2627 = vsub.f32 1.0, %v2626
    %v2628 = vmul.f32 %v2625, %v2627
    %v2629 = vadd.f32 %v2625, %v2628
    %vm2630 = vweird.f32 %v2624
    %vm2631 = vweird.f32 %v2625
    %vm2632 = vmor %vm2630, %vm2631
    %v2633 = vsel %vm2632, %v2625, %v2629
    %v2634 = vand.u32 2147483647, %v2624
    %vm2635 = vcmp.eq.f32.partialorder %v2634, 8.507059e+37
    %v2636 = vand.u32 %v2624, 2147483648
    %v2637 = vor.u32 1.1754944e-38, %v2636
    %v2638 = vsel %vm2635, %v2637, %v2633
    %v2639 = vmul.f32 %v2614, %v2638
    %v2640 = vmin.f32 %v2639, 1.0
    %v2641 = vmax.f32 %v2640, -1.0
    %v2642 = vmul.f32 %v1217, %v1217
    %v2643 = vmin.f32 16.0, %v2642
    %v2644 = vmul.f32 %v2643, 2.1237322e-06
    %v2645 = vadd.f32 %v2644, 0.00028619796
    %v2646 = vmul.f32 %v2643, %v2645
    %v2647 = vadd.f32 %v2646, 0.0036580483
    %v2648 = vmul.f32 %v2643, %v2647
    %v2649 = vadd.f32 %v2648, 0.05243302
    %v2650 = vmul.f32 %v2643, %v2649
    %v2651 = vadd.f32 %v2650, 0.18741608
    %v2652 = vmul.f32 %v2643, %v2651
    %v2653 = vadd.f32 %v2652, 1.1283791
    %v2654 = vmul.f32 %v1217, %v2653
    %v2655 = vmul.f32 %v2643, 3.8918573e-05
    %v2656 = vadd.f32 %v2655, 0.001143296
    %v2657 = vmul.f32 %v2643, %v2656
    %v2658 = vadd.f32 %v2657, 0.014752088
    %v2659 = vmul.f32 %v2643, %v2658
    %v2660 = vadd.f32 %v2659, 0.112945676
    %v2661 = vmul.f32 %v2643, %v2660
    %v2662 = vadd.f32 %v2661, 0.4994258
    %v2663 = vmul.f32 %v2643, %v2662
    %v2664 = vadd.f32 %v2663, 1.0
    %v2665 = vrcp.pop %v2664
    %v2666 = vmul.f32 %v2664, %v2665
    %v2667 = vsub.f32 1.0, %v2666
    %v2668 = vmul.f32 %v2665, %v2667
    %v2669 = vadd.f32 %v2665, %v2668
    %vm2670 = vweird.f32 %v2664
    %vm2671 = vweird.f32 %v2665
    %vm2672 = vmor %vm2670, %vm2671
    %v2673 = vsel %vm2672, %v2665, %v2669
    %v2674 = vand.u32 2147483647, %v2664
    %vm2675 = vcmp.eq.f32.partialorder %v2674, 8.507059e+37
    %v2676 = vand.u32 %v2664, 2147483648
    %v2677 = vor.u32 1.1754944e-38, %v2676
    %v2678 = vsel %vm2675, %v2677, %v2673
    %v2679 = vmul.f32 %v2654, %v2678
    %v2680 = vmin.f32 %v2679, 1.0
    %v2681 = vmax.f32 %v2680, -1.0
    %v2682 = vmul.f32 %v1218, %v1218
    %v2683 = vmin.f32 16.0, %v2682
    %v2684 = vmul.f32 %v2683, 2.1237322e-06
    %v2685 = vadd.f32 %v2684, 0.00028619796
    %v2686 = vmul.f32 %v2683, %v2685
    %v2687 = vadd.f32 %v2686, 0.0036580483
    %v2688 = vmul.f32 %v2683, %v2687
    %v2689 = vadd.f32 %v2688, 0.05243302
    %v2690 = vmul.f32 %v2683, %v2689
    %v2691 = vadd.f32 %v2690, 0.18741608
    %v2692 = vmul.f32 %v2683, %v2691
    %v2693 = vadd.f32 %v2692, 1.1283791
    %v2694 = vmul.f32 %v1218, %v2693
    %v2695 = vmul.f32 %v2683, 3.8918573e-05
    %v2696 = vadd.f32 %v2695, 0.001143296
    %v2697 = vmul.f32 %v2683, %v2696
    %v2698 = vadd.f32 %v2697, 0.014752088
    %v2699 = vmul.f32 %v2683, %v2698
    %v2700 = vadd.f32 %v2699, 0.112945676
    %v2701 = vmul.f32 %v2683, %v2700
    %v2702 = vadd.f32 %v2701, 0.4994258
    %v2703 = vmul.f32 %v2683, %v2702
    %v2704 = vadd.f32 %v2703, 1.0
    %v2705 = vrcp.pop %v2704
    %v2706 = vmul.f32 %v2704, %v2705
    %v2707 = vsub.f32 1.0, %v2706
    %v2708 = vmul.f32 %v2705, %v2707
    %v2709 = vadd.f32 %v2705, %v2708
    %vm2710 = vweird.f32 %v2704
    %vm2711 = vweird.f32 %v2705
    %vm2712 = vmor %vm2710, %vm2711
    %v2713 = vsel %vm2712, %v2705, %v2709
    %v2714 = vand.u32 2147483647, %v2704
    %vm2715 = vcmp.eq.f32.partialorder %v2714, 8.507059e+37
    %v2716 = vand.u32 %v2704, 2147483648
    %v2717 = vor.u32 1.1754944e-38, %v2716
    %v2718 = vsel %vm2715, %v2717, %v2713
    %v2719 = vmul.f32 %v2694, %v2718
    %v2720 = vmin.f32 %v2719, 1.0
    %v2721 = vmax.f32 %v2720, -1.0
    %v2722 = vmul.f32 %v1219, %v1219
    %v2723 = vmin.f32 16.0, %v2722
    %v2724 = vmul.f32 %v2723, 2.1237322e-06
    %v2725 = vadd.f32 %v2724, 0.00028619796
    %v2726 = vmul.f32 %v2723, %v2725
    %v2727 = vadd.f32 %v2726, 0.0036580483
    %v2728 = vmul.f32 %v2723, %v2727
    %v2729 = vadd.f32 %v2728, 0.05243302
    %v2730 = vmul.f32 %v2723, %v2729
    %v2731 = vadd.f32 %v2730, 0.18741608
    %v2732 = vmul.f32 %v2723, %v2731
    %v2733 = vadd.f32 %v2732, 1.1283791
    %v2734 = vmul.f32 %v1219, %v2733
    %v2735 = vmul.f32 %v2723, 3.8918573e-05
    %v2736 = vadd.f32 %v2735, 0.001143296
    %v2737 = vmul.f32 %v2723, %v2736
    %v2738 = vadd.f32 %v2737, 0.014752088
    %v2739 = vmul.f32 %v2723, %v2738
    %v2740 = vadd.f32 %v2739, 0.112945676
    %v2741 = vmul.f32 %v2723, %v2740
    %v2742 = vadd.f32 %v2741, 0.4994258
    %v2743 = vmul.f32 %v2723, %v2742
    %v2744 = vadd.f32 %v2743, 1.0
    %v2745 = vrcp.pop %v2744
    %v2746 = vmul.f32 %v2744, %v2745
    %v2747 = vsub.f32 1.0, %v2746
    %v2748 = vmul.f32 %v2745, %v2747
    %v2749 = vadd.f32 %v2745, %v2748
    %vm2750 = vweird.f32 %v2744
    %vm2751 = vweird.f32 %v2745
    %vm2752 = vmor %vm2750, %vm2751
    %v2753 = vsel %vm2752, %v2745, %v2749
    %v2754 = vand.u32 2147483647, %v2744
    %vm2755 = vcmp.eq.f32.partialorder %v2754, 8.507059e+37
    %v2756 = vand.u32 %v2744, 2147483648
    %v2757 = vor.u32 1.1754944e-38, %v2756
    %v2758 = vsel %vm2755, %v2757, %v2753
    %v2759 = vmul.f32 %v2734, %v2758
    %v2760 = vmin.f32 %v2759, 1.0
    %v2761 = vmax.f32 %v2760, -1.0
    %v2762 = vmul.f32 %v1220, %v1220
    %v2763 = vmin.f32 16.0, %v2762
    %v2764 = vmul.f32 %v2763, 2.1237322e-06
    %v2765 = vadd.f32 %v2764, 0.00028619796
    %v2766 = vmul.f32 %v2763, %v2765
    %v2767 = vadd.f32 %v2766, 0.0036580483
    %v2768 = vmul.f32 %v2763, %v2767
    %v2769 = vadd.f32 %v2768, 0.05243302
    %v2770 = vmul.f32 %v2763, %v2769
    %v2771 = vadd.f32 %v2770, 0.18741608
    %v2772 = vmul.f32 %v2763, %v2771
    %v2773 = vadd.f32 %v2772, 1.1283791
    %v2774 = vmul.f32 %v1220, %v2773
    %v2775 = vmul.f32 %v2763, 3.8918573e-05
    %v2776 = vadd.f32 %v2775, 0.001143296
    %v2777 = vmul.f32 %v2763, %v2776
    %v2778 = vadd.f32 %v2777, 0.014752088
    %v2779 = vmul.f32 %v2763, %v2778
    %v2780 = vadd.f32 %v2779, 0.112945676
    %v2781 = vmul.f32 %v2763, %v2780
    %v2782 = vadd.f32 %v2781, 0.4994258
    %v2783 = vmul.f32 %v2763, %v2782
    %v2784 = vadd.f32 %v2783, 1.0
    %v2785 = vrcp.pop %v2784
    %v2786 = vmul.f32 %v2784, %v2785
    %v2787 = vsub.f32 1.0, %v2786
    %v2788 = vmul.f32 %v2785, %v2787
    %v2789 = vadd.f32 %v2785, %v2788
    %vm2790 = vweird.f32 %v2784
    %vm2791 = vweird.f32 %v2785
    %vm2792 = vmor %vm2790, %vm2791
    %v2793 = vsel %vm2792, %v2785, %v2789
    %v2794 = vand.u32 2147483647, %v2784
    %vm2795 = vcmp.eq.f32.partialorder %v2794, 8.507059e+37
    %v2796 = vand.u32 %v2784, 2147483648
    %v2797 = vor.u32 1.1754944e-38, %v2796
    %v2798 = vsel %vm2795, %v2797, %v2793
    %v2799 = vmul.f32 %v2774, %v2798
    %v2800 = vmin.f32 %v2799, 1.0
    %v2801 = vmax.f32 %v2800, -1.0
    %v2802 = vmul.f32 %v1221, %v1221
    %v2803 = vmin.f32 16.0, %v2802
    %v2804 = vmul.f32 %v2803, 2.1237322e-06
    %v2805 = vadd.f32 %v2804, 0.00028619796
    %v2806 = vmul.f32 %v2803, %v2805
    %v2807 = vadd.f32 %v2806, 0.0036580483
    %v2808 = vmul.f32 %v2803, %v2807
    %v2809 = vadd.f32 %v2808, 0.05243302
    %v2810 = vmul.f32 %v2803, %v2809
    %v2811 = vadd.f32 %v2810, 0.18741608
    %v2812 = vmul.f32 %v2803, %v2811
    %v2813 = vadd.f32 %v2812, 1.1283791
    %v2814 = vmul.f32 %v1221, %v2813
    %v2815 = vmul.f32 %v2803, 3.8918573e-05
    %v2816 = vadd.f32 %v2815, 0.001143296
    %v2817 = vmul.f32 %v2803, %v2816
    %v2818 = vadd.f32 %v2817, 0.014752088
    %v2819 = vmul.f32 %v2803, %v2818
    %v2820 = vadd.f32 %v2819, 0.112945676
    %v2821 = vmul.f32 %v2803, %v2820
    %v2822 = vadd.f32 %v2821, 0.4994258
    %v2823 = vmul.f32 %v2803, %v2822
    %v2824 = vadd.f32 %v2823, 1.0
    %v2825 = vrcp.pop %v2824
    %v2826 = vmul.f32 %v2824, %v2825
    %v2827 = vsub.f32 1.0, %v2826
    %v2828 = vmul.f32 %v2825, %v2827
    %v2829 = vadd.f32 %v2825, %v2828
    %vm2830 = vweird.f32 %v2824
    %vm2831 = vweird.f32 %v2825
    %vm2832 = vmor %vm2830, %vm2831
    %v2833 = vsel %vm2832, %v2825, %v2829
    %v2834 = vand.u32 2147483647, %v2824
    %vm2835 = vcmp.eq.f32.partialorder %v2834, 8.507059e+37
    %v2836 = vand.u32 %v2824, 2147483648
    %v2837 = vor.u32 1.1754944e-38, %v2836
    %v2838 = vsel %vm2835, %v2837, %v2833
    %v2839 = vmul.f32 %v2814, %v2838
    %v2840 = vmin.f32 %v2839, 1.0
    %v2841 = vmax.f32 %v2840, -1.0
    %v2842 = vmul.f32 %v1222, %v1222
    %v2843 = vmin.f32 16.0, %v2842
    %v2844 = vmul.f32 %v2843, 2.1237322e-06
    %v2845 = vadd.f32 %v2844, 0.00028619796
    %v2846 = vmul.f32 %v2843, %v2845
    %v2847 = vadd.f32 %v2846, 0.0036580483
    %v2848 = vmul.f32 %v2843, %v2847
    %v2849 = vadd.f32 %v2848, 0.05243302
    %v2850 = vmul.f32 %v2843, %v2849
    %v2851 = vadd.f32 %v2850, 0.18741608
    %v2852 = vmul.f32 %v2843, %v2851
    %v2853 = vadd.f32 %v2852, 1.1283791
    %v2854 = vmul.f32 %v1222, %v2853
    %v2855 = vmul.f32 %v2843, 3.8918573e-05
    %v2856 = vadd.f32 %v2855, 0.001143296
    %v2857 = vmul.f32 %v2843, %v2856
    %v2858 = vadd.f32 %v2857, 0.014752088
    %v2859 = vmul.f32 %v2843, %v2858
    %v2860 = vadd.f32 %v2859, 0.112945676
    %v2861 = vmul.f32 %v2843, %v2860
    %v2862 = vadd.f32 %v2861, 0.4994258
    %v2863 = vmul.f32 %v2843, %v2862
    %v2864 = vadd.f32 %v2863, 1.0
    %v2865 = vrcp.pop %v2864
    %v2866 = vmul.f32 %v2864, %v2865
    %v2867 = vsub.f32 1.0, %v2866
    %v2868 = vmul.f32 %v2865, %v2867
    %v2869 = vadd.f32 %v2865, %v2868
    %vm2870 = vweird.f32 %v2864
    %vm2871 = vweird.f32 %v2865
    %vm2872 = vmor %vm2870, %vm2871
    %v2873 = vsel %vm2872, %v2865, %v2869
    %v2874 = vand.u32 2147483647, %v2864
    %vm2875 = vcmp.eq.f32.partialorder %v2874, 8.507059e+37
    %v2876 = vand.u32 %v2864, 2147483648
    %v2877 = vor.u32 1.1754944e-38, %v2876
    %v2878 = vsel %vm2875, %v2877, %v2873
    %v2879 = vmul.f32 %v2854, %v2878
    %v2880 = vmin.f32 %v2879, 1.0
    %v2881 = vmax.f32 %v2880, -1.0
    %v2882 = vmul.f32 %v1223, %v1223
    %v2883 = vmin.f32 16.0, %v2882
    %v2884 = vmul.f32 %v2883, 2.1237322e-06
    %v2885 = vadd.f32 %v2884, 0.00028619796
    %v2886 = vmul.f32 %v2883, %v2885
    %v2887 = vadd.f32 %v2886, 0.0036580483
    %v2888 = vmul.f32 %v2883, %v2887
    %v2889 = vadd.f32 %v2888, 0.05243302
    %v2890 = vmul.f32 %v2883, %v2889
    %v2891 = vadd.f32 %v2890, 0.18741608
    %v2892 = vmul.f32 %v2883, %v2891
    %v2893 = vadd.f32 %v2892, 1.1283791
    %v2894 = vmul.f32 %v1223, %v2893
    %v2895 = vmul.f32 %v2883, 3.8918573e-05
    %v2896 = vadd.f32 %v2895, 0.001143296
    %v2897 = vmul.f32 %v2883, %v2896
    %v2898 = vadd.f32 %v2897, 0.014752088
    %v2899 = vmul.f32 %v2883, %v2898
    %v2900 = vadd.f32 %v2899, 0.112945676
    %v2901 = vmul.f32 %v2883, %v2900
    %v2902 = vadd.f32 %v2901, 0.4994258
    %v2903 = vmul.f32 %v2883, %v2902
    %v2904 = vadd.f32 %v2903, 1.0
    %v2905 = vrcp.pop %v2904
    %v2906 = vmul.f32 %v2904, %v2905
    %v2907 = vsub.f32 1.0, %v2906
    %v2908 = vmul.f32 %v2905, %v2907
    %v2909 = vadd.f32 %v2905, %v2908
    %vm2910 = vweird.f32 %v2904
    %vm2911 = vweird.f32 %v2905
    %vm2912 = vmor %vm2910, %vm2911
    %v2913 = vsel %vm2912, %v2905, %v2909
    %v2914 = vand.u32 2147483647, %v2904
    %vm2915 = vcmp.eq.f32.partialorder %v2914, 8.507059e+37
    %v2916 = vand.u32 %v2904, 2147483648
    %v2917 = vor.u32 1.1754944e-38, %v2916
    %v2918 = vsel %vm2915, %v2917, %v2913
    %v2919 = vmul.f32 %v2894, %v2918
    %v2920 = vmin.f32 %v2919, 1.0
    %v2921 = vmax.f32 %v2920, -1.0
    %v2922 = vmul.f32 %v1224, %v1224
    %v2923 = vmin.f32 16.0, %v2922
    %v2924 = vmul.f32 %v2923, 2.1237322e-06
    %v2925 = vadd.f32 %v2924, 0.00028619796
    %v2926 = vmul.f32 %v2923, %v2925
    %v2927 = vadd.f32 %v2926, 0.0036580483
    %v2928 = vmul.f32 %v2923, %v2927
    %v2929 = vadd.f32 %v2928, 0.05243302
    %v2930 = vmul.f32 %v2923, %v2929
    %v2931 = vadd.f32 %v2930, 0.18741608
    %v2932 = vmul.f32 %v2923, %v2931
    %v2933 = vadd.f32 %v2932, 1.1283791
    %v2934 = vmul.f32 %v1224, %v2933
    %v2935 = vmul.f32 %v2923, 3.8918573e-05
    %v2936 = vadd.f32 %v2935, 0.001143296
    %v2937 = vmul.f32 %v2923, %v2936
    %v2938 = vadd.f32 %v2937, 0.014752088
    %v2939 = vmul.f32 %v2923, %v2938
    %v2940 = vadd.f32 %v2939, 0.112945676
    %v2941 = vmul.f32 %v2923, %v2940
    %v2942 = vadd.f32 %v2941, 0.4994258
    %v2943 = vmul.f32 %v2923, %v2942
    %v2944 = vadd.f32 %v2943, 1.0
    %v2945 = vrcp.pop %v2944
    %v2946 = vmul.f32 %v2944, %v2945
    %v2947 = vsub.f32 1.0, %v2946
    %v2948 = vmul.f32 %v2945, %v2947
    %v2949 = vadd.f32 %v2945, %v2948
    %vm2950 = vweird.f32 %v2944
    %vm2951 = vweird.f32 %v2945
    %vm2952 = vmor %vm2950, %vm2951
    %v2953 = vsel %vm2952, %v2945, %v2949
    %v2954 = vand.u32 2147483647, %v2944
    %vm2955 = vcmp.eq.f32.partialorder %v2954, 8.507059e+37
    %v2956 = vand.u32 %v2944, 2147483648
    %v2957 = vor.u32 1.1754944e-38, %v2956
    %v2958 = vsel %vm2955, %v2957, %v2953
    %v2959 = vmul.f32 %v2934, %v2958
    %v2960 = vmin.f32 %v2959, 1.0
    %v2961 = vmax.f32 %v2960, -1.0
    %v2962 = vmul.f32 %v1225, %v1225
    %v2963 = vmin.f32 16.0, %v2962
    %v2964 = vmul.f32 %v2963, 2.1237322e-06
    %v2965 = vadd.f32 %v2964, 0.00028619796
    %v2966 = vmul.f32 %v2963, %v2965
    %v2967 = vadd.f32 %v2966, 0.0036580483
    %v2968 = vmul.f32 %v2963, %v2967
    %v2969 = vadd.f32 %v2968, 0.05243302
    %v2970 = vmul.f32 %v2963, %v2969
    %v2971 = vadd.f32 %v2970, 0.18741608
    %v2972 = vmul.f32 %v2963, %v2971
    %v2973 = vadd.f32 %v2972, 1.1283791
    %v2974 = vmul.f32 %v1225, %v2973
    %v2975 = vmul.f32 %v2963, 3.8918573e-05
    %v2976 = vadd.f32 %v2975, 0.001143296
    %v2977 = vmul.f32 %v2963, %v2976
    %v2978 = vadd.f32 %v2977, 0.014752088
    %v2979 = vmul.f32 %v2963, %v2978
    %v2980 = vadd.f32 %v2979, 0.112945676
    %v2981 = vmul.f32 %v2963, %v2980
    %v2982 = vadd.f32 %v2981, 0.4994258
    %v2983 = vmul.f32 %v2963, %v2982
    %v2984 = vadd.f32 %v2983, 1.0
    %v2985 = vrcp.pop %v2984
    %v2986 = vmul.f32 %v2984, %v2985
    %v2987 = vsub.f32 1.0, %v2986
    %v2988 = vmul.f32 %v2985, %v2987
    %v2989 = vadd.f32 %v2985, %v2988
    %vm2990 = vweird.f32 %v2984
    %vm2991 = vweird.f32 %v2985
    %vm2992 = vmor %vm2990, %vm2991
    %v2993 = vsel %vm2992, %v2985, %v2989
    %v2994 = vand.u32 2147483647, %v2984
    %vm2995 = vcmp.eq.f32.partialorder %v2994, 8.507059e+37
    %v2996 = vand.u32 %v2984, 2147483648
    %v2997 = vor.u32 1.1754944e-38, %v2996
    %v2998 = vsel %vm2995, %v2997, %v2993
    %v2999 = vmul.f32 %v2974, %v2998
    %v3000 = vmin.f32 %v2999, 1.0
    %v3001 = vmax.f32 %v3000, -1.0
    %v3002 = vmul.f32 %v1226, %v1226
    %v3003 = vmin.f32 16.0, %v3002
    %v3004 = vmul.f32 %v3003, 2.1237322e-06
    %v3005 = vadd.f32 %v3004, 0.00028619796
    %v3006 = vmul.f32 %v3003, %v3005
    %v3007 = vadd.f32 %v3006, 0.0036580483
    %v3008 = vmul.f32 %v3003, %v3007
    %v3009 = vadd.f32 %v3008, 0.05243302
    %v3010 = vmul.f32 %v3003, %v3009
    %v3011 = vadd.f32 %v3010, 0.18741608
    %v3012 = vmul.f32 %v3003, %v3011
    %v3013 = vadd.f32 %v3012, 1.1283791
    %v3014 = vmul.f32 %v1226, %v3013
    %v3015 = vmul.f32 %v3003, 3.8918573e-05
    %v3016 = vadd.f32 %v3015, 0.001143296
    %v3017 = vmul.f32 %v3003, %v3016
    %v3018 = vadd.f32 %v3017, 0.014752088
    %v3019 = vmul.f32 %v3003, %v3018
    %v3020 = vadd.f32 %v3019, 0.112945676
    %v3021 = vmul.f32 %v3003, %v3020
    %v3022 = vadd.f32 %v3021, 0.4994258
    %v3023 = vmul.f32 %v3003, %v3022
    %v3024 = vadd.f32 %v3023, 1.0
    %v3025 = vrcp.pop %v3024
    %v3026 = vmul.f32 %v3024, %v3025
    %v3027 = vsub.f32 1.0, %v3026
    %v3028 = vmul.f32 %v3025, %v3027
    %v3029 = vadd.f32 %v3025, %v3028
    %vm3030 = vweird.f32 %v3024
    %vm3031 = vweird.f32 %v3025
    %vm3032 = vmor %vm3030, %vm3031
    %v3033 = vsel %vm3032, %v3025, %v3029
    %v3034 = vand.u32 2147483647, %v3024
    %vm3035 = vcmp.eq.f32.partialorder %v3034, 8.507059e+37
    %v3036 = vand.u32 %v3024, 2147483648
    %v3037 = vor.u32 1.1754944e-38, %v3036
    %v3038 = vsel %vm3035, %v3037, %v3033
    %v3039 = vmul.f32 %v3014, %v3038
    %v3040 = vmin.f32 %v3039, 1.0
    %v3041 = vmax.f32 %v3040, -1.0
    %v3042 = vmul.f32 %v1227, %v1227
    %v3043 = vmin.f32 16.0, %v3042
    %v3044 = vmul.f32 %v3043, 2.1237322e-06
    %v3045 = vadd.f32 %v3044, 0.00028619796
    %v3046 = vmul.f32 %v3043, %v3045
    %v3047 = vadd.f32 %v3046, 0.0036580483
    %v3048 = vmul.f32 %v3043, %v3047
    %v3049 = vadd.f32 %v3048, 0.05243302
    %v3050 = vmul.f32 %v3043, %v3049
    %v3051 = vadd.f32 %v3050, 0.18741608
    %v3052 = vmul.f32 %v3043, %v3051
    %v3053 = vadd.f32 %v3052, 1.1283791
    %v3054 = vmul.f32 %v1227, %v3053
    %v3055 = vmul.f32 %v3043, 3.8918573e-05
    %v3056 = vadd.f32 %v3055, 0.001143296
    %v3057 = vmul.f32 %v3043, %v3056
    %v3058 = vadd.f32 %v3057, 0.014752088
    %v3059 = vmul.f32 %v3043, %v3058
    %v3060 = vadd.f32 %v3059, 0.112945676
    %v3061 = vmul.f32 %v3043, %v3060
    %v3062 = vadd.f32 %v3061, 0.4994258
    %v3063 = vmul.f32 %v3043, %v3062
    %v3064 = vadd.f32 %v3063, 1.0
    %v3065 = vrcp.pop %v3064
    %v3066 = vmul.f32 %v3064, %v3065
    %v3067 = vsub.f32 1.0, %v3066
    %v3068 = vmul.f32 %v3065, %v3067
    %v3069 = vadd.f32 %v3065, %v3068
    %vm3070 = vweird.f32 %v3064
    %vm3071 = vweird.f32 %v3065
    %vm3072 = vmor %vm3070, %vm3071
    %v3073 = vsel %vm3072, %v3065, %v3069
    %v3074 = vand.u32 2147483647, %v3064
    %vm3075 = vcmp.eq.f32.partialorder %v3074, 8.507059e+37
    %v3076 = vand.u32 %v3064, 2147483648
    %v3077 = vor.u32 1.1754944e-38, %v3076
    %v3078 = vsel %vm3075, %v3077, %v3073
    %v3079 = vmul.f32 %v3054, %v3078
    %v3080 = vmin.f32 %v3079, 1.0
    %v3081 = vmax.f32 %v3080, -1.0
    %v3082 = vmul.f32 %v1228, %v1228
    %v3083 = vmin.f32 16.0, %v3082
    %v3084 = vmul.f32 %v3083, 2.1237322e-06
    %v3085 = vadd.f32 %v3084, 0.00028619796
    %v3086 = vmul.f32 %v3083, %v3085
    %v3087 = vadd.f32 %v3086, 0.0036580483
    %v3088 = vmul.f32 %v3083, %v3087
    %v3089 = vadd.f32 %v3088, 0.05243302
    %v3090 = vmul.f32 %v3083, %v3089
    %v3091 = vadd.f32 %v3090, 0.18741608
    %v3092 = vmul.f32 %v3083, %v3091
    %v3093 = vadd.f32 %v3092, 1.1283791
    %v3094 = vmul.f32 %v1228, %v3093
    %v3095 = vmul.f32 %v3083, 3.8918573e-05
    %v3096 = vadd.f32 %v3095, 0.001143296
    %v3097 = vmul.f32 %v3083, %v3096
    %v3098 = vadd.f32 %v3097, 0.014752088
    %v3099 = vmul.f32 %v3083, %v3098
    %v3100 = vadd.f32 %v3099, 0.112945676
    %v3101 = vmul.f32 %v3083, %v3100
    %v3102 = vadd.f32 %v3101, 0.4994258
    %v3103 = vmul.f32 %v3083, %v3102
    %v3104 = vadd.f32 %v3103, 1.0
    %v3105 = vrcp.pop %v3104
    %v3106 = vmul.f32 %v3104, %v3105
    %v3107 = vsub.f32 1.0, %v3106
    %v3108 = vmul.f32 %v3105, %v3107
    %v3109 = vadd.f32 %v3105, %v3108
    %vm3110 = vweird.f32 %v3104
    %vm3111 = vweird.f32 %v3105
    %vm3112 = vmor %vm3110, %vm3111
    %v3113 = vsel %vm3112, %v3105, %v3109
    %v3114 = vand.u32 2147483647, %v3104
    %vm3115 = vcmp.eq.f32.partialorder %v3114, 8.507059e+37
    %v3116 = vand.u32 %v3104, 2147483648
    %v3117 = vor.u32 1.1754944e-38, %v3116
    %v3118 = vsel %vm3115, %v3117, %v3113
    %v3119 = vmul.f32 %v3094, %v3118
    %v3120 = vmin.f32 %v3119, 1.0
    %v3121 = vmax.f32 %v3120, -1.0
    %v3122 = vmul.f32 %v1229, %v1229
    %v3123 = vmin.f32 16.0, %v3122
    %v3124 = vmul.f32 %v3123, 2.1237322e-06
    %v3125 = vadd.f32 %v3124, 0.00028619796
    %v3126 = vmul.f32 %v3123, %v3125
    %v3127 = vadd.f32 %v3126, 0.0036580483
    %v3128 = vmul.f32 %v3123, %v3127
    %v3129 = vadd.f32 %v3128, 0.05243302
    %v3130 = vmul.f32 %v3123, %v3129
    %v3131 = vadd.f32 %v3130, 0.18741608
    %v3132 = vmul.f32 %v3123, %v3131
    %v3133 = vadd.f32 %v3132, 1.1283791
    %v3134 = vmul.f32 %v1229, %v3133
    %v3135 = vmul.f32 %v3123, 3.8918573e-05
    %v3136 = vadd.f32 %v3135, 0.001143296
    %v3137 = vmul.f32 %v3123, %v3136
    %v3138 = vadd.f32 %v3137, 0.014752088
    %v3139 = vmul.f32 %v3123, %v3138
    %v3140 = vadd.f32 %v3139, 0.112945676
    %v3141 = vmul.f32 %v3123, %v3140
    %v3142 = vadd.f32 %v3141, 0.4994258
    %v3143 = vmul.f32 %v3123, %v3142
    %v3144 = vadd.f32 %v3143, 1.0
    %v3145 = vrcp.pop %v3144
    %v3146 = vmul.f32 %v3144, %v3145
    %v3147 = vsub.f32 1.0, %v3146
    %v3148 = vmul.f32 %v3145, %v3147
    %v3149 = vadd.f32 %v3145, %v3148
    %vm3150 = vweird.f32 %v3144
    %vm3151 = vweird.f32 %v3145
    %vm3152 = vmor %vm3150, %vm3151
    %v3153 = vsel %vm3152, %v3145, %v3149
    %v3154 = vand.u32 2147483647, %v3144
    %vm3155 = vcmp.eq.f32.partialorder %v3154, 8.507059e+37
    %v3156 = vand.u32 %v3144, 2147483648
    %v3157 = vor.u32 1.1754944e-38, %v3156
    %v3158 = vsel %vm3155, %v3157, %v3153
    %v3159 = vmul.f32 %v3134, %v3158
    %v3160 = vmin.f32 %v3159, 1.0
    %v3161 = vmax.f32 %v3160, -1.0
    %v3162 = vmul.f32 %v1230, %v1230
    %v3163 = vmin.f32 16.0, %v3162
    %v3164 = vmul.f32 %v3163, 2.1237322e-06
    %v3165 = vadd.f32 %v3164, 0.00028619796
    %v3166 = vmul.f32 %v3163, %v3165
    %v3167 = vadd.f32 %v3166, 0.0036580483
    %v3168 = vmul.f32 %v3163, %v3167
    %v3169 = vadd.f32 %v3168, 0.05243302
    %v3170 = vmul.f32 %v3163, %v3169
    %v3171 = vadd.f32 %v3170, 0.18741608
    %v3172 = vmul.f32 %v3163, %v3171
    %v3173 = vadd.f32 %v3172, 1.1283791
    %v3174 = vmul.f32 %v1230, %v3173
    %v3175 = vmul.f32 %v3163, 3.8918573e-05
    %v3176 = vadd.f32 %v3175, 0.001143296
    %v3177 = vmul.f32 %v3163, %v3176
    %v3178 = vadd.f32 %v3177, 0.014752088
    %v3179 = vmul.f32 %v3163, %v3178
    %v3180 = vadd.f32 %v3179, 0.112945676
    %v3181 = vmul.f32 %v3163, %v3180
    %v3182 = vadd.f32 %v3181, 0.4994258
    %v3183 = vmul.f32 %v3163, %v3182
    %v3184 = vadd.f32 %v3183, 1.0
    %v3185 = vrcp.pop %v3184
    %v3186 = vmul.f32 %v3184, %v3185
    %v3187 = vsub.f32 1.0, %v3186
    %v3188 = vmul.f32 %v3185, %v3187
    %v3189 = vadd.f32 %v3185, %v3188
    %vm3190 = vweird.f32 %v3184
    %vm3191 = vweird.f32 %v3185
    %vm3192 = vmor %vm3190, %vm3191
    %v3193 = vsel %vm3192, %v3185, %v3189
    %v3194 = vand.u32 2147483647, %v3184
    %vm3195 = vcmp.eq.f32.partialorder %v3194, 8.507059e+37
    %v3196 = vand.u32 %v3184, 2147483648
    %v3197 = vor.u32 1.1754944e-38, %v3196
    %v3198 = vsel %vm3195, %v3197, %v3193
    %v3199 = vmul.f32 %v3174, %v3198
    %v3200 = vmin.f32 %v3199, 1.0
    %v3201 = vmax.f32 %v3200, -1.0
    %v3202 = vmul.f32 %v1231, %v1231
    %v3203 = vmin.f32 16.0, %v3202
    %v3204 = vmul.f32 %v3203, 2.1237322e-06
    %v3205 = vadd.f32 %v3204, 0.00028619796
    %v3206 = vmul.f32 %v3203, %v3205
    %v3207 = vadd.f32 %v3206, 0.0036580483
    %v3208 = vmul.f32 %v3203, %v3207
    %v3209 = vadd.f32 %v3208, 0.05243302
    %v3210 = vmul.f32 %v3203, %v3209
    %v3211 = vadd.f32 %v3210, 0.18741608
    %v3212 = vmul.f32 %v3203, %v3211
    %v3213 = vadd.f32 %v3212, 1.1283791
    %v3214 = vmul.f32 %v1231, %v3213
    %v3215 = vmul.f32 %v3203, 3.8918573e-05
    %v3216 = vadd.f32 %v3215, 0.001143296
    %v3217 = vmul.f32 %v3203, %v3216
    %v3218 = vadd.f32 %v3217, 0.014752088
    %v3219 = vmul.f32 %v3203, %v3218
    %v3220 = vadd.f32 %v3219, 0.112945676
    %v3221 = vmul.f32 %v3203, %v3220
    %v3222 = vadd.f32 %v3221, 0.4994258
    %v3223 = vmul.f32 %v3203, %v3222
    %v3224 = vadd.f32 %v3223, 1.0
    %v3225 = vrcp.pop %v3224
    %v3226 = vmul.f32 %v3224, %v3225
    %v3227 = vsub.f32 1.0, %v3226
    %v3228 = vmul.f32 %v3225, %v3227
    %v3229 = vadd.f32 %v3225, %v3228
    %vm3230 = vweird.f32 %v3224
    %vm3231 = vweird.f32 %v3225
    %vm3232 = vmor %vm3230, %vm3231
    %v3233 = vsel %vm3232, %v3225, %v3229
    %v3234 = vand.u32 2147483647, %v3224
    %vm3235 = vcmp.eq.f32.partialorder %v3234, 8.507059e+37
    %v3236 = vand.u32 %v3224, 2147483648
    %v3237 = vor.u32 1.1754944e-38, %v3236
    %v3238 = vsel %vm3235, %v3237, %v3233
    %v3239 = vmul.f32 %v3214, %v3238
    %v3240 = vmin.f32 %v3239, 1.0
    %v3241 = vmax.f32 %v3240, -1.0
    %v3242 = vmul.f32 %v1232, %v1232
    %v3243 = vmin.f32 16.0, %v3242
    %v3244 = vmul.f32 %v3243, 2.1237322e-06
    %v3245 = vadd.f32 %v3244, 0.00028619796
    %v3246 = vmul.f32 %v3243, %v3245
    %v3247 = vadd.f32 %v3246, 0.0036580483
    %v3248 = vmul.f32 %v3243, %v3247
    %v3249 = vadd.f32 %v3248, 0.05243302
    %v3250 = vmul.f32 %v3243, %v3249
    %v3251 = vadd.f32 %v3250, 0.18741608
    %v3252 = vmul.f32 %v3243, %v3251
    %v3253 = vadd.f32 %v3252, 1.1283791
    %v3254 = vmul.f32 %v1232, %v3253
    %v3255 = vmul.f32 %v3243, 3.8918573e-05
    %v3256 = vadd.f32 %v3255, 0.001143296
    %v3257 = vmul.f32 %v3243, %v3256
    %v3258 = vadd.f32 %v3257, 0.014752088
    %v3259 = vmul.f32 %v3243, %v3258
    %v3260 = vadd.f32 %v3259, 0.112945676
    %v3261 = vmul.f32 %v3243, %v3260
    %v3262 = vadd.f32 %v3261, 0.4994258
    %v3263 = vmul.f32 %v3243, %v3262
    %v3264 = vadd.f32 %v3263, 1.0
    %v3265 = vrcp.pop %v3264
    %v3266 = vmul.f32 %v3264, %v3265
    %v3267 = vsub.f32 1.0, %v3266
    %v3268 = vmul.f32 %v3265, %v3267
    %v3269 = vadd.f32 %v3265, %v3268
    %vm3270 = vweird.f32 %v3264
    %vm3271 = vweird.f32 %v3265
    %vm3272 = vmor %vm3270, %vm3271
    %v3273 = vsel %vm3272, %v3265, %v3269
    %v3274 = vand.u32 2147483647, %v3264
    %vm3275 = vcmp.eq.f32.partialorder %v3274, 8.507059e+37
    %v3276 = vand.u32 %v3264, 2147483648
    %v3277 = vor.u32 1.1754944e-38, %v3276
    %v3278 = vsel %vm3275, %v3277, %v3273
    %v3279 = vmul.f32 %v3254, %v3278
    %v3280 = vmin.f32 %v3279, 1.0
    %v3281 = vmax.f32 %v3280, -1.0
    %v3282 = vmul.f32 %v1233, %v1233
    %v3283 = vmin.f32 16.0, %v3282
    %v3284 = vmul.f32 %v3283, 2.1237322e-06
    %v3285 = vadd.f32 %v3284, 0.00028619796
    %v3286 = vmul.f32 %v3283, %v3285
    %v3287 = vadd.f32 %v3286, 0.0036580483
    %v3288 = vmul.f32 %v3283, %v3287
    %v3289 = vadd.f32 %v3288, 0.05243302
    %v3290 = vmul.f32 %v3283, %v3289
    %v3291 = vadd.f32 %v3290, 0.18741608
    %v3292 = vmul.f32 %v3283, %v3291
    %v3293 = vadd.f32 %v3292, 1.1283791
    %v3294 = vmul.f32 %v1233, %v3293
    %v3295 = vmul.f32 %v3283, 3.8918573e-05
    %v3296 = vadd.f32 %v3295, 0.001143296
    %v3297 = vmul.f32 %v3283, %v3296
    %v3298 = vadd.f32 %v3297, 0.014752088
    %v3299 = vmul.f32 %v3283, %v3298
    %v3300 = vadd.f32 %v3299, 0.112945676
    %v3301 = vmul.f32 %v3283, %v3300
    %v3302 = vadd.f32 %v3301, 0.4994258
    %v3303 = vmul.f32 %v3283, %v3302
    %v3304 = vadd.f32 %v3303, 1.0
    %v3305 = vrcp.pop %v3304
    %v3306 = vmul.f32 %v3304, %v3305
    %v3307 = vsub.f32 1.0, %v3306
    %v3308 = vmul.f32 %v3305, %v3307
    %v3309 = vadd.f32 %v3305, %v3308
    %vm3310 = vweird.f32 %v3304
    %vm3311 = vweird.f32 %v3305
    %vm3312 = vmor %vm3310, %vm3311
    %v3313 = vsel %vm3312, %v3305, %v3309
    %v3314 = vand.u32 2147483647, %v3304
    %vm3315 = vcmp.eq.f32.partialorder %v3314, 8.507059e+37
    %v3316 = vand.u32 %v3304, 2147483648
    %v3317 = vor.u32 1.1754944e-38, %v3316
    %v3318 = vsel %vm3315, %v3317, %v3313
    %v3319 = vmul.f32 %v3294, %v3318
    %v3320 = vmin.f32 %v3319, 1.0
    %v3321 = vmax.f32 %v3320, -1.0
    %v3322 = vmul.f32 %v1234, %v1234
    %v3323 = vmin.f32 16.0, %v3322
    %v3324 = vmul.f32 %v3323, 2.1237322e-06
    %v3325 = vadd.f32 %v3324, 0.00028619796
    %v3326 = vmul.f32 %v3323, %v3325
    %v3327 = vadd.f32 %v3326, 0.0036580483
    %v3328 = vmul.f32 %v3323, %v3327
    %v3329 = vadd.f32 %v3328, 0.05243302
    %v3330 = vmul.f32 %v3323, %v3329
    %v3331 = vadd.f32 %v3330, 0.18741608
    %v3332 = vmul.f32 %v3323, %v3331
    %v3333 = vadd.f32 %v3332, 1.1283791
    %v3334 = vmul.f32 %v1234, %v3333
    %v3335 = vmul.f32 %v3323, 3.8918573e-05
    %v3336 = vadd.f32 %v3335, 0.001143296
    %v3337 = vmul.f32 %v3323, %v3336
    %v3338 = vadd.f32 %v3337, 0.014752088
    %v3339 = vmul.f32 %v3323, %v3338
    %v3340 = vadd.f32 %v3339, 0.112945676
    %v3341 = vmul.f32 %v3323, %v3340
    %v3342 = vadd.f32 %v3341, 0.4994258
    %v3343 = vmul.f32 %v3323, %v3342
    %v3344 = vadd.f32 %v3343, 1.0
    %v3345 = vrcp.pop %v3344
    %v3346 = vmul.f32 %v3344, %v3345
    %v3347 = vsub.f32 1.0, %v3346
    %v3348 = vmul.f32 %v3345, %v3347
    %v3349 = vadd.f32 %v3345, %v3348
    %vm3350 = vweird.f32 %v3344
    %vm3351 = vweird.f32 %v3345
    %vm3352 = vmor %vm3350, %vm3351
    %v3353 = vsel %vm3352, %v3345, %v3349
    %v3354 = vand.u32 2147483647, %v3344
    %vm3355 = vcmp.eq.f32.partialorder %v3354, 8.507059e+37
    %v3356 = vand.u32 %v3344, 2147483648
    %v3357 = vor.u32 1.1754944e-38, %v3356
    %v3358 = vsel %vm3355, %v3357, %v3353
    %v3359 = vmul.f32 %v3334, %v3358
    %v3360 = vmin.f32 %v3359, 1.0
    %v3361 = vmax.f32 %v3360, -1.0
    %v3362 = vmul.f32 %v1235, %v1235
    %v3363 = vmin.f32 16.0, %v3362
    %v3364 = vmul.f32 %v3363, 2.1237322e-06
    %v3365 = vadd.f32 %v3364, 0.00028619796
    %v3366 = vmul.f32 %v3363, %v3365
    %v3367 = vadd.f32 %v3366, 0.0036580483
    %v3368 = vmul.f32 %v3363, %v3367
    %v3369 = vadd.f32 %v3368, 0.05243302
    %v3370 = vmul.f32 %v3363, %v3369
    %v3371 = vadd.f32 %v3370, 0.18741608
    %v3372 = vmul.f32 %v3363, %v3371
    %v3373 = vadd.f32 %v3372, 1.1283791
    %v3374 = vmul.f32 %v1235, %v3373
    %v3375 = vmul.f32 %v3363, 3.8918573e-05
    %v3376 = vadd.f32 %v3375, 0.001143296
    %v3377 = vmul.f32 %v3363, %v3376
    %v3378 = vadd.f32 %v3377, 0.014752088
    %v3379 = vmul.f32 %v3363, %v3378
    %v3380 = vadd.f32 %v3379, 0.112945676
    %v3381 = vmul.f32 %v3363, %v3380
    %v3382 = vadd.f32 %v3381, 0.4994258
    %v3383 = vmul.f32 %v3363, %v3382
    %v3384 = vadd.f32 %v3383, 1.0
    %v3385 = vrcp.pop %v3384
    %v3386 = vmul.f32 %v3384, %v3385
    %v3387 = vsub.f32 1.0, %v3386
    %v3388 = vmul.f32 %v3385, %v3387
    %v3389 = vadd.f32 %v3385, %v3388
    %vm3390 = vweird.f32 %v3384
    %vm3391 = vweird.f32 %v3385
    %vm3392 = vmor %vm3390, %vm3391
    %v3393 = vsel %vm3392, %v3385, %v3389
    %v3394 = vand.u32 2147483647, %v3384
    %vm3395 = vcmp.eq.f32.partialorder %v3394, 8.507059e+37
    %v3396 = vand.u32 %v3384, 2147483648
    %v3397 = vor.u32 1.1754944e-38, %v3396
    %v3398 = vsel %vm3395, %v3397, %v3393
    %v3399 = vmul.f32 %v3374, %v3398
    %v3400 = vmin.f32 %v3399, 1.0
    %v3401 = vmax.f32 %v3400, -1.0
    %v3402 = vmul.f32 %v1236, %v1236
    %v3403 = vmin.f32 16.0, %v3402
    %v3404 = vmul.f32 %v3403, 2.1237322e-06
    %v3405 = vadd.f32 %v3404, 0.00028619796
    %v3406 = vmul.f32 %v3403, %v3405
    %v3407 = vadd.f32 %v3406, 0.0036580483
    %v3408 = vmul.f32 %v3403, %v3407
    %v3409 = vadd.f32 %v3408, 0.05243302
    %v3410 = vmul.f32 %v3403, %v3409
    %v3411 = vadd.f32 %v3410, 0.18741608
    %v3412 = vmul.f32 %v3403, %v3411
    %v3413 = vadd.f32 %v3412, 1.1283791
    %v3414 = vmul.f32 %v1236, %v3413
    %v3415 = vmul.f32 %v3403, 3.8918573e-05
    %v3416 = vadd.f32 %v3415, 0.001143296
    %v3417 = vmul.f32 %v3403, %v3416
    %v3418 = vadd.f32 %v3417, 0.014752088
    %v3419 = vmul.f32 %v3403, %v3418
    %v3420 = vadd.f32 %v3419, 0.112945676
    %v3421 = vmul.f32 %v3403, %v3420
    %v3422 = vadd.f32 %v3421, 0.4994258
    %v3423 = vmul.f32 %v3403, %v3422
    %v3424 = vadd.f32 %v3423, 1.0
    %v3425 = vrcp.pop %v3424
    %v3426 = vmul.f32 %v3424, %v3425
    %v3427 = vsub.f32 1.0, %v3426
    %v3428 = vmul.f32 %v3425, %v3427
    %v3429 = vadd.f32 %v3425, %v3428
    %vm3430 = vweird.f32 %v3424
    %vm3431 = vweird.f32 %v3425
    %vm3432 = vmor %vm3430, %vm3431
    %v3433 = vsel %vm3432, %v3425, %v3429
    %v3434 = vand.u32 2147483647, %v3424
    %vm3435 = vcmp.eq.f32.partialorder %v3434, 8.507059e+37
    %v3436 = vand.u32 %v3424, 2147483648
    %v3437 = vor.u32 1.1754944e-38, %v3436
    %v3438 = vsel %vm3435, %v3437, %v3433
    %v3439 = vmul.f32 %v3414, %v3438
    %v3440 = vmin.f32 %v3439, 1.0
    %v3441 = vmax.f32 %v3440, -1.0
    %v3442 = vmul.f32 %v1237, %v1237
    %v3443 = vmin.f32 16.0, %v3442
    %v3444 = vmul.f32 %v3443, 2.1237322e-06
    %v3445 = vadd.f32 %v3444, 0.00028619796
    %v3446 = vmul.f32 %v3443, %v3445
    %v3447 = vadd.f32 %v3446, 0.0036580483
    %v3448 = vmul.f32 %v3443, %v3447
    %v3449 = vadd.f32 %v3448, 0.05243302
    %v3450 = vmul.f32 %v3443, %v3449
    %v3451 = vadd.f32 %v3450, 0.18741608
    %v3452 = vmul.f32 %v3443, %v3451
    %v3453 = vadd.f32 %v3452, 1.1283791
    %v3454 = vmul.f32 %v1237, %v3453
    %v3455 = vmul.f32 %v3443, 3.8918573e-05
    %v3456 = vadd.f32 %v3455, 0.001143296
    %v3457 = vmul.f32 %v3443, %v3456
    %v3458 = vadd.f32 %v3457, 0.014752088
    %v3459 = vmul.f32 %v3443, %v3458
    %v3460 = vadd.f32 %v3459, 0.112945676
    %v3461 = vmul.f32 %v3443, %v3460
    %v3462 = vadd.f32 %v3461, 0.4994258
    %v3463 = vmul.f32 %v3443, %v3462
    %v3464 = vadd.f32 %v3463, 1.0
    %v3465 = vrcp.pop %v3464
    %v3466 = vmul.f32 %v3464, %v3465
    %v3467 = vsub.f32 1.0, %v3466
    %v3468 = vmul.f32 %v3465, %v3467
    %v3469 = vadd.f32 %v3465, %v3468
    %vm3470 = vweird.f32 %v3464
    %vm3471 = vweird.f32 %v3465
    %vm3472 = vmor %vm3470, %vm3471
    %v3473 = vsel %vm3472, %v3465, %v3469
    %v3474 = vand.u32 2147483647, %v3464
    %vm3475 = vcmp.eq.f32.partialorder %v3474, 8.507059e+37
    %v3476 = vand.u32 %v3464, 2147483648
    %v3477 = vor.u32 1.1754944e-38, %v3476
    %v3478 = vsel %vm3475, %v3477, %v3473
    %v3479 = vmul.f32 %v3454, %v3478
    %v3480 = vmin.f32 %v3479, 1.0
    %v3481 = vmax.f32 %v3480, -1.0
    %v3482 = vmul.f32 %v1238, %v1238
    %v3483 = vmin.f32 16.0, %v3482
    %v3484 = vmul.f32 %v3483, 2.1237322e-06
    %v3485 = vadd.f32 %v3484, 0.00028619796
    %v3486 = vmul.f32 %v3483, %v3485
    %v3487 = vadd.f32 %v3486, 0.0036580483
    %v3488 = vmul.f32 %v3483, %v3487
    %v3489 = vadd.f32 %v3488, 0.05243302
    %v3490 = vmul.f32 %v3483, %v3489
    %v3491 = vadd.f32 %v3490, 0.18741608
    %v3492 = vmul.f32 %v3483, %v3491
    %v3493 = vadd.f32 %v3492, 1.1283791
    %v3494 = vmul.f32 %v1238, %v3493
    %v3495 = vmul.f32 %v3483, 3.8918573e-05
    %v3496 = vadd.f32 %v3495, 0.001143296
    %v3497 = vmul.f32 %v3483, %v3496
    %v3498 = vadd.f32 %v3497, 0.014752088
    %v3499 = vmul.f32 %v3483, %v3498
    %v3500 = vadd.f32 %v3499, 0.112945676
    %v3501 = vmul.f32 %v3483, %v3500
    %v3502 = vadd.f32 %v3501, 0.4994258
    %v3503 = vmul.f32 %v3483, %v3502
    %v3504 = vadd.f32 %v3503, 1.0
    %v3505 = vrcp.pop %v3504
    %v3506 = vmul.f32 %v3504, %v3505
    %v3507 = vsub.f32 1.0, %v3506
    %v3508 = vmul.f32 %v3505, %v3507
    %v3509 = vadd.f32 %v3505, %v3508
    %vm3510 = vweird.f32 %v3504
    %vm3511 = vweird.f32 %v3505
    %vm3512 = vmor %vm3510, %vm3511
    %v3513 = vsel %vm3512, %v3505, %v3509
    %v3514 = vand.u32 2147483647, %v3504
    %vm3515 = vcmp.eq.f32.partialorder %v3514, 8.507059e+37
    %v3516 = vand.u32 %v3504, 2147483648
    %v3517 = vor.u32 1.1754944e-38, %v3516
    %v3518 = vsel %vm3515, %v3517, %v3513
    %v3519 = vmul.f32 %v3494, %v3518
    %v3520 = vmin.f32 %v3519, 1.0
    %v3521 = vmax.f32 %v3520, -1.0
    %v3522 = vmul.f32 %v1239, %v1239
    %v3523 = vmin.f32 16.0, %v3522
    %v3524 = vmul.f32 %v3523, 2.1237322e-06
    %v3525 = vadd.f32 %v3524, 0.00028619796
    %v3526 = vmul.f32 %v3523, %v3525
    %v3527 = vadd.f32 %v3526, 0.0036580483
    %v3528 = vmul.f32 %v3523, %v3527
    %v3529 = vadd.f32 %v3528, 0.05243302
    %v3530 = vmul.f32 %v3523, %v3529
    %v3531 = vadd.f32 %v3530, 0.18741608
    %v3532 = vmul.f32 %v3523, %v3531
    %v3533 = vadd.f32 %v3532, 1.1283791
    %v3534 = vmul.f32 %v1239, %v3533
    %v3535 = vmul.f32 %v3523, 3.8918573e-05
    %v3536 = vadd.f32 %v3535, 0.001143296
    %v3537 = vmul.f32 %v3523, %v3536
    %v3538 = vadd.f32 %v3537, 0.014752088
    %v3539 = vmul.f32 %v3523, %v3538
    %v3540 = vadd.f32 %v3539, 0.112945676
    %v3541 = vmul.f32 %v3523, %v3540
    %v3542 = vadd.f32 %v3541, 0.4994258
    %v3543 = vmul.f32 %v3523, %v3542
    %v3544 = vadd.f32 %v3543, 1.0
    %v3545 = vrcp.pop %v3544
    %v3546 = vmul.f32 %v3544, %v3545
    %v3547 = vsub.f32 1.0, %v3546
    %v3548 = vmul.f32 %v3545, %v3547
    %v3549 = vadd.f32 %v3545, %v3548
    %vm3550 = vweird.f32 %v3544
    %vm3551 = vweird.f32 %v3545
    %vm3552 = vmor %vm3550, %vm3551
    %v3553 = vsel %vm3552, %v3545, %v3549
    %v3554 = vand.u32 2147483647, %v3544
    %vm3555 = vcmp.eq.f32.partialorder %v3554, 8.507059e+37
    %v3556 = vand.u32 %v3544, 2147483648
    %v3557 = vor.u32 1.1754944e-38, %v3556
    %v3558 = vsel %vm3555, %v3557, %v3553
    %v3559 = vmul.f32 %v3534, %v3558
    %v3560 = vmin.f32 %v3559, 1.0
    %v3561 = vmax.f32 %v3560, -1.0
    %v3562 = vmul.f32 %v1240, %v1240
    %v3563 = vmin.f32 16.0, %v3562
    %v3564 = vmul.f32 %v3563, 2.1237322e-06
    %v3565 = vadd.f32 %v3564, 0.00028619796
    %v3566 = vmul.f32 %v3563, %v3565
    %v3567 = vadd.f32 %v3566, 0.0036580483
    %v3568 = vmul.f32 %v3563, %v3567
    %v3569 = vadd.f32 %v3568, 0.05243302
    %v3570 = vmul.f32 %v3563, %v3569
    %v3571 = vadd.f32 %v3570, 0.18741608
    %v3572 = vmul.f32 %v3563, %v3571
    %v3573 = vadd.f32 %v3572, 1.1283791
    %v3574 = vmul.f32 %v1240, %v3573
    %v3575 = vmul.f32 %v3563, 3.8918573e-05
    %v3576 = vadd.f32 %v3575, 0.001143296
    %v3577 = vmul.f32 %v3563, %v3576
    %v3578 = vadd.f32 %v3577, 0.014752088
    %v3579 = vmul.f32 %v3563, %v3578
    %v3580 = vadd.f32 %v3579, 0.112945676
    %v3581 = vmul.f32 %v3563, %v3580
    %v3582 = vadd.f32 %v3581, 0.4994258
    %v3583 = vmul.f32 %v3563, %v3582
    %v3584 = vadd.f32 %v3583, 1.0
    %v3585 = vrcp.pop %v3584
    %v3586 = vmul.f32 %v3584, %v3585
    %v3587 = vsub.f32 1.0, %v3586
    %v3588 = vmul.f32 %v3585, %v3587
    %v3589 = vadd.f32 %v3585, %v3588
    %vm3590 = vweird.f32 %v3584
    %vm3591 = vweird.f32 %v3585
    %vm3592 = vmor %vm3590, %vm3591
    %v3593 = vsel %vm3592, %v3585, %v3589
    %v3594 = vand.u32 2147483647, %v3584
    %vm3595 = vcmp.eq.f32.partialorder %v3594, 8.507059e+37
    %v3596 = vand.u32 %v3584, 2147483648
    %v3597 = vor.u32 1.1754944e-38, %v3596
    %v3598 = vsel %vm3595, %v3597, %v3593
    %v3599 = vmul.f32 %v3574, %v3598
    %v3600 = vmin.f32 %v3599, 1.0
    %v3601 = vmax.f32 %v3600, -1.0
    %v3602 = vmul.f32 %v1241, %v1241
    %v3603 = vmin.f32 16.0, %v3602
    %v3604 = vmul.f32 %v3603, 2.1237322e-06
    %v3605 = vadd.f32 %v3604, 0.00028619796
    %v3606 = vmul.f32 %v3603, %v3605
    %v3607 = vadd.f32 %v3606, 0.0036580483
    %v3608 = vmul.f32 %v3603, %v3607
    %v3609 = vadd.f32 %v3608, 0.05243302
    %v3610 = vmul.f32 %v3603, %v3609
    %v3611 = vadd.f32 %v3610, 0.18741608
    %v3612 = vmul.f32 %v3603, %v3611
    %v3613 = vadd.f32 %v3612, 1.1283791
    %v3614 = vmul.f32 %v1241, %v3613
    %v3615 = vmul.f32 %v3603, 3.8918573e-05
    %v3616 = vadd.f32 %v3615, 0.001143296
    %v3617 = vmul.f32 %v3603, %v3616
    %v3618 = vadd.f32 %v3617, 0.014752088
    %v3619 = vmul.f32 %v3603, %v3618
    %v3620 = vadd.f32 %v3619, 0.112945676
    %v3621 = vmul.f32 %v3603, %v3620
    %v3622 = vadd.f32 %v3621, 0.4994258
    %v3623 = vmul.f32 %v3603, %v3622
    %v3624 = vadd.f32 %v3623, 1.0
    %v3625 = vrcp.pop %v3624
    %v3626 = vmul.f32 %v3624, %v3625
    %v3627 = vsub.f32 1.0, %v3626
    %v3628 = vmul.f32 %v3625, %v3627
    %v3629 = vadd.f32 %v3625, %v3628
    %vm3630 = vweird.f32 %v3624
    %vm3631 = vweird.f32 %v3625
    %vm3632 = vmor %vm3630, %vm3631
    %v3633 = vsel %vm3632, %v3625, %v3629
    %v3634 = vand.u32 2147483647, %v3624
    %vm3635 = vcmp.eq.f32.partialorder %v3634, 8.507059e+37
    %v3636 = vand.u32 %v3624, 2147483648
    %v3637 = vor.u32 1.1754944e-38, %v3636
    %v3638 = vsel %vm3635, %v3637, %v3633
    %v3639 = vmul.f32 %v3614, %v3638
    %v3640 = vmin.f32 %v3639, 1.0
    %v3641 = vmax.f32 %v3640, -1.0
    %v3642 = vadd.f32 %v1281, 1.0
    %v3643 = vadd.f32 %v1321, 1.0
    %v3644 = vadd.f32 %v1361, 1.0
    %v3645 = vadd.f32 %v1401, 1.0
    %v3646 = vadd.f32 %v1441, 1.0
    %v3647 = vadd.f32 %v1481, 1.0
    %v3648 = vadd.f32 %v1521, 1.0
    %v3649 = vadd.f32 %v1561, 1.0
    %v3650 = vadd.f32 %v1601, 1.0
    %v3651 = vadd.f32 %v1641, 1.0
    %v3652 = vadd.f32 %v1681, 1.0
    %v3653 = vadd.f32 %v1721, 1.0
    %v3654 = vadd.f32 %v1761, 1.0
    %v3655 = vadd.f32 %v1801, 1.0
    %v3656 = vadd.f32 %v1841, 1.0
    %v3657 = vadd.f32 %v1881, 1.0
    %v3658 = vadd.f32 %v1921, 1.0
    %v3659 = vadd.f32 %v1961, 1.0
    %v3660 = vadd.f32 %v2001, 1.0
    %v3661 = vadd.f32 %v2041, 1.0
    %v3662 = vadd.f32 %v2081, 1.0
    %v3663 = vadd.f32 %v2121, 1.0
    %v3664 = vadd.f32 %v2161, 1.0
    %v3665 = vadd.f32 %v2201, 1.0
    %v3666 = vadd.f32 %v2241, 1.0
    %v3667 = vadd.f32 %v2281, 1.0
    %v3668 = vadd.f32 %v2321, 1.0
    %v3669 = vadd.f32 %v2361, 1.0
    %v3670 = vadd.f32 %v2401, 1.0
    %v3671 = vadd.f32 %v2441, 1.0
    %v3672 = vadd.f32 %v2481, 1.0
    %v3673 = vadd.f32 %v2521, 1.0
    %v3674 = vadd.f32 %v2561, 1.0
    %v3675 = vadd.f32 %v2601, 1.0
    %v3676 = vadd.f32 %v2641, 1.0
    %v3677 = vadd.f32 %v2681, 1.0
    %v3678 = vadd.f32 %v2721, 1.0
    %v3679 = vadd.f32 %v2761, 1.0
    %v3680 = vadd.f32 %v2801, 1.0
    %v3681 = vadd.f32 %v2841, 1.0
    %v3682 = vadd.f32 %v2881, 1.0
    %v3683 = vadd.f32 %v2921, 1.0
    %v3684 = vadd.f32 %v2961, 1.0
    %v3685 = vadd.f32 %v3001, 1.0
    %v3686 = vadd.f32 %v3041, 1.0
    %v3687 = vadd.f32 %v3081, 1.0
    %v3688 = vadd.f32 %v3121, 1.0
    %v3689 = vadd.f32 %v3161, 1.0
    %v3690 = vadd.f32 %v3201, 1.0
    %v3691 = vadd.f32 %v3241, 1.0
    %v3692 = vadd.f32 %v3281, 1.0
    %v3693 = vadd.f32 %v3321, 1.0
    %v3694 = vadd.f32 %v3361, 1.0
    %v3695 = vadd.f32 %v3401, 1.0
    %v3696 = vadd.f32 %v3441, 1.0
    %v3697 = vadd.f32 %v3481, 1.0
    %v3698 = vadd.f32 %v3521, 1.0
    %v3699 = vadd.f32 %v3561, 1.0
    %v3700 = vadd.f32 %v3601, 1.0
    %v3701 = vadd.f32 %v3641, 1.0
    %v3702 = vmul.f32 %v1122, %v3642
    %v3703 = vmul.f32 %v1123, %v3643
    %v3704 = vmul.f32 %v1124, %v3644
    %v3705 = vmul.f32 %v1125, %v3645
    %v3706 = vmul.f32 %v1126, %v3646
    %v3707 = vmul.f32 %v1127, %v3647
    %v3708 = vmul.f32 %v1128, %v3648
    %v3709 = vmul.f32 %v1129, %v3649
    %v3710 = vmul.f32 %v1130, %v3650
    %v3711 = vmul.f32 %v1131, %v3651
    %v3712 = vmul.f32 %v1132, %v3652
    %v3713 = vmul.f32 %v1133, %v3653
    %v3714 = vmul.f32 %v1134, %v3654
    %v3715 = vmul.f32 %v1135, %v3655
    %v3716 = vmul.f32 %v1136, %v3656
    %v3717 = vmul.f32 %v1137, %v3657
    %v3718 = vmul.f32 %v1138, %v3658
    %v3719 = vmul.f32 %v1139, %v3659
    %v3720 = vmul.f32 %v1140, %v3660
    %v3721 = vmul.f32 %v1141, %v3661
    %v3722 = vmul.f32 %v1142, %v3662
    %v3723 = vmul.f32 %v1143, %v3663
    %v3724 = vmul.f32 %v1144, %v3664
    %v3725 = vmul.f32 %v1145, %v3665
    %v3726 = vmul.f32 %v1146, %v3666
    %v3727 = vmul.f32 %v1147, %v3667
    %v3728 = vmul.f32 %v1148, %v3668
    %v3729 = vmul.f32 %v1149, %v3669
    %v3730 = vmul.f32 %v1150, %v3670
    %v3731 = vmul.f32 %v1151, %v3671
    %v3732 = vmul.f32 %v1152, %v3672
    %v3733 = vmul.f32 %v1153, %v3673
    %v3734 = vmul.f32 %v1154, %v3674
    %v3735 = vmul.f32 %v1155, %v3675
    %v3736 = vmul.f32 %v1156, %v3676
    %v3737 = vmul.f32 %v1157, %v3677
    %v3738 = vmul.f32 %v1158, %v3678
    %v3739 = vmul.f32 %v1159, %v3679
    %v3740 = vmul.f32 %v1160, %v3680
    %v3741 = vmul.f32 %v1161, %v3681
    %v3742 = vmul.f32 %v1162, %v3682
    %v3743 = vmul.f32 %v1163, %v3683
    %v3744 = vmul.f32 %v1164, %v3684
    %v3745 = vmul.f32 %v1165, %v3685
    %v3746 = vmul.f32 %v1166, %v3686
    %v3747 = vmul.f32 %v1167, %v3687
    %v3748 = vmul.f32 %v1168, %v3688
    %v3749 = vmul.f32 %v1169, %v3689
    %v3750 = vmul.f32 %v1170, %v3690
    %v3751 = vmul.f32 %v1171, %v3691
    %v3752 = vmul.f32 %v1172, %v3692
    %v3753 = vmul.f32 %v1173, %v3693
    %v3754 = vmul.f32 %v1174, %v3694
    %v3755 = vmul.f32 %v1175, %v3695
    %v3756 = vmul.f32 %v1176, %v3696
    %v3757 = vmul.f32 %v1177, %v3697
    %v3758 = vmul.f32 %v1178, %v3698
    %v3759 = vmul.f32 %v1179, %v3699
    %v3760 = vmul.f32 %v1180, %v3700
    %v3761 = vmul.f32 %v1181, %v3701
    %v3762 = vpack.c.bf16 %v3704, %v3702
    %v3763 = vpack.c.bf16 %v3705, %v3703
    %v3764 = vpack.c.bf16 %v3708, %v3706
    %v3765 = vpack.c.bf16 %v3709, %v3707
    %v3766 = vpack.c.bf16 %v3712, %v3710
    %v3767 = vpack.c.bf16 %v3713, %v3711
    %v3768 = vpack.c.bf16 %v3716, %v3714
    %v3769 = vpack.c.bf16 %v3717, %v3715
    %v3770 = vpack.c.bf16 %v3720, %v3718
    %v3771 = vpack.c.bf16 %v3721, %v3719
    %v3772 = vpack.c.bf16 %v3724, %v3722
    %v3773 = vpack.c.bf16 %v3725, %v3723
    %v3774 = vpack.c.bf16 %v3728, %v3726
    %v3775 = vpack.c.bf16 %v3729, %v3727
    %v3776 = vpack.c.bf16 %v3732, %v3730
    %v3777 = vpack.c.bf16 %v3733, %v3731
    %v3778 = vpack.c.bf16 %v3736, %v3734
    %v3779 = vpack.c.bf16 %v3737, %v3735
    %v3780 = vpack.c.bf16 %v3740, %v3738
    %v3781 = vpack.c.bf16 %v3741, %v3739
    %v3782 = vpack.c.bf16 %v3744, %v3742
    %v3783 = vpack.c.bf16 %v3745, %v3743
    %v3784 = vpack.c.bf16 %v3748, %v3746
    %v3785 = vpack.c.bf16 %v3749, %v3747
    %v3786 = vpack.c.bf16 %v3752, %v3750
    %v3787 = vpack.c.bf16 %v3753, %v3751
    %v3788 = vpack.c.bf16 %v3756, %v3754
    %v3789 = vpack.c.bf16 %v3757, %v3755
    %v3790 = vpack.c.bf16 %v3760, %v3758
    %v3791 = vpack.c.bf16 %v3761, %v3759
    %v3792 = vld [vmem:[%s5] sm:$0xf]
    %v3793 = vld [vmem:[%s5 + $0x4] sm:$0xf]
    %v3794 = vld [vmem:[%s5 + $0x8] sm:$0xf]
    %v3795 = vld [vmem:[%s5 + $0xc] sm:$0xf]
    %v3796 = vld [vmem:[%s5 + $0x10] sm:$0xf]
    %v3797 = vld [vmem:[%s5 + $0x14] sm:$0xf]
    %v3798 = vld [vmem:[%s5 + $0x18] sm:$0xf]
    %v3799 = vld [vmem:[%s5 + $0x1c] sm:$0xf]
    %v3800 = vld [vmem:[%s5 + $0x20] sm:$0xf]
    %v3801 = vld [vmem:[%s5 + $0x24] sm:$0xf]
    %v3802 = vld [vmem:[%s5 + $0x28] sm:$0xf]
    %v3803 = vld [vmem:[%s5 + $0x2c] sm:$0xf]
    %v3804 = vld [vmem:[%s5 + $0x30] sm:$0xf]
    %v3805 = vld [vmem:[%s5 + $0x34] sm:$0xf]
    %v3806 = vld [vmem:[%s5 + $0x38] sm:$0xf]
    %v3807 = vld [vmem:[%s5 + $0x3c] sm:$0xf]
    %v3808 = vld [vmem:[%s5 + $0x40] sm:$0xf]
    %v3809 = vld [vmem:[%s5 + $0x44] sm:$0xf]
    %v3810 = vld [vmem:[%s5 + $0x48] sm:$0xf]
    %v3811 = vld [vmem:[%s5 + $0x4c] sm:$0xf]
    %v3812 = vld [vmem:[%s5 + $0x50] sm:$0xf]
    %v3813 = vld [vmem:[%s5 + $0x54] sm:$0xf]
    %v3814 = vld [vmem:[%s5 + $0x58] sm:$0xf]
    %v3815 = vld [vmem:[%s5 + $0x5c] sm:$0xf]
    %v3816 = vld [vmem:[%s5 + $0x60] sm:$0xf]
    %v3817 = vld [vmem:[%s5 + $0x64] sm:$0xf]
    %v3818 = vld [vmem:[%s5 + $0x68] sm:$0xf]
    %v3819 = vld [vmem:[%s5 + $0x6c] sm:$0xf]
    %v3820 = vld [vmem:[%s5 + $0x70] sm:$0xf]
    %v3821 = vld [vmem:[%s5 + $0x74] sm:$0xf]
    %v3822 = vld [vmem:[%s5 + $0x78] sm:$0xf]
    %v3823 = vld [vmem:[%s5 + $0x7c] sm:$0xf]
    %v3824 = vld [vmem:[%s6] sm:$0x1]
    %v3826 = vperm.slane %v3824, 0
    %v3860 = vunpack.c.l.b16 %v3792
    %v3861 = vunpack.c.l.b16 %v3793
    %v3862 = vunpack.c.l.b16 %v3794
    %v3863 = vunpack.c.l.b16 %v3795
    %v3864 = vunpack.c.l.b16 %v3796
    %v3865 = vunpack.c.l.b16 %v3797
    %v3866 = vunpack.c.l.b16 %v3798
    %v3867 = vunpack.c.l.b16 %v3799
    %v3868 = vunpack.c.l.b16 %v3800
    %v3869 = vunpack.c.l.b16 %v3801
    %v3870 = vunpack.c.l.b16 %v3802
    %v3871 = vunpack.c.l.b16 %v3803
    %v3872 = vunpack.c.l.b16 %v3804
    %v3873 = vunpack.c.l.b16 %v3805
    %v3874 = vunpack.c.l.b16 %v3806
    %v3875 = vunpack.c.l.b16 %v3807
    %v3876 = vunpack.c.l.b16 %v3808
    %v3877 = vunpack.c.l.b16 %v3809
    %v3878 = vunpack.c.l.b16 %v3810
    %v3879 = vunpack.c.l.b16 %v3811
    %v3880 = vunpack.c.l.b16 %v3812
    %v3881 = vunpack.c.l.b16 %v3813
    %v3882 = vunpack.c.l.b16 %v3814
    %v3883 = vunpack.c.l.b16 %v3815
    %v3884 = vunpack.c.l.b16 %v3816
    %v3885 = vunpack.c.l.b16 %v3817
    %v3886 = vunpack.c.l.b16 %v3818
    %v3887 = vunpack.c.l.b16 %v3819
    %v3888 = vunpack.c.l.b16 %v3820
    %v3889 = vunpack.c.l.b16 %v3821
    %v3890 = vunpack.c.l.b16 %v3822
    %v3891 = vunpack.c.l.b16 %v3823
    %v3892 = vpack.c.b16 %v3861, %v3860
    %v3893 = vpack.c.b16 %v3863, %v3862
    %v3894 = vpack.c.b16 %v3865, %v3864
    %v3895 = vpack.c.b16 %v3867, %v3866
    %v3896 = vpack.c.b16 %v3869, %v3868
    %v3897 = vpack.c.b16 %v3871, %v3870
    %v3898 = vpack.c.b16 %v3873, %v3872
    %v3899 = vpack.c.b16 %v3875, %v3874
    %v3900 = vpack.c.b16 %v3877, %v3876
    %v3901 = vpack.c.b16 %v3879, %v3878
    %v3902 = vpack.c.b16 %v3881, %v3880
    %v3903 = vpack.c.b16 %v3883, %v3882
    %v3904 = vpack.c.b16 %v3885, %v3884
    %v3905 = vpack.c.b16 %v3887, %v3886
    %v3906 = vpack.c.b16 %v3889, %v3888
    %v3907 = vpack.c.b16 %v3891, %v3890
    %3924 = vmatpush.bf16.msra.mxu0 %v3899
    %3925 = vmatpush.bf16.msra.mxu0 %v3898
    %3926 = vmatpush.bf16.msra.mxu0 %v3897
    %3927 = vmatpush.bf16.msra.mxu0 %v3896
    %3928 = vmatpush.bf16.msra.mxu0 %v3895
    %3929 = vmatpush.bf16.msra.mxu0 %v3894
    %3930 = vmatpush.bf16.msra.mxu0 %v3893
    %3931 = vmatpush.bf16.msra.mxu0 %v3892
    %3932 = vmatmul.bf16.gmra.mxu0 %v3762
    %v3933 = vpop.f32.mrf.mxu0
    %v3934 = vadd.f32 %v3826, %v3933
    %v3935 = vpop.f32.mrf.mxu0
    %v3936 = vadd.f32 %v3826, %v3935
    %3937 = vmatmul.bf16.gmra.mxu0 %v3764
    %v3938 = vpop.f32.mrf.mxu0
    %v3939 = vadd.f32 %v3826, %v3938
    %v3940 = vpop.f32.mrf.mxu0
    %v3941 = vadd.f32 %v3826, %v3940
    %3942 = vmatmul.bf16.gmra.mxu0 %v3766
    %v3943 = vpop.f32.mrf.mxu0
    %v3944 = vadd.f32 %v3826, %v3943
    %v3945 = vpop.f32.mrf.mxu0
    %v3946 = vadd.f32 %v3826, %v3945
    %3947 = vmatmul.bf16.gmra.mxu0 %v3768
    %v3948 = vpop.f32.mrf.mxu0
    %v3949 = vadd.f32 %v3826, %v3948
    %v3950 = vpop.f32.mrf.mxu0
    %v3951 = vadd.f32 %v3826, %v3950
    %3952 = vmatmul.bf16.gmra.mxu0 %v3770
    %v3953 = vpop.f32.mrf.mxu0
    %v3954 = vadd.f32 %v3826, %v3953
    %v3955 = vpop.f32.mrf.mxu0
    %v3956 = vadd.f32 %v3826, %v3955
    %3957 = vmatmul.bf16.gmra.mxu0 %v3772
    %v3958 = vpop.f32.mrf.mxu0
    %v3959 = vadd.f32 %v3826, %v3958
    %v3960 = vpop.f32.mrf.mxu0
    %v3961 = vadd.f32 %v3826, %v3960
    %3962 = vmatmul.bf16.gmra.mxu0 %v3774
    %v3963 = vpop.f32.mrf.mxu0
    %v3964 = vadd.f32 %v3826, %v3963
    %v3965 = vpop.f32.mrf.mxu0
    %v3966 = vadd.f32 %v3826, %v3965
    %3967 = vmatmul.bf16.gmra.mxu0 %v3776
    %v3968 = vpop.f32.mrf.mxu0
    %v3969 = vadd.f32 %v3826, %v3968
    %v3970 = vpop.f32.mrf.mxu0
    %v3971 = vadd.f32 %v3826, %v3970
    %3972 = vmatmul.bf16.gmra.mxu0 %v3778
    %v3973 = vpop.f32.mrf.mxu0
    %v3974 = vadd.f32 %v3826, %v3973
    %v3975 = vpop.f32.mrf.mxu0
    %v3976 = vadd.f32 %v3826, %v3975
    %3977 = vmatmul.bf16.gmra.mxu0 %v3780
    %v3978 = vpop.f32.mrf.mxu0
    %v3979 = vadd.f32 %v3826, %v3978
    %v3980 = vpop.f32.mrf.mxu0
    %v3981 = vadd.f32 %v3826, %v3980
    %3982 = vmatmul.bf16.gmra.mxu0 %v3782
    %v3983 = vpop.f32.mrf.mxu0
    %v3984 = vadd.f32 %v3826, %v3983
    %v3985 = vpop.f32.mrf.mxu0
    %v3986 = vadd.f32 %v3826, %v3985
    %3987 = vmatmul.bf16.gmra.mxu0 %v3784
    %v3988 = vpop.f32.mrf.mxu0
    %v3989 = vadd.f32 %v3826, %v3988
    %v3990 = vpop.f32.mrf.mxu0
    %v3991 = vadd.f32 %v3826, %v3990
    %3992 = vmatmul.bf16.gmra.mxu0 %v3786
    %v3993 = vpop.f32.mrf.mxu0
    %v3994 = vadd.f32 %v3826, %v3993
    %v3995 = vpop.f32.mrf.mxu0
    %v3996 = vadd.f32 %v3826, %v3995
    %3997 = vmatmul.bf16.gmra.mxu0 %v3788
    %v3998 = vpop.f32.mrf.mxu0
    %v3999 = vadd.f32 %v3826, %v3998
    %v4000 = vpop.f32.mrf.mxu0
    %v4001 = vadd.f32 %v3826, %v4000
    %4002 = vmatmul.bf16.gmra.mxu0 %v3790
    %v4003 = vpop.f32.mrf.mxu0
    %v4004 = vadd.f32 %v3826, %v4003
    %v4005 = vpop.f32.mrf.mxu0
    %v4006 = vadd.f32 %v3826, %v4005
    %4007 = vdwg.mxu0
    %4008 = vmatpush.bf16.msra.mxu0 %v3907
    %4009 = vmatpush.bf16.msra.mxu0 %v3906
    %4010 = vmatpush.bf16.msra.mxu0 %v3905
    %4011 = vmatpush.bf16.msra.mxu0 %v3904
    %4012 = vmatpush.bf16.msra.mxu0 %v3903
    %4013 = vmatpush.bf16.msra.mxu0 %v3902
    %4014 = vmatpush.bf16.msra.mxu0 %v3901
    %4015 = vmatpush.bf16.msra.mxu0 %v3900
    %4016 = vmatmul.bf16.gmra.mxu0 %v3763
    %v4017 = vpop.f32.mrf.mxu0
    %v4018 = vadd.f32 %v3934, %v4017
    %v4019 = vpop.f32.mrf.mxu0
    %v4020 = vadd.f32 %v3936, %v4019
    %4021 = vmatmul.bf16.gmra.mxu0 %v3765
    %v4022 = vpop.f32.mrf.mxu0
    %v4023 = vadd.f32 %v3939, %v4022
    %v4024 = vpop.f32.mrf.mxu0
    %v4025 = vadd.f32 %v3941, %v4024
    %4026 = vmatmul.bf16.gmra.mxu0 %v3767
    %v4027 = vpop.f32.mrf.mxu0
    %v4028 = vadd.f32 %v3944, %v4027
    %v4029 = vpop.f32.mrf.mxu0
    %v4030 = vadd.f32 %v3946, %v4029
    %4031 = vmatmul.bf16.gmra.mxu0 %v3769
    %v4032 = vpop.f32.mrf.mxu0
    %v4033 = vadd.f32 %v3949, %v4032
    %v4034 = vpop.f32.mrf.mxu0
    %v4035 = vadd.f32 %v3951, %v4034
    %4036 = vmatmul.bf16.gmra.mxu0 %v3771
    %v4037 = vpop.f32.mrf.mxu0
    %v4038 = vadd.f32 %v3954, %v4037
    %v4039 = vpop.f32.mrf.mxu0
    %v4040 = vadd.f32 %v3956, %v4039
    %4041 = vmatmul.bf16.gmra.mxu0 %v3773
    %v4042 = vpop.f32.mrf.mxu0
    %v4043 = vadd.f32 %v3959, %v4042
    %v4044 = vpop.f32.mrf.mxu0
    %v4045 = vadd.f32 %v3961, %v4044
    %4046 = vmatmul.bf16.gmra.mxu0 %v3775
    %v4047 = vpop.f32.mrf.mxu0
    %v4048 = vadd.f32 %v3964, %v4047
    %v4049 = vpop.f32.mrf.mxu0
    %v4050 = vadd.f32 %v3966, %v4049
    %4051 = vmatmul.bf16.gmra.mxu0 %v3777
    %v4052 = vpop.f32.mrf.mxu0
    %v4053 = vadd.f32 %v3969, %v4052
    %v4054 = vpop.f32.mrf.mxu0
    %v4055 = vadd.f32 %v3971, %v4054
    %4056 = vmatmul.bf16.gmra.mxu0 %v3779
    %v4057 = vpop.f32.mrf.mxu0
    %v4058 = vadd.f32 %v3974, %v4057
    %v4059 = vpop.f32.mrf.mxu0
    %v4060 = vadd.f32 %v3976, %v4059
    %4061 = vmatmul.bf16.gmra.mxu0 %v3781
    %v4062 = vpop.f32.mrf.mxu0
    %v4063 = vadd.f32 %v3979, %v4062
    %v4064 = vpop.f32.mrf.mxu0
    %v4065 = vadd.f32 %v3981, %v4064
    %4066 = vmatmul.bf16.gmra.mxu0 %v3783
    %v4067 = vpop.f32.mrf.mxu0
    %v4068 = vadd.f32 %v3984, %v4067
    %v4069 = vpop.f32.mrf.mxu0
    %v4070 = vadd.f32 %v3986, %v4069
    %4071 = vmatmul.bf16.gmra.mxu0 %v3785
    %v4072 = vpop.f32.mrf.mxu0
    %v4073 = vadd.f32 %v3989, %v4072
    %v4074 = vpop.f32.mrf.mxu0
    %v4075 = vadd.f32 %v3991, %v4074
    %4076 = vmatmul.bf16.gmra.mxu0 %v3787
    %v4077 = vpop.f32.mrf.mxu0
    %v4078 = vadd.f32 %v3994, %v4077
    %v4079 = vpop.f32.mrf.mxu0
    %v4080 = vadd.f32 %v3996, %v4079
    %4081 = vmatmul.bf16.gmra.mxu0 %v3789
    %v4082 = vpop.f32.mrf.mxu0
    %v4083 = vadd.f32 %v3999, %v4082
    %v4084 = vpop.f32.mrf.mxu0
    %v4085 = vadd.f32 %v4001, %v4084
    %4086 = vmatmul.bf16.gmra.mxu0 %v3791
    %v4087 = vpop.f32.mrf.mxu0
    %v4088 = vadd.f32 %v4004, %v4087
    %v4089 = vpop.f32.mrf.mxu0
    %v4090 = vadd.f32 %v4006, %v4089
    %4091 = vdwg.mxu0
    %vm4092 = vcmask 261120
    %4093 = vst.msk [vmem:[%s7] sm:$0xff] %vm4092, %v4018
    %4094 = vst.msk [vmem:[%s7 + $0x8] sm:$0xff] %vm4092, %v4020
    %4095 = vst.msk [vmem:[%s7 + $0x10] sm:$0xff] %vm4092, %v4023
    %4096 = vst.msk [vmem:[%s7 + $0x18] sm:$0xff] %vm4092, %v4025
    %4097 = vst.msk [vmem:[%s7 + $0x20] sm:$0xff] %vm4092, %v4028
    %4098 = vst.msk [vmem:[%s7 + $0x28] sm:$0xff] %vm4092, %v4030
    %4099 = vst.msk [vmem:[%s7 + $0x30] sm:$0xff] %vm4092, %v4033
    %4100 = vst.msk [vmem:[%s7 + $0x38] sm:$0xff] %vm4092, %v4035
    %4101 = vst.msk [vmem:[%s7 + $0x40] sm:$0xff] %vm4092, %v4038
    %4102 = vst.msk [vmem:[%s7 + $0x48] sm:$0xff] %vm4092, %v4040
    %4103 = vst.msk [vmem:[%s7 + $0x50] sm:$0xff] %vm4092, %v4043
    %4104 = vst.msk [vmem:[%s7 + $0x58] sm:$0xff] %vm4092, %v4045
    %4105 = vst.msk [vmem:[%s7 + $0x60] sm:$0xff] %vm4092, %v4048
    %4106 = vst.msk [vmem:[%s7 + $0x68] sm:$0xff] %vm4092, %v4050
    %4107 = vst.msk [vmem:[%s7 + $0x70] sm:$0xff] %vm4092, %v4053
    %4108 = vst.msk [vmem:[%s7 + $0x78] sm:$0xff] %vm4092, %v4055
    %4109 = vst.msk [vmem:[%s7 + $0x80] sm:$0xff] %vm4092, %v4058
    %4110 = vst.msk [vmem:[%s7 + $0x88] sm:$0xff] %vm4092, %v4060
    %4111 = vst.msk [vmem:[%s7 + $0x90] sm:$0xff] %vm4092, %v4063
    %4112 = vst.msk [vmem:[%s7 + $0x98] sm:$0xff] %vm4092, %v4065
    %4113 = vst.msk [vmem:[%s7 + $0xa0] sm:$0xff] %vm4092, %v4068
    %4114 = vst.msk [vmem:[%s7 + $0xa8] sm:$0xff] %vm4092, %v4070
    %4115 = vst.msk [vmem:[%s7 + $0xb0] sm:$0xff] %vm4092, %v4073
    %4116 = vst.msk [vmem:[%s7 + $0xb8] sm:$0xff] %vm4092, %v4075
    %4117 = vst.msk [vmem:[%s7 + $0xc0] sm:$0xff] %vm4092, %v4078
    %4118 = vst.msk [vmem:[%s7 + $0xc8] sm:$0xff] %vm4092, %v4080
    %4119 = vst.msk [vmem:[%s7 + $0xd0] sm:$0xff] %vm4092, %v4083
    %4120 = vst.msk [vmem:[%s7 + $0xd8] sm:$0xff] %vm4092, %v4085
    %4121 = vst.msk [vmem:[%s7 + $0xe0] sm:$0xff] %vm4092, %v4088
    %4122 = vst.msk [vmem:[%s7 + $0xe8] sm:$0xff] %vm4092, %v4090
    // Predicated region
    $region34: #{tpu_custom_call.1} parent=1 // pred_check
      _
    $region35: #{tpu_custom_call.1} parent=1 // pred_check_branch
      %4124 = sbr.rel (0) target = $region37
    $region36: #{tpu_custom_call.1} parent=1 // pred_region
      _
    $region37: #{tpu_custom_call.1} parent=1 // pred_fallthru
      _
    // Predicated region
    $region38: #{tpu_custom_call.1} parent=1 // pred_check
      _
    $region39: #{tpu_custom_call.1} parent=1 // pred_check_branch
      %4126 = sbr.rel (0) target = $region41
    $region40: #{tpu_custom_call.1} parent=1 // pred_region
      _
    $region41: #{tpu_custom_call.1} parent=1 // pred_fallthru
      _
    %4127 = vsyncpa [#allocation3], 1

</llo_original>
